<compile_context>
chip_gen: v7x
topology: tpu7x:2x2x1
jax: 0.10.0
libtpu: 0.0.40
codegen_flags: <defaults>
</compile_context>

<pallas_src>
import functools

import numpy as np

import jax
import jax.numpy as jnp
from jax.experimental import pallas as pl
from jax.experimental.pallas import tpu as pltpu


def _gelu(v):
    # tanh-form GELU (PyTorch nn.GELU(approximate='tanh')); ~1e-3 max abs
    # deviation from exact erf GELU, but runs on the EUP.
    c = 0.7978845608028654  # sqrt(2/pi)
    return 0.5 * v * (1.0 + jnp.tanh(c * (v + 0.044715 * v * v * v)))


def _structural_constants(h, w, nb, cout, gn_groups):
    """Shape-only constants (numpy -> baked into the executable, shipped once)."""
    hw = h * w
    L = nb * hw
    hpw = h + w
    nstat = max(nb, 8)                      # pad stat width to >=8 lanes (MXU-friendly)

    j = np.arange(L)
    s = j // hw                             # sample index of lane j
    p = j % hw
    r = p // w                              # spatial row of lane j
    c = p % w                               # spatial col of lane j

    # zero-padding boundary masks for the 9 conv taps (dy-major, dx-minor).
    masks = np.zeros((9, L), np.float32)
    k = 0
    for dy in (-1, 0, 1):
        for dx in (-1, 0, 1):
            ok = (r + dy >= 0) & (r + dy < h) & (c + dx >= 0) & (c + dx < w)
            masks[k] = ok.astype(np.float32)
            k += 1

    # per-sample mean over the HW lanes (GroupNorm stats) and its broadcast-back.
    pooln = np.zeros((L, nstat), np.float32)
    pooln[j, s] = 1.0 / hw
    expn = np.zeros((nstat, L), np.float32)
    expn[s, j] = 1.0

    # CoordAtt per-sample pooling: columns [0,h) = mean over W per row,
    # columns [h,h+w) = mean over H per col; plus the matching expansions.
    # TODO(synk): these matrices scale as Nb^2*HW*(H+W); cap Nb per step for
    # very large spatial sizes.
    poolca = np.zeros((L, nb * hpw), np.float32)
    poolca[j, s * hpw + r] = 1.0 / w
    poolca[j, s * hpw + h + c] = 1.0 / h
    exph = np.zeros((nb * hpw, L), np.float32)
    exph[s * hpw + r, j] = 1.0
    expw = np.zeros((nb * hpw, L), np.float32)
    expw[s * hpw + h + c, j] = 1.0

    # GroupNorm group-averaging matrix: gg[i, j] = 1/group_size iff same group.
    gsz = cout // gn_groups
    gidx = np.arange(cout) // gsz
    gg = (gidx[:, None] == gidx[None, :]).astype(np.float32) / gsz
    return masks, pooln, expn, poolca, exph, expw, gg


def _make_decoder_kernel(*, nb, h, w, cin, cout, has_res_conv, conv_dtype):
    """Kernel for an (nb, cin, h*w) input block -> (nb, cout, h*w) output block."""
    hw = h * w
    L = nb * hw
    f32 = jnp.float32
    dot = functools.partial(jnp.dot, preferred_element_type=f32)
    eps = 1e-5

    def kernel(x_ref, w3s_ref, cvec_ref, caw1_ref, cab1_ref, caw23_ref,
               w1x1_ref, gg_ref, masks_ref, pooln_ref, expn_ref,
               poolca_ref, exph_ref, expw_ref, *rest):
        if has_res_conv:
            wres_ref, o_ref, xpk_ref, stk_ref = rest
        else:
            o_ref, xpk_ref, stk_ref = rest

        # ---- tiny resident params (constant index_map => DMA'd once, no per-step cost) ----
        cvec = cvec_ref[...]                              # (cout, 9) packed per-channel vectors
        b3, gn1_g, gn1_b = cvec[:, 0:1], cvec[:, 1:2], cvec[:, 2:3]
        gn2_g, gn2_b = cvec[:, 3:4], cvec[:, 4:5]
        cab2, cab3, b1x1 = cvec[:, 5:6], cvec[:, 6:7], cvec[:, 7:8]
        gg = gg_ref[...]
        pooln, expn = pooln_ref[...], expn_ref[...]
        masks = masks_ref[...]                            # (9, L) f32 0/1 tap masks

        # ---- pack the nb samples along the lane axis: (nb, cin, hw) -> (cin, nb*hw) ----
        # (small VMEM copies; nb is small per step — switch to lax.fori_loop if nb grows)
        for s in range(nb):
            xpk_ref[:, s * hw:(s + 1) * hw] = x_ref[s]
        xpk = xpk_ref[...]                                # (cin, L) f32

        # ---- Conv2d(cin, cout, 3, pad=1): stack 9 rolled+masked taps, ONE matmul ----
        k = 0
        for dy in (-1, 0, 1):
            for dx in (-1, 0, 1):
                off = dy * w + dx
                if off == 0:
                    tap = xpk                              # unmasked centre tap
                else:
                    # tap[:, j] == xpk[:, j + off]; masks zero the padded border
                    # (and any roll wrap across sample boundaries).
                    tap = pltpu.roll(xpk, shift=(-off) % L, axis=1)
                    tap = tap * masks[k:k + 1]             # mask in f32, then downcast
                stk_ref[k * cin:(k + 1) * cin, :] = tap.astype(conv_dtype)
                k += 1
        # bf16 x bf16 (native MXU) with f32 accumulation only.
        v = dot(w3s_ref[...], stk_ref[...]) + b3           # (cout, L)

        def group_norm(v, gamma, beta):
            # per-sample, per-group stats (biased var) via small matmuls.
            m = dot(v, pooln)                              # (cout, nstat) per-channel mean
            m2 = dot(v * v, pooln)                         # (cout, nstat) mean of squares
            gm = dot(gg, m)                                # (cout, nstat) group mean
            var = dot(gg, m2) - gm * gm
            scale = gamma * jax.lax.rsqrt(var + eps)       # gamma folded into the scale
            offset = beta - gm * scale
            return v * dot(scale, expn) + dot(offset, expn)

        # ---- GroupNorm(4, cout) + GELU ----
        t = _gelu(group_norm(v, gn1_g, gn1_b))

        # ---- CoordAtt (h & w branches share one pooled pass; BN folded into conv1) ----
        pooled = dot(t, poolca_ref[...])                   # (cout, nb*(h+w))
        y = dot(caw1_ref[...], pooled) + cab1_ref[...]     # conv1 (+ folded BatchNorm)
        y = y * jnp.clip(y + 3.0, 0.0, 6.0) * (1.0 / 6.0)  # h_swish
        a = dot(caw23_ref[...], y)                         # conv2 & conv3 in one matmul
        a_h = jax.nn.sigmoid(a[:cout] + cab2)              # only the h-columns are read back
        a_w = jax.nn.sigmoid(a[cout:] + cab3)              # only the w-columns are read back
        att = dot(a_h, exph_ref[...]) * dot(a_w, expw_ref[...])   # (cout, L)
        t = t * att

        # ---- Conv2d(cout, cout, 1) + GroupNorm(4, cout) ----
        t = dot(w1x1_ref[...], t) + b1x1
        t = group_norm(t, gn2_g, gn2_b)

        # ---- residual add + GELU, per-sample lane-dense stores (HW >= 128 lanes) ----
        if has_res_conv:
            # residual 1x1 conv reuses the unmasked centre tap of the stacked buffer.
            res = dot(wres_ref[...], stk_ref[4 * cin:5 * cin, :]) + cvec[:, 8:9]
            out = _gelu(t + res)
            for s in range(nb):
                o_ref[s] = out[:, s * hw:(s + 1) * hw].astype(o_ref.dtype)
        else:
            for s in range(nb):                            # identity residual: exact f32 x
                o_ref[s] = _gelu(t[:, s * hw:(s + 1) * hw] + x_ref[s]).astype(o_ref.dtype)

    return kernel


def _default_samples_per_step(n):
    # v7x has 2 TensorCores per chip -> keep 2 grid steps so both get work;
    # single-TC v5e/v6e -> one big step (no per-step overhead, biggest DMAs).
    try:
        kind = jax.devices()[0].device_kind.lower()
    except Exception:
        kind = ""
    if "v7" in kind and n >= 2 and n % 2 == 0:
        return n // 2
    return n


def decoder_block(x_nchw, params, *, samples_per_step=None,
                  conv_dtype=jnp.bfloat16, gn_groups=4):
    """DeCoderBlock forward.  x_nchw: (N, Cin, H, W) f32; params in PyTorch layout."""
    N, Cin, H, W = x_nchw.shape
    HW = H * W
    Cout = params["w3"].shape[0]
    assert Cout % gn_groups == 0, "GroupNorm(4, C) requires C divisible by 4"

    Nb = samples_per_step if samples_per_step is not None else _default_samples_per_step(N)
    assert N % Nb == 0, "samples_per_step must divide the batch"
    L = Nb * HW

    f32 = jnp.float32
    colj = lambda v: jnp.asarray(v, f32).reshape(-1)

    # ---- parameter prep (tiny, traced once per call) ----
    # 3x3 conv weight (Cout, Cin, 3, 3) -> (Cout, 9*Cin) tap-major columns.
    w3s = jnp.transpose(jnp.asarray(params["w3"], f32),
                        (0, 2, 3, 1)).reshape(Cout, 9 * Cin).astype(conv_dtype)

    # CoordAtt conv1 with inference-mode BatchNorm2d folded in.
    # TODO(synk): training-mode BatchNorm (batch statistics) is not supported.
    mip = params["caw1"].shape[0]
    caw1 = jnp.asarray(params["caw1"], f32).reshape(mip, Cout)
    bn_scale = colj(params["bn_g"]) * jax.lax.rsqrt(colj(params["bn_v"]) + 1e-5)
    caw1f = caw1 * bn_scale[:, None]
    cab1f = (bn_scale * (colj(params["cab1"]) - colj(params["bn_m"]))
             + colj(params["bn_b"])).reshape(mip, 1)
    caw23 = jnp.concatenate([jnp.asarray(params["caw2"], f32).reshape(Cout, mip),
                             jnp.asarray(params["caw3"], f32).reshape(Cout, mip)], axis=0)
    w1x1 = jnp.asarray(params["w1x1"], f32).reshape(Cout, Cout)

    has_res_conv = "wres" in params
    if not has_res_conv:
        assert Cin == Cout, "identity residual requires in_channels == out_channels"
    bres = colj(params["bres"]) if has_res_conv else jnp.zeros((Cout,), f32)

    # Pack all (Cout,)-sized per-channel vectors into ONE (Cout, 9) array.
    cvec = jnp.stack([colj(params["b3"]),
                      colj(params["gn1_g"]), colj(params["gn1_b"]),
                      colj(params["gn2_g"]), colj(params["gn2_b"]),
                      colj(params["cab2"]), colj(params["cab3"]),
                      colj(params["b1x1"]), bres], axis=1)

    masks, pooln, expn, poolca, exph, expw, gg = _structural_constants(
        H, W, Nb, Cout, gn_groups)

    # x shipped once as f32 (metadata-only reshape, no wrapper-side convert pass);
    # the bf16 downcast for the MXU happens in-kernel.
    x = x_nchw.reshape(N, Cin, HW)

    args = [x, w3s, cvec, caw1f, cab1f, caw23, w1x1,
            jnp.asarray(gg), jnp.asarray(masks), jnp.asarray(pooln), jnp.asarray(expn),
            jnp.asarray(poolca), jnp.asarray(exph), jnp.asarray(expw)]
    if has_res_conv:
        args.append(jnp.asarray(params["wres"], f32).reshape(Cout, Cin).astype(conv_dtype))

    def full_spec(a):
        nd = a.ndim
        return pl.BlockSpec(a.shape, lambda b, nd=nd: (0,) * nd)   # resident constant

    in_specs = [pl.BlockSpec((Nb, Cin, HW), lambda b: (b, 0, 0))]
    in_specs += [full_spec(a) for a in args[1:]]

    kernel = _make_decoder_kernel(nb=Nb, h=H, w=W, cin=Cin, cout=Cout,
                                  has_res_conv=has_res_conv, conv_dtype=conv_dtype)

    # Output kept f32 to match the PyTorch module; switch out_shape dtype to
    # bf16 if the downstream consumer tolerates it (halves the writeback DMA).
    out_flat = pl.pallas_call(
        kernel,
        out_shape=jax.ShapeDtypeStruct((N, Cout, HW), jnp.float32),
        grid_spec=pltpu.PrefetchScalarGridSpec(
            num_scalar_prefetch=0,
            grid=(N // Nb,),
            in_specs=in_specs,
            out_specs=pl.BlockSpec((Nb, Cout, HW), lambda b: (b, 0, 0)),
            scratch_shapes=[pltpu.VMEM((Cin, L), f32),            # lane-packed x (f32)
                            pltpu.VMEM((9 * Cin, L), conv_dtype)],  # stacked 9-tap buffer
        ),
        compiler_params=pltpu.CompilerParams(
            dimension_semantics=("parallel",),
        ),
    )(*args)

    return out_flat.reshape(N, Cout, H, W)


def init_params(key, cin, cout, *, ca_groups=32):
    """Deterministic synthetic parameters in PyTorch shapes."""
    mip = max(8, cout // ca_groups)              # CoordAtt mid channels
    keys = jax.random.split(key, 18)
    r = lambda k, shape, s=0.1: s * jax.random.normal(k, shape, jnp.float32)
    p = {
        "w3": r(keys[0], (cout, cin, 3, 3)),     # decoder Conv2d(cin, cout, 3, pad=1)
        "b3": r(keys[1], (cout,)),
        "gn1_g": 1.0 + r(keys[2], (cout,)),      # GroupNorm(4, cout)
        "gn1_b": r(keys[3], (cout,)),
        "caw1": r(keys[4], (mip, cout, 1, 1)),   # CoordAtt conv1 (1x1)
        "cab1": r(keys[5], (mip,)),
        "bn_g": 1.0 + r(keys[6], (mip,)),        # CoordAtt BatchNorm2d (inference stats)
        "bn_b": r(keys[7], (mip,)),
        "bn_m": jnp.zeros((mip,), jnp.float32),
        "bn_v": jnp.ones((mip,), jnp.float32),
        "caw2": r(keys[8], (cout, mip, 1, 1)),   # CoordAtt conv2 (1x1)
        "cab2": r(keys[9], (cout,)),
        "caw3": r(keys[10], (cout, mip, 1, 1)),  # CoordAtt conv3 (1x1)
        "cab3": r(keys[11], (cout,)),
        "w1x1": r(keys[12], (cout, cout, 1, 1)), # decoder Conv2d(cout, cout, 1)
        "b1x1": r(keys[13], (cout,)),
        "gn2_g": 1.0 + r(keys[14], (cout,)),     # GroupNorm(4, cout)
        "gn2_b": r(keys[15], (cout,)),
    }
    if cin != cout:
        p["wres"] = r(keys[16], (cout, cin, 1, 1))   # residual Conv2d(cin, cout, 1)
        p["bres"] = r(keys[17], (cout,))
    # else: residual is nn.Identity -> no params (kernel skips the matmul)
    return p


if __name__ == "__main__":
    key = jax.random.PRNGKey(0)
    kx, kp = jax.random.split(key)

    N, Cin, H, W = 2, 16, 16, 16     # NCHW, in_channels=16
    Cout = 8                         # out_channels=8 (GroupNorm(4) -> group size 2)

    x = jax.random.normal(kx, (N, Cin, H, W), jnp.float32)
    params = init_params(kp, Cin, Cout)

    out = jax.jit(decoder_block)(x, params)
    jax.block_until_ready(out)
    assert out.shape == (N, Cout, H, W) and out.dtype == jnp.float32
    assert bool(jnp.all(jnp.isfinite(out)))
    print("KERNEL_OK")
</pallas_src>

<mosaic_0001>
module attributes {stable_mosaic.version = 11 : i64} {
  func.func @kernel(%arg0: i32, %arg1: memref<2x16x256xf32, #tpu.memory_space<vmem>>, %arg2: memref<8x144xbf16, #tpu.memory_space<vmem>>, %arg3: memref<8x9xf32, #tpu.memory_space<vmem>>, %arg4: memref<8x8xf32, #tpu.memory_space<vmem>>, %arg5: memref<8x1xf32, #tpu.memory_space<vmem>>, %arg6: memref<16x8xf32, #tpu.memory_space<vmem>>, %arg7: memref<8x8xf32, #tpu.memory_space<vmem>>, %arg8: memref<8x8xf32, #tpu.memory_space<vmem>>, %arg9: memref<9x512xf32, #tpu.memory_space<vmem>>, %arg10: memref<512x8xf32, #tpu.memory_space<vmem>>, %arg11: memref<8x512xf32, #tpu.memory_space<vmem>>, %arg12: memref<512x64xf32, #tpu.memory_space<vmem>>, %arg13: memref<64x512xf32, #tpu.memory_space<vmem>>, %arg14: memref<64x512xf32, #tpu.memory_space<vmem>>, %arg15: memref<8x16xbf16, #tpu.memory_space<vmem>>, %arg16: memref<2x8x256xf32, #tpu.memory_space<vmem>>, %arg17: memref<16x512xf32, #tpu.memory_space<vmem>>, %arg18: memref<144x512xbf16, #tpu.memory_space<vmem>>) attributes {dimension_semantics = [#tpu.dimension_semantics<parallel>], iteration_bounds = array<i64: 1>, scalar_prefetch = 0 : i64, scratch_operands = 2 : i64, tpu.core_type = #tpu.core_type<tc>, window_params = [{transform_indices = @transform_0, window_bounds = array<i64: 2, 16, 256>}, {pipeline_mode = #tpu.pipeline_mode<synchronous>, transform_indices = @transform_1, window_bounds = array<i64: 8, 144>}, {pipeline_mode = #tpu.pipeline_mode<synchronous>, transform_indices = @transform_2, window_bounds = array<i64: 8, 9>}, {pipeline_mode = #tpu.pipeline_mode<synchronous>, transform_indices = @transform_3, window_bounds = array<i64: 8, 8>}, {pipeline_mode = #tpu.pipeline_mode<synchronous>, transform_indices = @transform_4, window_bounds = array<i64: 8, 1>}, {pipeline_mode = #tpu.pipeline_mode<synchronous>, transform_indices = @transform_5, window_bounds = array<i64: 16, 8>}, {pipeline_mode = #tpu.pipeline_mode<synchronous>, transform_indices = @transform_6, window_bounds = array<i64: 8, 8>}, {pipeline_mode = #tpu.pipeline_mode<synchronous>, transform_indices = @transform_7, window_bounds = array<i64: 8, 8>}, {pipeline_mode = #tpu.pipeline_mode<synchronous>, transform_indices = @transform_8, window_bounds = array<i64: 9, 512>}, {pipeline_mode = #tpu.pipeline_mode<synchronous>, transform_indices = @transform_9, window_bounds = array<i64: 512, 8>}, {pipeline_mode = #tpu.pipeline_mode<synchronous>, transform_indices = @transform_10, window_bounds = array<i64: 8, 512>}, {pipeline_mode = #tpu.pipeline_mode<synchronous>, transform_indices = @transform_11, window_bounds = array<i64: 512, 64>}, {pipeline_mode = #tpu.pipeline_mode<synchronous>, transform_indices = @transform_12, window_bounds = array<i64: 64, 512>}, {pipeline_mode = #tpu.pipeline_mode<synchronous>, transform_indices = @transform_13, window_bounds = array<i64: 64, 512>}, {pipeline_mode = #tpu.pipeline_mode<synchronous>, transform_indices = @transform_14, window_bounds = array<i64: 8, 16>}, {transform_indices = @transform_15, window_bounds = array<i64: 2, 8, 256>}]} {
    %c0 = arith.constant 0 : index
    %c0_0 = arith.constant 0 : index
    %0 = vector.load %arg3[%c0, %c0_0] : memref<8x9xf32, #tpu.memory_space<vmem>>, vector<8x9xf32>
    %1 = vector.extract_strided_slice %0 {offsets = [0, 0], sizes = [8, 1], strides = [1, 1]} : vector<8x9xf32> to vector<8x1xf32>
    %2 = vector.extract_strided_slice %0 {offsets = [0, 1], sizes = [8, 1], strides = [1, 1]} : vector<8x9xf32> to vector<8x1xf32>
    %3 = vector.extract_strided_slice %0 {offsets = [0, 2], sizes = [8, 1], strides = [1, 1]} : vector<8x9xf32> to vector<8x1xf32>
    %4 = vector.extract_strided_slice %0 {offsets = [0, 3], sizes = [8, 1], strides = [1, 1]} : vector<8x9xf32> to vector<8x1xf32>
    %5 = vector.extract_strided_slice %0 {offsets = [0, 4], sizes = [8, 1], strides = [1, 1]} : vector<8x9xf32> to vector<8x1xf32>
    %6 = vector.extract_strided_slice %0 {offsets = [0, 5], sizes = [8, 1], strides = [1, 1]} : vector<8x9xf32> to vector<8x1xf32>
    %7 = vector.extract_strided_slice %0 {offsets = [0, 6], sizes = [8, 1], strides = [1, 1]} : vector<8x9xf32> to vector<8x1xf32>
    %8 = vector.extract_strided_slice %0 {offsets = [0, 7], sizes = [8, 1], strides = [1, 1]} : vector<8x9xf32> to vector<8x1xf32>
    %c0_1 = arith.constant 0 : index
    %c0_2 = arith.constant 0 : index
    %9 = vector.load %arg8[%c0_1, %c0_2] : memref<8x8xf32, #tpu.memory_space<vmem>>, vector<8x8xf32>
    %c0_3 = arith.constant 0 : index
    %c0_4 = arith.constant 0 : index
    %10 = vector.load %arg10[%c0_3, %c0_4] : memref<512x8xf32, #tpu.memory_space<vmem>>, vector<512x8xf32>
    %c0_5 = arith.constant 0 : index
    %c0_6 = arith.constant 0 : index
    %11 = vector.load %arg11[%c0_5, %c0_6] : memref<8x512xf32, #tpu.memory_space<vmem>>, vector<8x512xf32>
    %c0_7 = arith.constant 0 : index
    %c0_8 = arith.constant 0 : index
    %12 = vector.load %arg9[%c0_7, %c0_8] : memref<9x512xf32, #tpu.memory_space<vmem>>, vector<9x512xf32>
    %c0_9 = arith.constant 0 : index
    %c0_10 = arith.constant 0 : index
    %c0_11 = arith.constant 0 : index
    %13 = vector.load %arg1[%c0_9, %c0_10, %c0_11] : memref<2x16x256xf32, #tpu.memory_space<vmem>>, vector<1x16x256xf32>
    %14 = vector.shape_cast %13 : vector<1x16x256xf32> to vector<16x256xf32>
    %c0_12 = arith.constant 0 : index
    %c0_13 = arith.constant 0 : index
    %15 = vector.load %arg17[%c0_12, %c0_13] : memref<16x512xf32, #tpu.memory_space<vmem>>, vector<16x256xf32>
    tpu.vector_store %arg17[%c0_12, %c0_13], %14 {strides = array<i32>} : memref<16x512xf32, #tpu.memory_space<vmem>>, vector<16x256xf32>,
    %c1 = arith.constant 1 : index
    %c0_14 = arith.constant 0 : index
    %c0_15 = arith.constant 0 : index
    %16 = vector.load %arg1[%c1, %c0_14, %c0_15] : memref<2x16x256xf32, #tpu.memory_space<vmem>>, vector<1x16x256xf32>
    %17 = vector.shape_cast %16 : vector<1x16x256xf32> to vector<16x256xf32>
    %c0_16 = arith.constant 0 : index
    %c256 = arith.constant 256 : index
    %18 = vector.load %arg17[%c0_16, %c256] : memref<16x512xf32, #tpu.memory_space<vmem>>, vector<16x256xf32>
    tpu.vector_store %arg17[%c0_16, %c256], %17 {strides = array<i32>} : memref<16x512xf32, #tpu.memory_space<vmem>>, vector<16x256xf32>,
    %c0_17 = arith.constant 0 : index
    %c0_18 = arith.constant 0 : index
    %19 = vector.load %arg17[%c0_17, %c0_18] : memref<16x512xf32, #tpu.memory_space<vmem>>, vector<16x512xf32>
    %c17_i32 = arith.constant 17 : i32
    %20 = tpu.dynamic_rotate %19 by %c17_i32 dim 1 : vector<16x512xf32>, i32 -> vector<16x512xf32>
    %21 = vector.extract_strided_slice %12 {offsets = [0, 0], sizes = [1, 512], strides = [1, 1]} : vector<9x512xf32> to vector<1x512xf32>
    %22 = vector.broadcast %21 : vector<1x512xf32> to vector<16x512xf32>
    %23 = arith.mulf %20, %22 : vector<16x512xf32>
    %24 = arith.truncf %23 : vector<16x512xf32> to vector<16x512xbf16>
    %c0_19 = arith.constant 0 : index
    %c0_20 = arith.constant 0 : index
    %25 = vector.load %arg18[%c0_19, %c0_20] : memref<144x512xbf16, #tpu.memory_space<vmem>>, vector<16x512xbf16>
    tpu.vector_store %arg18[%c0_19, %c0_20], %24 {strides = array<i32>} : memref<144x512xbf16, #tpu.memory_space<vmem>>, vector<16x512xbf16>,
    %c16_i32 = arith.constant 16 : i32
    %26 = tpu.dynamic_rotate %19 by %c16_i32 dim 1 : vector<16x512xf32>, i32 -> vector<16x512xf32>
    %27 = vector.extract_strided_slice %12 {offsets = [1, 0], sizes = [1, 512], strides = [1, 1]} : vector<9x512xf32> to vector<1x512xf32>
    %28 = vector.broadcast %27 : vector<1x512xf32> to vector<16x512xf32>
    %29 = arith.mulf %26, %28 : vector<16x512xf32>
    %30 = arith.truncf %29 : vector<16x512xf32> to vector<16x512xbf16>
    %c16 = arith.constant 16 : index
    %c0_21 = arith.constant 0 : index
    %31 = vector.load %arg18[%c16, %c0_21] : memref<144x512xbf16, #tpu.memory_space<vmem>>, vector<16x512xbf16>
    tpu.vector_store %arg18[%c16, %c0_21], %30 {strides = array<i32>} : memref<144x512xbf16, #tpu.memory_space<vmem>>, vector<16x512xbf16>,
    %c15_i32 = arith.constant 15 : i32
    %32 = tpu.dynamic_rotate %19 by %c15_i32 dim 1 : vector<16x512xf32>, i32 -> vector<16x512xf32>
    %33 = vector.extract_strided_slice %12 {offsets = [2, 0], sizes = [1, 512], strides = [1, 1]} : vector<9x512xf32> to vector<1x512xf32>
    %34 = vector.broadcast %33 : vector<1x512xf32> to vector<16x512xf32>
    %35 = arith.mulf %32, %34 : vector<16x512xf32>
    %36 = arith.truncf %35 : vector<16x512xf32> to vector<16x512xbf16>
    %c32 = arith.constant 32 : index
    %c0_22 = arith.constant 0 : index
    %37 = vector.load %arg18[%c32, %c0_22] : memref<144x512xbf16, #tpu.memory_space<vmem>>, vector<16x512xbf16>
    tpu.vector_store %arg18[%c32, %c0_22], %36 {strides = array<i32>} : memref<144x512xbf16, #tpu.memory_space<vmem>>, vector<16x512xbf16>,
    %c1_i32 = arith.constant 1 : i32
    %38 = tpu.dynamic_rotate %19 by %c1_i32 dim 1 : vector<16x512xf32>, i32 -> vector<16x512xf32>
    %39 = vector.extract_strided_slice %12 {offsets = [3, 0], sizes = [1, 512], strides = [1, 1]} : vector<9x512xf32> to vector<1x512xf32>
    %40 = vector.broadcast %39 : vector<1x512xf32> to vector<16x512xf32>
    %41 = arith.mulf %38, %40 : vector<16x512xf32>
    %42 = arith.truncf %41 : vector<16x512xf32> to vector<16x512xbf16>
    %c48 = arith.constant 48 : index
    %c0_23 = arith.constant 0 : index
    %43 = vector.load %arg18[%c48, %c0_23] : memref<144x512xbf16, #tpu.memory_space<vmem>>, vector<16x512xbf16>
    tpu.vector_store %arg18[%c48, %c0_23], %42 {strides = array<i32>} : memref<144x512xbf16, #tpu.memory_space<vmem>>, vector<16x512xbf16>,
    %44 = arith.truncf %19 : vector<16x512xf32> to vector<16x512xbf16>
    %c64 = arith.constant 64 : index
    %c0_24 = arith.constant 0 : index
    %45 = vector.load %arg18[%c64, %c0_24] : memref<144x512xbf16, #tpu.memory_space<vmem>>, vector<16x512xbf16>
    tpu.vector_store %arg18[%c64, %c0_24], %44 {strides = array<i32>} : memref<144x512xbf16, #tpu.memory_space<vmem>>, vector<16x512xbf16>,
    %c511_i32 = arith.constant 511 : i32
    %46 = tpu.dynamic_rotate %19 by %c511_i32 dim 1 : vector<16x512xf32>, i32 -> vector<16x512xf32>
    %47 = vector.extract_strided_slice %12 {offsets = [5, 0], sizes = [1, 512], strides = [1, 1]} : vector<9x512xf32> to vector<1x512xf32>
    %48 = vector.broadcast %47 : vector<1x512xf32> to vector<16x512xf32>
    %49 = arith.mulf %46, %48 : vector<16x512xf32>
    %50 = arith.truncf %49 : vector<16x512xf32> to vector<16x512xbf16>
    %c80 = arith.constant 80 : index
    %c0_25 = arith.constant 0 : index
    %51 = vector.load %arg18[%c80, %c0_25] : memref<144x512xbf16, #tpu.memory_space<vmem>>, vector<16x512xbf16>
    tpu.vector_store %arg18[%c80, %c0_25], %50 {strides = array<i32>} : memref<144x512xbf16, #tpu.memory_space<vmem>>, vector<16x512xbf16>,
    %c497_i32 = arith.constant 497 : i32
    %52 = tpu.dynamic_rotate %19 by %c497_i32 dim 1 : vector<16x512xf32>, i32 -> vector<16x512xf32>
    %53 = vector.extract_strided_slice %12 {offsets = [6, 0], sizes = [1, 512], strides = [1, 1]} : vector<9x512xf32> to vector<1x512xf32>
    %54 = vector.broadcast %53 : vector<1x512xf32> to vector<16x512xf32>
    %55 = arith.mulf %52, %54 : vector<16x512xf32>
    %56 = arith.truncf %55 : vector<16x512xf32> to vector<16x512xbf16>
    %c96 = arith.constant 96 : index
    %c0_26 = arith.constant 0 : index
    %57 = vector.load %arg18[%c96, %c0_26] : memref<144x512xbf16, #tpu.memory_space<vmem>>, vector<16x512xbf16>
    tpu.vector_store %arg18[%c96, %c0_26], %56 {strides = array<i32>} : memref<144x512xbf16, #tpu.memory_space<vmem>>, vector<16x512xbf16>,
    %c496_i32 = arith.constant 496 : i32
    %58 = tpu.dynamic_rotate %19 by %c496_i32 dim 1 : vector<16x512xf32>, i32 -> vector<16x512xf32>
    %59 = vector.extract_strided_slice %12 {offsets = [7, 0], sizes = [1, 512], strides = [1, 1]} : vector<9x512xf32> to vector<1x512xf32>
    %60 = vector.broadcast %59 : vector<1x512xf32> to vector<16x512xf32>
    %61 = arith.mulf %58, %60 : vector<16x512xf32>
    %62 = arith.truncf %61 : vector<16x512xf32> to vector<16x512xbf16>
    %c112 = arith.constant 112 : index
    %c0_27 = arith.constant 0 : index
    %63 = vector.load %arg18[%c112, %c0_27] : memref<144x512xbf16, #tpu.memory_space<vmem>>, vector<16x512xbf16>
    tpu.vector_store %arg18[%c112, %c0_27], %62 {strides = array<i32>} : memref<144x512xbf16, #tpu.memory_space<vmem>>, vector<16x512xbf16>,
    %c495_i32 = arith.constant 495 : i32
    %64 = tpu.dynamic_rotate %19 by %c495_i32 dim 1 : vector<16x512xf32>, i32 -> vector<16x512xf32>
    %65 = vector.extract_strided_slice %12 {offsets = [8, 0], sizes = [1, 512], strides = [1, 1]} : vector<9x512xf32> to vector<1x512xf32>
    %66 = vector.broadcast %65 : vector<1x512xf32> to vector<16x512xf32>
    %67 = arith.mulf %64, %66 : vector<16x512xf32>
    %68 = arith.truncf %67 : vector<16x512xf32> to vector<16x512xbf16>
    %c128 = arith.constant 128 : index
    %c0_28 = arith.constant 0 : index
    %69 = vector.load %arg18[%c128, %c0_28] : memref<144x512xbf16, #tpu.memory_space<vmem>>, vector<16x512xbf16>
    tpu.vector_store %arg18[%c128, %c0_28], %68 {strides = array<i32>} : memref<144x512xbf16, #tpu.memory_space<vmem>>, vector<16x512xbf16>,
    %c0_29 = arith.constant 0 : index
    %c0_30 = arith.constant 0 : index
    %70 = vector.load %arg2[%c0_29, %c0_30] : memref<8x144xbf16, #tpu.memory_space<vmem>>, vector<8x144xbf16>
    %c0_31 = arith.constant 0 : index
    %c0_32 = arith.constant 0 : index
    %71 = vector.load %arg18[%c0_31, %c0_32] : memref<144x512xbf16, #tpu.memory_space<vmem>>, vector<144x512xbf16>
    %cst = arith.constant dense<0.000000e+00> : vector<8x512xf32>
    %72 = tpu.matmul %70, %71, %cst {dimension_numbers = #tpu.dot_dimension_numbers<[1], [0], [0], [1], [0, 0, 1, 1], [], []>} : vector<8x144xbf16>, vector<144x512xbf16>, vector<8x512xf32> -> vector<8x512xf32>
    %73 = vector.broadcast %1 : vector<8x1xf32> to vector<8x512xf32>
    %74 = arith.addf %72, %73 : vector<8x512xf32>
    %cst_33 = arith.constant dense<0.000000e+00> : vector<8x8xf32>
    %75 = tpu.matmul %74, %10, %cst_33 {dimension_numbers = #tpu.dot_dimension_numbers<[1], [0], [0], [1], [0, 0, 1, 1], [], []>} : vector<8x512xf32>, vector<512x8xf32>, vector<8x8xf32> -> vector<8x8xf32>
    %76 = arith.mulf %74, %74 : vector<8x512xf32>
    %cst_34 = arith.constant dense<0.000000e+00> : vector<8x8xf32>
    %77 = tpu.matmul %76, %10, %cst_34 {dimension_numbers = #tpu.dot_dimension_numbers<[1], [0], [0], [1], [0, 0, 1, 1], [], []>} : vector<8x512xf32>, vector<512x8xf32>, vector<8x8xf32> -> vector<8x8xf32>
    %cst_35 = arith.constant dense<0.000000e+00> : vector<8x8xf32>
    %78 = tpu.matmul %9, %75, %cst_35 {dimension_numbers = #tpu.dot_dimension_numbers<[1], [0], [0], [1], [0, 0, 1, 1], [], []>} : vector<8x8xf32>, vector<8x8xf32>, vector<8x8xf32> -> vector<8x8xf32>
    %cst_36 = arith.constant dense<0.000000e+00> : vector<8x8xf32>
    %79 = tpu.matmul %9, %77, %cst_36 {dimension_numbers = #tpu.dot_dimension_numbers<[1], [0], [0], [1], [0, 0, 1, 1], [], []>} : vector<8x8xf32>, vector<8x8xf32>, vector<8x8xf32> -> vector<8x8xf32>
    %80 = arith.mulf %78, %78 : vector<8x8xf32>
    %81 = arith.subf %79, %80 : vector<8x8xf32>
    %cst_37 = arith.constant 9.99999974E-6 : f32
    %82 = vector.broadcast %cst_37 : f32 to vector<8x8xf32>
    %83 = arith.addf %81, %82 : vector<8x8xf32>
    %84 = math.rsqrt %83 : vector<8x8xf32>
    %85 = vector.broadcast %2 : vector<8x1xf32> to vector<8x8xf32>
    %86 = arith.mulf %85, %84 : vector<8x8xf32>
    %87 = arith.mulf %78, %86 : vector<8x8xf32>
    %88 = vector.broadcast %3 : vector<8x1xf32> to vector<8x8xf32>
    %89 = arith.subf %88, %87 : vector<8x8xf32>
    %cst_38 = arith.constant dense<0.000000e+00> : vector<8x512xf32>
    %90 = tpu.matmul %86, %11, %cst_38 {dimension_numbers = #tpu.dot_dimension_numbers<[1], [0], [0], [1], [0, 0, 1, 1], [], []>} : vector<8x8xf32>, vector<8x512xf32>, vector<8x512xf32> -> vector<8x512xf32>
    %91 = arith.mulf %74, %90 : vector<8x512xf32>
    %cst_39 = arith.constant dense<0.000000e+00> : vector<8x512xf32>
    %92 = tpu.matmul %89, %11, %cst_39 {dimension_numbers = #tpu.dot_dimension_numbers<[1], [0], [0], [1], [0, 0, 1, 1], [], []>} : vector<8x8xf32>, vector<8x512xf32>, vector<8x512xf32> -> vector<8x512xf32>
    %93 = arith.addf %91, %92 : vector<8x512xf32>
    %cst_40 = arith.constant 5.000000e-01 : f32
    %94 = vector.broadcast %cst_40 : f32 to vector<8x512xf32>
    %95 = arith.mulf %94, %93 : vector<8x512xf32>
    %cst_41 = arith.constant 4.471500e-02 : f32
    %96 = vector.broadcast %cst_41 : f32 to vector<8x512xf32>
    %97 = arith.mulf %96, %93 : vector<8x512xf32>
    %98 = arith.mulf %97, %93 : vector<8x512xf32>
    %99 = arith.mulf %98, %93 : vector<8x512xf32>
    %100 = arith.addf %93, %99 : vector<8x512xf32>
    %cst_42 = arith.constant 0.797884583 : f32
    %101 = vector.broadcast %cst_42 : f32 to vector<8x512xf32>
    %102 = arith.mulf %101, %100 : vector<8x512xf32>
    %103 = math.tanh %102 : vector<8x512xf32>
    %cst_43 = arith.constant 1.000000e+00 : f32
    %104 = vector.broadcast %cst_43 : f32 to vector<8x512xf32>
    %105 = arith.addf %104, %103 : vector<8x512xf32>
    %106 = arith.mulf %95, %105 : vector<8x512xf32>
    %c0_44 = arith.constant 0 : index
    %c0_45 = arith.constant 0 : index
    %107 = vector.load %arg12[%c0_44, %c0_45] : memref<512x64xf32, #tpu.memory_space<vmem>>, vector<512x64xf32>
    %cst_46 = arith.constant dense<0.000000e+00> : vector<8x64xf32>
    %108 = tpu.matmul %106, %107, %cst_46 {dimension_numbers = #tpu.dot_dimension_numbers<[1], [0], [0], [1], [0, 0, 1, 1], [], []>} : vector<8x512xf32>, vector<512x64xf32>, vector<8x64xf32> -> vector<8x64xf32>
    %c0_47 = arith.constant 0 : index
    %c0_48 = arith.constant 0 : index
    %109 = vector.load %arg4[%c0_47, %c0_48] : memref<8x8xf32, #tpu.memory_space<vmem>>, vector<8x8xf32>
    %cst_49 = arith.constant dense<0.000000e+00> : vector<8x64xf32>
    %110 = tpu.matmul %109, %108, %cst_49 {dimension_numbers = #tpu.dot_dimension_numbers<[1], [0], [0], [1], [0, 0, 1, 1], [], []>} : vector<8x8xf32>, vector<8x64xf32>, vector<8x64xf32> -> vector<8x64xf32>
    %c0_50 = arith.constant 0 : index
    %c0_51 = arith.constant 0 : index
    %111 = vector.load %arg5[%c0_50, %c0_51] : memref<8x1xf32, #tpu.memory_space<vmem>>, vector<8x1xf32>
    %112 = vector.broadcast %111 : vector<8x1xf32> to vector<8x64xf32>
    %113 = arith.addf %110, %112 : vector<8x64xf32>
    %cst_52 = arith.constant 3.000000e+00 : f32
    %114 = vector.broadcast %cst_52 : f32 to vector<8x64xf32>
    %115 = arith.addf %113, %114 : vector<8x64xf32>
    %cst_53 = arith.constant 0.000000e+00 : f32
    %cst_54 = arith.constant 6.000000e+00 : f32
    %116 = vector.broadcast %cst_53 : f32 to vector<8x64xf32>
    %117 = arith.maximumf %116, %115 : vector<8x64xf32>
    %118 = vector.broadcast %cst_54 : f32 to vector<8x64xf32>
    %119 = arith.minimumf %118, %117 : vector<8x64xf32>
    %120 = arith.mulf %113, %119 : vector<8x64xf32>
    %cst_55 = arith.constant 0.166666672 : f32
    %121 = vector.broadcast %cst_55 : f32 to vector<8x64xf32>
    %122 = arith.mulf %120, %121 : vector<8x64xf32>
    %c0_56 = arith.constant 0 : index
    %c0_57 = arith.constant 0 : index
    %123 = vector.load %arg6[%c0_56, %c0_57] : memref<16x8xf32, #tpu.memory_space<vmem>>, vector<16x8xf32>
    %cst_58 = arith.constant dense<0.000000e+00> : vector<16x64xf32>
    %124 = tpu.matmul %123, %122, %cst_58 {dimension_numbers = #tpu.dot_dimension_numbers<[1], [0], [0], [1], [0, 0, 1, 1], [], []>} : vector<16x8xf32>, vector<8x64xf32>, vector<16x64xf32> -> vector<16x64xf32>
    %125 = vector.extract_strided_slice %124 {offsets = [0, 0], sizes = [8, 64], strides = [1, 1]} : vector<16x64xf32> to vector<8x64xf32>
    %126 = vector.broadcast %6 : vector<8x1xf32> to vector<8x64xf32>
    %127 = arith.addf %125, %126 : vector<8x64xf32>
    %128 = arith.negf %127 : vector<8x64xf32>
    %129 = math.exp %128 : vector<8x64xf32>
    %cst_59 = arith.constant 1.000000e+00 : f32
    %130 = vector.broadcast %cst_59 : f32 to vector<8x64xf32>
    %131 = arith.addf %130, %129 : vector<8x64xf32>
    %132 = arith.divf %130, %131 : vector<8x64xf32>
    %133 = vector.extract_strided_slice %124 {offsets = [8, 0], sizes = [8, 64], strides = [1, 1]} : vector<16x64xf32> to vector<8x64xf32>
    %134 = vector.broadcast %7 : vector<8x1xf32> to vector<8x64xf32>
    %135 = arith.addf %133, %134 : vector<8x64xf32>
    %136 = arith.negf %135 : vector<8x64xf32>
    %137 = math.exp %136 : vector<8x64xf32>
    %cst_60 = arith.constant 1.000000e+00 : f32
    %138 = vector.broadcast %cst_60 : f32 to vector<8x64xf32>
    %139 = arith.addf %138, %137 : vector<8x64xf32>
    %140 = arith.divf %138, %139 : vector<8x64xf32>
    %c0_61 = arith.constant 0 : index
    %c0_62 = arith.constant 0 : index
    %141 = vector.load %arg13[%c0_61, %c0_62] : memref<64x512xf32, #tpu.memory_space<vmem>>, vector<64x512xf32>
    %cst_63 = arith.constant dense<0.000000e+00> : vector<8x512xf32>
    %142 = tpu.matmul %132, %141, %cst_63 {dimension_numbers = #tpu.dot_dimension_numbers<[1], [0], [0], [1], [0, 0, 1, 1], [], []>} : vector<8x64xf32>, vector<64x512xf32>, vector<8x512xf32> -> vector<8x512xf32>
    %c0_64 = arith.constant 0 : index
    %c0_65 = arith.constant 0 : index
    %143 = vector.load %arg14[%c0_64, %c0_65] : memref<64x512xf32, #tpu.memory_space<vmem>>, vector<64x512xf32>
    %cst_66 = arith.constant dense<0.000000e+00> : vector<8x512xf32>
    %144 = tpu.matmul %140, %143, %cst_66 {dimension_numbers = #tpu.dot_dimension_numbers<[1], [0], [0], [1], [0, 0, 1, 1], [], []>} : vector<8x64xf32>, vector<64x512xf32>, vector<8x512xf32> -> vector<8x512xf32>
    %145 = arith.mulf %142, %144 : vector<8x512xf32>
    %146 = arith.mulf %106, %145 : vector<8x512xf32>
    %c0_67 = arith.constant 0 : index
    %c0_68 = arith.constant 0 : index
    %147 = vector.load %arg7[%c0_67, %c0_68] : memref<8x8xf32, #tpu.memory_space<vmem>>, vector<8x8xf32>
    %cst_69 = arith.constant dense<0.000000e+00> : vector<8x512xf32>
    %148 = tpu.matmul %147, %146, %cst_69 {dimension_numbers = #tpu.dot_dimension_numbers<[1], [0], [0], [1], [0, 0, 1, 1], [], []>} : vector<8x8xf32>, vector<8x512xf32>, vector<8x512xf32> -> vector<8x512xf32>
    %149 = vector.broadcast %8 : vector<8x1xf32> to vector<8x512xf32>
    %150 = arith.addf %148, %149 : vector<8x512xf32>
    %cst_70 = arith.constant dense<0.000000e+00> : vector<8x8xf32>
    %151 = tpu.matmul %150, %10, %cst_70 {dimension_numbers = #tpu.dot_dimension_numbers<[1], [0], [0], [1], [0, 0, 1, 1], [], []>} : vector<8x512xf32>, vector<512x8xf32>, vector<8x8xf32> -> vector<8x8xf32>
    %152 = arith.mulf %150, %150 : vector<8x512xf32>
    %cst_71 = arith.constant dense<0.000000e+00> : vector<8x8xf32>
    %153 = tpu.matmul %152, %10, %cst_71 {dimension_numbers = #tpu.dot_dimension_numbers<[1], [0], [0], [1], [0, 0, 1, 1], [], []>} : vector<8x512xf32>, vector<512x8xf32>, vector<8x8xf32> -> vector<8x8xf32>
    %cst_72 = arith.constant dense<0.000000e+00> : vector<8x8xf32>
    %154 = tpu.matmul %9, %151, %cst_72 {dimension_numbers = #tpu.dot_dimension_numbers<[1], [0], [0], [1], [0, 0, 1, 1], [], []>} : vector<8x8xf32>, vector<8x8xf32>, vector<8x8xf32> -> vector<8x8xf32>
    %cst_73 = arith.constant dense<0.000000e+00> : vector<8x8xf32>
    %155 = tpu.matmul %9, %153, %cst_73 {dimension_numbers = #tpu.dot_dimension_numbers<[1], [0], [0], [1], [0, 0, 1, 1], [], []>} : vector<8x8xf32>, vector<8x8xf32>, vector<8x8xf32> -> vector<8x8xf32>
    %156 = arith.mulf %154, %154 : vector<8x8xf32>
    %157 = arith.subf %155, %156 : vector<8x8xf32>
    %cst_74 = arith.constant 9.99999974E-6 : f32
    %158 = vector.broadcast %cst_74 : f32 to vector<8x8xf32>
    %159 = arith.addf %157, %158 : vector<8x8xf32>
    %160 = math.rsqrt %159 : vector<8x8xf32>
    %161 = vector.broadcast %4 : vector<8x1xf32> to vector<8x8xf32>
    %162 = arith.mulf %161, %160 : vector<8x8xf32>
    %163 = arith.mulf %154, %162 : vector<8x8xf32>
    %164 = vector.broadcast %5 : vector<8x1xf32> to vector<8x8xf32>
    %165 = arith.subf %164, %163 : vector<8x8xf32>
    %cst_75 = arith.constant dense<0.000000e+00> : vector<8x512xf32>
    %166 = tpu.matmul %162, %11, %cst_75 {dimension_numbers = #tpu.dot_dimension_numbers<[1], [0], [0], [1], [0, 0, 1, 1], [], []>} : vector<8x8xf32>, vector<8x512xf32>, vector<8x512xf32> -> vector<8x512xf32>
    %167 = arith.mulf %150, %166 : vector<8x512xf32>
    %cst_76 = arith.constant dense<0.000000e+00> : vector<8x512xf32>
    %168 = tpu.matmul %165, %11, %cst_76 {dimension_numbers = #tpu.dot_dimension_numbers<[1], [0], [0], [1], [0, 0, 1, 1], [], []>} : vector<8x8xf32>, vector<8x512xf32>, vector<8x512xf32> -> vector<8x512xf32>
    %169 = arith.addf %167, %168 : vector<8x512xf32>
    %c0_77 = arith.constant 0 : index
    %c0_78 = arith.constant 0 : index
    %170 = vector.load %arg15[%c0_77, %c0_78] : memref<8x16xbf16, #tpu.memory_space<vmem>>, vector<8x16xbf16>
    %c64_79 = arith.constant 64 : index
    %c0_80 = arith.constant 0 : index
    %171 = vector.load %arg18[%c64_79, %c0_80] : memref<144x512xbf16, #tpu.memory_space<vmem>>, vector<16x512xbf16>
    %cst_81 = arith.constant dense<0.000000e+00> : vector<8x512xf32>
    %172 = tpu.matmul %170, %171, %cst_81 {dimension_numbers = #tpu.dot_dimension_numbers<[1], [0], [0], [1], [0, 0, 1, 1], [], []>} : vector<8x16xbf16>, vector<16x512xbf16>, vector<8x512xf32> -> vector<8x512xf32>
    %173 = vector.extract_strided_slice %0 {offsets = [0, 8], sizes = [8, 1], strides = [1, 1]} : vector<8x9xf32> to vector<8x1xf32>
    %174 = vector.broadcast %173 : vector<8x1xf32> to vector<8x512xf32>
    %175 = arith.addf %172, %174 : vector<8x512xf32>
    %176 = arith.addf %169, %175 : vector<8x512xf32>
    %cst_82 = arith.constant 5.000000e-01 : f32
    %177 = vector.broadcast %cst_82 : f32 to vector<8x512xf32>
    %178 = arith.mulf %177, %176 : vector<8x512xf32>
    %cst_83 = arith.constant 4.471500e-02 : f32
    %179 = vector.broadcast %cst_83 : f32 to vector<8x512xf32>
    %180 = arith.mulf %179, %176 : vector<8x512xf32>
    %181 = arith.mulf %180, %176 : vector<8x512xf32>
    %182 = arith.mulf %181, %176 : vector<8x512xf32>
    %183 = arith.addf %176, %182 : vector<8x512xf32>
    %cst_84 = arith.constant 0.797884583 : f32
    %184 = vector.broadcast %cst_84 : f32 to vector<8x512xf32>
    %185 = arith.mulf %184, %183 : vector<8x512xf32>
    %186 = math.tanh %185 : vector<8x512xf32>
    %cst_85 = arith.constant 1.000000e+00 : f32
    %187 = vector.broadcast %cst_85 : f32 to vector<8x512xf32>
    %188 = arith.addf %187, %186 : vector<8x512xf32>
    %189 = arith.mulf %178, %188 : vector<8x512xf32>
    %190 = vector.extract_strided_slice %189 {offsets = [0, 0], sizes = [8, 256], strides = [1, 1]} : vector<8x512xf32> to vector<8x256xf32>
    %c0_86 = arith.constant 0 : index
    %c0_87 = arith.constant 0 : index
    %c0_88 = arith.constant 0 : index
    %191 = vector.load %arg16[%c0_86, %c0_87, %c0_88] : memref<2x8x256xf32, #tpu.memory_space<vmem>>, vector<1x8x256xf32>
    %192 = vector.shape_cast %191 : vector<1x8x256xf32> to vector<8x256xf32>
    %193 = vector.shape_cast %190 : vector<8x256xf32> to vector<1x8x256xf32>
    tpu.vector_store %arg16[%c0_86, %c0_87, %c0_88], %193 {strides = array<i32>} : memref<2x8x256xf32, #tpu.memory_space<vmem>>, vector<1x8x256xf32>,
    %194 = vector.extract_strided_slice %189 {offsets = [0, 256], sizes = [8, 256], strides = [1, 1]} : vector<8x512xf32> to vector<8x256xf32>
    %c1_89 = arith.constant 1 : index
    %c0_90 = arith.constant 0 : index
    %c0_91 = arith.constant 0 : index
    %195 = vector.load %arg16[%c1_89, %c0_90, %c0_91] : memref<2x8x256xf32, #tpu.memory_space<vmem>>, vector<1x8x256xf32>
    %196 = vector.shape_cast %195 : vector<1x8x256xf32> to vector<8x256xf32>
    %197 = vector.shape_cast %194 : vector<8x256xf32> to vector<1x8x256xf32>
    tpu.vector_store %arg16[%c1_89, %c0_90, %c0_91], %197 {strides = array<i32>} : memref<2x8x256xf32, #tpu.memory_space<vmem>>, vector<1x8x256xf32>,
    return
  }
  func.func @transform_0(%arg0: i32) -> (i32, i32, i32) {
    %c0_i32 = arith.constant 0 : i32
    %c0_i32_0 = arith.constant 0 : i32
    %c0_i32_1 = arith.constant 0 : i32
    return %arg0, %c0_i32, %c0_i32_0 : i32, i32, i32
  }
  func.func @transform_1(%arg0: i32) -> (i32, i32) {
    %c0_i32 = arith.constant 0 : i32
    %c0_i32_0 = arith.constant 0 : i32
    %c0_i32_1 = arith.constant 0 : i32
    return %c0_i32, %c0_i32_0 : i32, i32
  }
  func.func @transform_2(%arg0: i32) -> (i32, i32) {
    %c0_i32 = arith.constant 0 : i32
    %c0_i32_0 = arith.constant 0 : i32
    %c0_i32_1 = arith.constant 0 : i32
    return %c0_i32, %c0_i32_0 : i32, i32
  }
  func.func @transform_3(%arg0: i32) -> (i32, i32) {
    %c0_i32 = arith.constant 0 : i32
    %c0_i32_0 = arith.constant 0 : i32
    %c0_i32_1 = arith.constant 0 : i32
    return %c0_i32, %c0_i32_0 : i32, i32
  }
  func.func @transform_4(%arg0: i32) -> (i32, i32) {
    %c0_i32 = arith.constant 0 : i32
    %c0_i32_0 = arith.constant 0 : i32
    %c0_i32_1 = arith.constant 0 : i32
    return %c0_i32, %c0_i32_0 : i32, i32
  }
  func.func @transform_5(%arg0: i32) -> (i32, i32) {
    %c0_i32 = arith.constant 0 : i32
    %c0_i32_0 = arith.constant 0 : i32
    %c0_i32_1 = arith.constant 0 : i32
    return %c0_i32, %c0_i32_0 : i32, i32
  }
  func.func @transform_6(%arg0: i32) -> (i32, i32) {
    %c0_i32 = arith.constant 0 : i32
    %c0_i32_0 = arith.constant 0 : i32
    %c0_i32_1 = arith.constant 0 : i32
    return %c0_i32, %c0_i32_0 : i32, i32
  }
  func.func @transform_7(%arg0: i32) -> (i32, i32) {
    %c0_i32 = arith.constant 0 : i32
    %c0_i32_0 = arith.constant 0 : i32
    %c0_i32_1 = arith.constant 0 : i32
    return %c0_i32, %c0_i32_0 : i32, i32
  }
  func.func @transform_8(%arg0: i32) -> (i32, i32) {
    %c0_i32 = arith.constant 0 : i32
    %c0_i32_0 = arith.constant 0 : i32
    %c0_i32_1 = arith.constant 0 : i32
    return %c0_i32, %c0_i32_0 : i32, i32
  }
  func.func @transform_9(%arg0: i32) -> (i32, i32) {
    %c0_i32 = arith.constant 0 : i32
    %c0_i32_0 = arith.constant 0 : i32
    %c0_i32_1 = arith.constant 0 : i32
    return %c0_i32, %c0_i32_0 : i32, i32
  }
  func.func @transform_10(%arg0: i32) -> (i32, i32) {
    %c0_i32 = arith.constant 0 : i32
    %c0_i32_0 = arith.constant 0 : i32
    %c0_i32_1 = arith.constant 0 : i32
    return %c0_i32, %c0_i32_0 : i32, i32
  }
  func.func @transform_11(%arg0: i32) -> (i32, i32) {
    %c0_i32 = arith.constant 0 : i32
    %c0_i32_0 = arith.constant 0 : i32
    %c0_i32_1 = arith.constant 0 : i32
    return %c0_i32, %c0_i32_0 : i32, i32
  }
  func.func @transform_12(%arg0: i32) -> (i32, i32) {
    %c0_i32 = arith.constant 0 : i32
    %c0_i32_0 = arith.constant 0 : i32
    %c0_i32_1 = arith.constant 0 : i32
    return %c0_i32, %c0_i32_0 : i32, i32
  }
  func.func @transform_13(%arg0: i32) -> (i32, i32) {
    %c0_i32 = arith.constant 0 : i32
    %c0_i32_0 = arith.constant 0 : i32
    %c0_i32_1 = arith.constant 0 : i32
    return %c0_i32, %c0_i32_0 : i32, i32
  }
  func.func @transform_14(%arg0: i32) -> (i32, i32) {
    %c0_i32 = arith.constant 0 : i32
    %c0_i32_0 = arith.constant 0 : i32
    %c0_i32_1 = arith.constant 0 : i32
    return %c0_i32, %c0_i32_0 : i32, i32
  }
  func.func @transform_15(%arg0: i32) -> (i32, i32, i32) {
    %c0_i32 = arith.constant 0 : i32
    %c0_i32_0 = arith.constant 0 : i32
    %c0_i32_1 = arith.constant 0 : i32
    return %arg0, %c0_i32, %c0_i32_0 : i32, i32, i32
  }
}

</mosaic_0001>

<llo_original>
// kernel: decoder_block.1
$region0: #{decoder_block.1}
  #allocation0 [shape = 'u32[]', space=smem, size = 0x4, offset = 0x4, fixed_abs, tag = 'smem constant byte address 0x4 - core index']
  #allocation1 [shape = 'u32[144,128]{1,0:T(1,128)}', space=vmem, size = 0x12000, scoped, tag = 'internal scratch']
  #allocation2 [shape = 'f32[16,512]{1,0:T(8,128)}', space=vmem, size = 0x8000, scoped, tag = 'scratch operand']
  #allocation3 [shape = 'bf16[144,512]{1,0:T(16,128)(2,1)}', space=vmem, size = 0x24000, scoped, tag = 'scratch operand']
  %s0 = inlined_call_operand.vmem [shape: f32[2,16,256], index: 0, kind: input, shape index: {}]
  %s1 = inlined_call_operand.vmem [shape: bf16[8,144], index: 1, kind: input, shape index: {}]
  %s2 = inlined_call_operand.vmem [shape: f32[8,9], index: 2, kind: input, shape index: {}]
  %s3 = inlined_call_operand.vmem [shape: f32[8,8], index: 3, kind: input, shape index: {}]
  %s4 = inlined_call_operand.vmem [shape: f32[8,1], index: 4, kind: input, shape index: {}]
  %s5 = inlined_call_operand.vmem [shape: f32[16,8], index: 5, kind: input, shape index: {}]
  %s6 = inlined_call_operand.vmem [shape: f32[8,8], index: 6, kind: input, shape index: {}]
  %s7 = inlined_call_operand.hbm [shape: f32[8,8], index: 7, kind: input, shape index: {}]
  %s8 = inlined_call_operand.vmem [shape: f32[9,512], index: 8, kind: input, shape index: {}]
  %s9 = inlined_call_operand.vmem [shape: f32[512,8], index: 9, kind: input, shape index: {}]
  %s10 = inlined_call_operand.vmem [shape: f32[8,512], index: 10, kind: input, shape index: {}]
  %s11 = inlined_call_operand.vmem [shape: f32[512,64], index: 11, kind: input, shape index: {}]
  %s12 = inlined_call_operand.hbm [shape: f32[64,512], index: 12, kind: input, shape index: {}]
  %s13 = inlined_call_operand.hbm [shape: f32[64,512], index: 13, kind: input, shape index: {}]
  %s14 = inlined_call_operand.vmem [shape: bf16[8,16], index: 14, kind: input, shape index: {}]
  %s15 = inlined_call_operand.vmem [shape: f32[2,8,256], index: 15, kind: output, shape index: {}]
  %s16 = sld [smem:[#allocation0]]
  $region82: #{decoder_block.1} parent=0
    _
  %s18 = ssub.s32 1, %s16
  %s19 = scalar_select 0, %s18, %s16
  $region1: #{decoder_block.1} parent=0
    #allocation4 [shape = 'u8[4096]{0}', space=vmem, size = 0x1000, scoped, tag = 'input window, operand 7, single buffered']
    #allocation5 [shape = 's32[1]{0}', space=sflag, size = 0x4, scoped, tag = 'scoped memory for decoder_block.1']
    #allocation6 [shape = 'u8[131072]{0}', space=vmem, size = 0x20000, scoped, tag = 'input window, operand 12, single buffered']
    #allocation7 [shape = 's32[1]{0}', space=sflag, size = 0x4, scoped, tag = 'scoped memory for decoder_block.1']
    #allocation8 [shape = 'u8[131072]{0}', space=vmem, size = 0x20000, scoped, tag = 'input window, operand 13, single buffered']
    %20 = vsyncpa [#allocation5], 0
    %21 = vsyncpa [#allocation7], 0
    // Predicated region
    $region2: #{decoder_block.1} parent=1 // pred_check
      _
    $region3: #{decoder_block.1} parent=1 // pred_check_branch
      %23 = sbr.rel (0) target = $region5
    $region4: #{decoder_block.1} parent=1 // pred_region
      _
    $region5: #{decoder_block.1} parent=1 // pred_fallthru
      _
    // Predicated region
    $region6: #{decoder_block.1} parent=1 // pred_check
      _
    $region7: #{decoder_block.1} parent=1 // pred_check_branch
      %25 = sbr.rel (0) target = $region9
    $region8: #{decoder_block.1} parent=1 // pred_region
      _
    $region9: #{decoder_block.1} parent=1 // pred_fallthru
      _
    // Predicated region
    $region10: #{decoder_block.1} parent=1 // pred_check
      _
    $region11: #{decoder_block.1} parent=1 // pred_check_branch
      %27 = sbr.rel (0) target = $region13
    $region12: #{decoder_block.1} parent=1 // pred_region
      _
    $region13: #{decoder_block.1} parent=1 // pred_fallthru
      _
    // Predicated region
    $region14: #{decoder_block.1} parent=1 // pred_check
      _
    $region15: #{decoder_block.1} parent=1 // pred_check_branch
      %29 = sbr.rel (0) target = $region17
    $region16: #{decoder_block.1} parent=1 // pred_region
      _
    $region17: #{decoder_block.1} parent=1 // pred_fallthru
      _
    // Predicated region
    $region18: #{decoder_block.1} parent=1 // pred_check
      _
    $region19: #{decoder_block.1} parent=1 // pred_check_branch
      %31 = sbr.rel (0) target = $region21
    $region20: #{decoder_block.1} parent=1 // pred_region
      _
    $region21: #{decoder_block.1} parent=1 // pred_fallthru
      _
    // Predicated region
    $region22: #{decoder_block.1} parent=1 // pred_check
      _
    $region23: #{decoder_block.1} parent=1 // pred_check_branch
      %33 = sbr.rel (0) target = $region25
    $region24: #{decoder_block.1} parent=1 // pred_region
      _
    $region25: #{decoder_block.1} parent=1 // pred_fallthru
      _
    // Predicated region
    $region26: #{decoder_block.1} parent=1 // pred_check
      _
    $region27: #{decoder_block.1} parent=1 // pred_check_branch
      %35 = sbr.rel (0) target = $region29
    $region28: #{decoder_block.1} parent=1 // pred_region
      _
    $region29: #{decoder_block.1} parent=1 // pred_fallthru
      _
    // Predicated region
    $region30: #{decoder_block.1} parent=1 // pred_check
      _
    $region31: #{decoder_block.1} parent=1 // pred_check_branch
      %37 = sbr.rel (0) target = $region33
    $region32: #{decoder_block.1} parent=1 // pred_region
      %s39 = ssub.s32 128, 128
      %40 = vsyncadd [#allocation5], %s39
      %s42 = sshll.u32 [#allocation4], 4
      %s43 = int_to_ptr.vmem [resolvable:$true] %s42
      %45 = dma.hbm_to_vmem [thread:$0]  %s7, 128, %s43, [#allocation5]
    $region33: #{decoder_block.1} parent=1 // pred_fallthru
      _
    // Predicated region
    $region34: #{decoder_block.1} parent=1 // pred_check
      _
    $region35: #{decoder_block.1} parent=1 // pred_check_branch
      %47 = sbr.rel (0) target = $region37
    $region36: #{decoder_block.1} parent=1 // pred_region
      _
    $region37: #{decoder_block.1} parent=1 // pred_fallthru
      _
    // Predicated region
    $region38: #{decoder_block.1} parent=1 // pred_check
      _
    $region39: #{decoder_block.1} parent=1 // pred_check_branch
      %49 = sbr.rel (0) target = $region41
    $region40: #{decoder_block.1} parent=1 // pred_region
      _
    $region41: #{decoder_block.1} parent=1 // pred_fallthru
      _
    // Predicated region
    $region42: #{decoder_block.1} parent=1 // pred_check
      _
    $region43: #{decoder_block.1} parent=1 // pred_check_branch
      %51 = sbr.rel (0) target = $region45
    $region44: #{decoder_block.1} parent=1 // pred_region
      _
    $region45: #{decoder_block.1} parent=1 // pred_fallthru
      _
    // Predicated region
    $region46: #{decoder_block.1} parent=1 // pred_check
      _
    $region47: #{decoder_block.1} parent=1 // pred_check_branch
      %53 = sbr.rel (0) target = $region49
    $region48: #{decoder_block.1} parent=1 // pred_region
      _
    $region49: #{decoder_block.1} parent=1 // pred_fallthru
      _
    // Predicated region
    $region50: #{decoder_block.1} parent=1 // pred_check
      _
    $region51: #{decoder_block.1} parent=1 // pred_check_branch
      %55 = sbr.rel (0) target = $region53
    $region52: #{decoder_block.1} parent=1 // pred_region
      %s57 = ssub.s32 4096, 4096
      %58 = vsyncadd [#allocation7], %s57
      %s59 = sshll.u32 [#allocation6], 4
      %s60 = int_to_ptr.vmem [resolvable:$true] %s59
      %65 = dma.hbm_to_vmem [thread:$0]  %s12, 4096, %s60, [#allocation7], 512, 512, 32
    $region53: #{decoder_block.1} parent=1 // pred_fallthru
      _
    // Predicated region
    $region54: #{decoder_block.1} parent=1 // pred_check
      _
    $region55: #{decoder_block.1} parent=1 // pred_check_branch
      %67 = sbr.rel (0) target = $region57
    $region56: #{decoder_block.1} parent=1 // pred_region
      %s69 = ssub.s32 4096, 4096
      %70 = vsyncadd [#allocation7], %s69
      %s71 = sshll.u32 [#allocation8], 4
      %s72 = int_to_ptr.vmem [resolvable:$true] %s71
      %77 = dma.hbm_to_vmem [thread:$0]  %s13, 4096, %s72, [#allocation7], 512, 512, 32
    $region57: #{decoder_block.1} parent=1 // pred_fallthru
      _
    // Predicated region
    $region58: #{decoder_block.1} parent=1 // pred_check
      _
    $region59: #{decoder_block.1} parent=1 // pred_check_branch
      %79 = sbr.rel (0) target = $region61
    $region60: #{decoder_block.1} parent=1 // pred_region
      _
    $region61: #{decoder_block.1} parent=1 // pred_fallthru
      _
    // Predicated region
    $region62: #{decoder_block.1} parent=1 // pred_check
      _
    $region63: #{decoder_block.1} parent=1 // pred_check_branch
      %81 = sbr.rel (0) target = $region65
    $region64: #{decoder_block.1} parent=1 // pred_region
      %82 = dma.done [#allocation5], 128
    $region65: #{decoder_block.1} parent=1 // pred_fallthru
      _
    // Predicated region
    $region66: #{decoder_block.1} parent=1 // pred_check
      _
    $region67: #{decoder_block.1} parent=1 // pred_check_branch
      %84 = sbr.rel (0) target = $region69
    $region68: #{decoder_block.1} parent=1 // pred_region
      %85 = dma.done [#allocation7], 4096
    $region69: #{decoder_block.1} parent=1 // pred_fallthru
      _
    // Predicated region
    $region70: #{decoder_block.1} parent=1 // pred_check
      _
    $region71: #{decoder_block.1} parent=1 // pred_check_branch
      %87 = sbr.rel (0) target = $region73
    $region72: #{decoder_block.1} parent=1 // pred_region
      %88 = dma.done [#allocation7], 4096
    $region73: #{decoder_block.1} parent=1 // pred_fallthru
      _
    %v90 = vld [vmem:[%s2] sm:$0xff]
    %v91 = vld [vmem:[#allocation4] sm:$0xff]
    %v92 = vld [vmem:[%s9] sm:$0xff]
    %v93 = vld [vmem:[%s9 + $0x8] sm:$0xff]
    %v94 = vld [vmem:[%s9 + $0x10] sm:$0xff]
    %v95 = vld [vmem:[%s9 + $0x18] sm:$0xff]
    %v96 = vld [vmem:[%s9 + $0x20] sm:$0xff]
    %v97 = vld [vmem:[%s9 + $0x28] sm:$0xff]
    %v98 = vld [vmem:[%s9 + $0x30] sm:$0xff]
    %v99 = vld [vmem:[%s9 + $0x38] sm:$0xff]
    %v100 = vld [vmem:[%s9 + $0x40] sm:$0xff]
    %v101 = vld [vmem:[%s9 + $0x48] sm:$0xff]
    %v102 = vld [vmem:[%s9 + $0x50] sm:$0xff]
    %v103 = vld [vmem:[%s9 + $0x58] sm:$0xff]
    %v104 = vld [vmem:[%s9 + $0x60] sm:$0xff]
    %v105 = vld [vmem:[%s9 + $0x68] sm:$0xff]
    %v106 = vld [vmem:[%s9 + $0x70] sm:$0xff]
    %v107 = vld [vmem:[%s9 + $0x78] sm:$0xff]
    %v108 = vld [vmem:[%s9 + $0x80] sm:$0xff]
    %v109 = vld [vmem:[%s9 + $0x88] sm:$0xff]
    %v110 = vld [vmem:[%s9 + $0x90] sm:$0xff]
    %v111 = vld [vmem:[%s9 + $0x98] sm:$0xff]
    %v112 = vld [vmem:[%s9 + $0xa0] sm:$0xff]
    %v113 = vld [vmem:[%s9 + $0xa8] sm:$0xff]
    %v114 = vld [vmem:[%s9 + $0xb0] sm:$0xff]
    %v115 = vld [vmem:[%s9 + $0xb8] sm:$0xff]
    %v116 = vld [vmem:[%s9 + $0xc0] sm:$0xff]
    %v117 = vld [vmem:[%s9 + $0xc8] sm:$0xff]
    %v118 = vld [vmem:[%s9 + $0xd0] sm:$0xff]
    %v119 = vld [vmem:[%s9 + $0xd8] sm:$0xff]
    %v120 = vld [vmem:[%s9 + $0xe0] sm:$0xff]
    %v121 = vld [vmem:[%s9 + $0xe8] sm:$0xff]
    %v122 = vld [vmem:[%s9 + $0xf0] sm:$0xff]
    %v123 = vld [vmem:[%s9 + $0xf8] sm:$0xff]
    %v124 = vld [vmem:[%s9 + $0x100] sm:$0xff]
    %v125 = vld [vmem:[%s9 + $0x108] sm:$0xff]
    %v126 = vld [vmem:[%s9 + $0x110] sm:$0xff]
    %v127 = vld [vmem:[%s9 + $0x118] sm:$0xff]
    %v128 = vld [vmem:[%s9 + $0x120] sm:$0xff]
    %v129 = vld [vmem:[%s9 + $0x128] sm:$0xff]
    %v130 = vld [vmem:[%s9 + $0x130] sm:$0xff]
    %v131 = vld [vmem:[%s9 + $0x138] sm:$0xff]
    %v132 = vld [vmem:[%s9 + $0x140] sm:$0xff]
    %v133 = vld [vmem:[%s9 + $0x148] sm:$0xff]
    %v134 = vld [vmem:[%s9 + $0x150] sm:$0xff]
    %v135 = vld [vmem:[%s9 + $0x158] sm:$0xff]
    %v136 = vld [vmem:[%s9 + $0x160] sm:$0xff]
    %v137 = vld [vmem:[%s9 + $0x168] sm:$0xff]
    %v138 = vld [vmem:[%s9 + $0x170] sm:$0xff]
    %v139 = vld [vmem:[%s9 + $0x178] sm:$0xff]
    %v140 = vld [vmem:[%s9 + $0x180] sm:$0xff]
    %v141 = vld [vmem:[%s9 + $0x188] sm:$0xff]
    %v142 = vld [vmem:[%s9 + $0x190] sm:$0xff]
    %v143 = vld [vmem:[%s9 + $0x198] sm:$0xff]
    %v144 = vld [vmem:[%s9 + $0x1a0] sm:$0xff]
    %v145 = vld [vmem:[%s9 + $0x1a8] sm:$0xff]
    %v146 = vld [vmem:[%s9 + $0x1b0] sm:$0xff]
    %v147 = vld [vmem:[%s9 + $0x1b8] sm:$0xff]
    %v148 = vld [vmem:[%s9 + $0x1c0] sm:$0xff]
    %v149 = vld [vmem:[%s9 + $0x1c8] sm:$0xff]
    %v150 = vld [vmem:[%s9 + $0x1d0] sm:$0xff]
    %v151 = vld [vmem:[%s9 + $0x1d8] sm:$0xff]
    %v152 = vld [vmem:[%s9 + $0x1e0] sm:$0xff]
    %v153 = vld [vmem:[%s9 + $0x1e8] sm:$0xff]
    %v154 = vld [vmem:[%s9 + $0x1f0] sm:$0xff]
    %v155 = vld [vmem:[%s9 + $0x1f8] sm:$0xff]
    %v156 = vld [vmem:[%s10] sm:$0xff]
    %v157 = vld [vmem:[%s10 + $0x8] sm:$0xff]
    %v158 = vld [vmem:[%s10 + $0x10] sm:$0xff]
    %v159 = vld [vmem:[%s10 + $0x18] sm:$0xff]
    %v160 = vld [vmem:[%s8] sm:$0xff]
    %v161 = vld [vmem:[%s8 + $0x8] sm:$0xff]
    %v162 = vld [vmem:[%s8 + $0x10] sm:$0xff]
    %v163 = vld [vmem:[%s8 + $0x18] sm:$0xff]
    %v164 = vld [vmem:[%s8 + $0x20] sm:$0x1]
    %v165 = vld [vmem:[%s8 + $0x28] sm:$0x1]
    %v166 = vld [vmem:[%s8 + $0x30] sm:$0x1]
    %v167 = vld [vmem:[%s8 + $0x38] sm:$0x1]
    %v168 = vld [vmem:[%s0] sm:$0xff]
    %v169 = vld [vmem:[%s0 + $0x8] sm:$0xff]
    %v170 = vld [vmem:[%s0 + $0x10] sm:$0xff]
    %v171 = vld [vmem:[%s0 + $0x18] sm:$0xff]
    %172 = vst [vmem:[#allocation2] sm:$0xff] %v168
    %173 = vst [vmem:[#allocation2 + $0x8] sm:$0xff] %v169
    %174 = vst [vmem:[#allocation2 + $0x20] sm:$0xff] %v170
    %175 = vst [vmem:[#allocation2 + $0x28] sm:$0xff] %v171
    %s176 = scalar_lea.vmem %s0, 32
    %v177 = vld [vmem:[%s176] sm:$0xff]
    %v178 = vld [vmem:[%s176 + $0x8] sm:$0xff]
    %v179 = vld [vmem:[%s176 + $0x10] sm:$0xff]
    %v180 = vld [vmem:[%s176 + $0x18] sm:$0xff]
    %181 = vst [vmem:[#allocation2 + $0x10] sm:$0xff] %v177
    %182 = vst [vmem:[#allocation2 + $0x18] sm:$0xff] %v178
    %183 = vst [vmem:[#allocation2 + $0x30] sm:$0xff] %v179
    %184 = vst [vmem:[#allocation2 + $0x38] sm:$0xff] %v180
    %v185 = vld [vmem:[#allocation2] sm:$0xff]
    %v186 = vld [vmem:[#allocation2 + $0x8] sm:$0xff]
    %v187 = vld [vmem:[#allocation2 + $0x10] sm:$0xff]
    %v188 = vld [vmem:[#allocation2 + $0x18] sm:$0xff]
    %v189 = vld [vmem:[#allocation2 + $0x20] sm:$0xff]
    %v190 = vld [vmem:[#allocation2 + $0x28] sm:$0xff]
    %v191 = vld [vmem:[#allocation2 + $0x30] sm:$0xff]
    %v192 = vld [vmem:[#allocation2 + $0x38] sm:$0xff]
    %193 = vrot.lane.b32.xlu0 %v185, 17
    %v194 = vpop.permute.xlu0 %193
    %195 = vrot.lane.b32.xlu0 %v189, 17
    %v196 = vpop.permute.xlu0 %195
    %197 = vrot.lane.b32.xlu0 %v186, 17
    %v198 = vpop.permute.xlu0 %197
    %199 = vrot.lane.b32.xlu0 %v190, 17
    %v200 = vpop.permute.xlu0 %199
    %201 = vrot.lane.b32.xlu0 %v187, 17
    %v202 = vpop.permute.xlu0 %201
    %203 = vrot.lane.b32.xlu0 %v191, 17
    %v204 = vpop.permute.xlu0 %203
    %205 = vrot.lane.b32.xlu0 %v188, 17
    %v206 = vpop.permute.xlu0 %205
    %207 = vrot.lane.b32.xlu0 %v192, 17
    %v208 = vpop.permute.xlu0 %207
    %v209 = vlaneseq
    %v210 = vand.u32 %v209, 127
    %vm211 = vcmp.lt.s32.totalorder %v210, 17
    %v212 = vsel %vm211, %v202, %v206
    %v213 = vsel %vm211, %v204, %v208
    %v214 = vsel %vm211, %v198, %v202
    %v215 = vsel %vm211, %v200, %v204
    %v216 = vsel %vm211, %v194, %v198
    %v217 = vsel %vm211, %v196, %v200
    %v218 = vsel %vm211, %v206, %v194
    %v219 = vsel %vm211, %v208, %v196
    %v220 = vlaneseq
    %v221 = vshrl.u32 %v220, 7
    %v222 = vsub.s32 0, %v221
    %v223 = vrot.slane %v160, %v222
    %v224 = vlaneseq
    %v225 = vshrl.u32 %v224, 7
    %v226 = vsub.s32 0, %v225
    %v227 = vrot.slane %v161, %v226
    %v228 = vlaneseq
    %v229 = vshrl.u32 %v228, 7
    %v230 = vsub.s32 0, %v229
    %v231 = vrot.slane %v162, %v230
    %v232 = vlaneseq
    %v233 = vshrl.u32 %v232, 7
    %v234 = vsub.s32 0, %v233
    %v235 = vrot.slane %v163, %v234
    %v236 = vmul.f32 %v218, %v223
    %v237 = vmul.f32 %v216, %v227
    %v238 = vmul.f32 %v214, %v231
    %v239 = vmul.f32 %v212, %v235
    %v240 = vmul.f32 %v219, %v223
    %v241 = vmul.f32 %v217, %v227
    %v242 = vmul.f32 %v215, %v231
    %v243 = vmul.f32 %v213, %v235
    %v244 = vpack.c.bf16 %v240, %v236
    %v245 = vpack.c.bf16 %v241, %v237
    %v246 = vpack.c.bf16 %v242, %v238
    %v247 = vpack.c.bf16 %v243, %v239
    %248 = vst [vmem:[#allocation3] sm:$0xff] %v244
    %249 = vst [vmem:[#allocation3 + $0x8] sm:$0xff] %v245
    %250 = vst [vmem:[#allocation3 + $0x10] sm:$0xff] %v246
    %251 = vst [vmem:[#allocation3 + $0x18] sm:$0xff] %v247
    %252 = vrot.lane.b32.xlu0 %v185, 16
    %v253 = vpop.permute.xlu0 %252
    %254 = vrot.lane.b32.xlu0 %v189, 16
    %v255 = vpop.permute.xlu0 %254
    %256 = vrot.lane.b32.xlu0 %v186, 16
    %v257 = vpop.permute.xlu0 %256
    %258 = vrot.lane.b32.xlu0 %v190, 16
    %v259 = vpop.permute.xlu0 %258
    %260 = vrot.lane.b32.xlu0 %v187, 16
    %v261 = vpop.permute.xlu0 %260
    %262 = vrot.lane.b32.xlu0 %v191, 16
    %v263 = vpop.permute.xlu0 %262
    %264 = vrot.lane.b32.xlu0 %v188, 16
    %v265 = vpop.permute.xlu0 %264
    %266 = vrot.lane.b32.xlu0 %v192, 16
    %v267 = vpop.permute.xlu0 %266
    %vm268 = vcmp.lt.s32.totalorder %v210, 16
    %v269 = vsel %vm268, %v261, %v265
    %v270 = vsel %vm268, %v263, %v267
    %v271 = vsel %vm268, %v257, %v261
    %v272 = vsel %vm268, %v259, %v263
    %v273 = vsel %vm268, %v253, %v257
    %v274 = vsel %vm268, %v255, %v259
    %v275 = vsel %vm268, %v265, %v253
    %v276 = vsel %vm268, %v267, %v255
    %v277 = vlaneseq
    %v278 = vshrl.u32 %v277, 7
    %v279 = vsub.s32 1, %v278
    %v280 = vrot.slane %v160, %v279
    %v281 = vlaneseq
    %v282 = vshrl.u32 %v281, 7
    %v283 = vsub.s32 1, %v282
    %v284 = vrot.slane %v161, %v283
    %v285 = vlaneseq
    %v286 = vshrl.u32 %v285, 7
    %v287 = vsub.s32 1, %v286
    %v288 = vrot.slane %v162, %v287
    %v289 = vlaneseq
    %v290 = vshrl.u32 %v289, 7
    %v291 = vsub.s32 1, %v290
    %v292 = vrot.slane %v163, %v291
    %v293 = vmul.f32 %v275, %v280
    %v294 = vmul.f32 %v273, %v284
    %v295 = vmul.f32 %v271, %v288
    %v296 = vmul.f32 %v269, %v292
    %v297 = vmul.f32 %v276, %v280
    %v298 = vmul.f32 %v274, %v284
    %v299 = vmul.f32 %v272, %v288
    %v300 = vmul.f32 %v270, %v292
    %v301 = vpack.c.bf16 %v297, %v293
    %v302 = vpack.c.bf16 %v298, %v294
    %v303 = vpack.c.bf16 %v299, %v295
    %v304 = vpack.c.bf16 %v300, %v296
    %305 = vst [vmem:[#allocation3 + $0x20] sm:$0xff] %v301
    %306 = vst [vmem:[#allocation3 + $0x28] sm:$0xff] %v302
    %307 = vst [vmem:[#allocation3 + $0x30] sm:$0xff] %v303
    %308 = vst [vmem:[#allocation3 + $0x38] sm:$0xff] %v304
    %309 = vrot.lane.b32.xlu0 %v185, 15
    %v310 = vpop.permute.xlu0 %309
    %311 = vrot.lane.b32.xlu0 %v189, 15
    %v312 = vpop.permute.xlu0 %311
    %313 = vrot.lane.b32.xlu0 %v186, 15
    %v314 = vpop.permute.xlu0 %313
    %315 = vrot.lane.b32.xlu0 %v190, 15
    %v316 = vpop.permute.xlu0 %315
    %317 = vrot.lane.b32.xlu0 %v187, 15
    %v318 = vpop.permute.xlu0 %317
    %319 = vrot.lane.b32.xlu0 %v191, 15
    %v320 = vpop.permute.xlu0 %319
    %321 = vrot.lane.b32.xlu0 %v188, 15
    %v322 = vpop.permute.xlu0 %321
    %323 = vrot.lane.b32.xlu0 %v192, 15
    %v324 = vpop.permute.xlu0 %323
    %vm325 = vcmp.lt.s32.totalorder %v210, 15
    %v326 = vsel %vm325, %v318, %v322
    %v327 = vsel %vm325, %v320, %v324
    %v328 = vsel %vm325, %v314, %v318
    %v329 = vsel %vm325, %v316, %v320
    %v330 = vsel %vm325, %v310, %v314
    %v331 = vsel %vm325, %v312, %v316
    %v332 = vsel %vm325, %v322, %v310
    %v333 = vsel %vm325, %v324, %v312
    %v334 = vlaneseq
    %v335 = vshrl.u32 %v334, 7
    %v336 = vsub.s32 2, %v335
    %v337 = vrot.slane %v160, %v336
    %v338 = vlaneseq
    %v339 = vshrl.u32 %v338, 7
    %v340 = vsub.s32 2, %v339
    %v341 = vrot.slane %v161, %v340
    %v342 = vlaneseq
    %v343 = vshrl.u32 %v342, 7
    %v344 = vsub.s32 2, %v343
    %v345 = vrot.slane %v162, %v344
    %v346 = vlaneseq
    %v347 = vshrl.u32 %v346, 7
    %v348 = vsub.s32 2, %v347
    %v349 = vrot.slane %v163, %v348
    %v350 = vmul.f32 %v332, %v337
    %v351 = vmul.f32 %v330, %v341
    %v352 = vmul.f32 %v328, %v345
    %v353 = vmul.f32 %v326, %v349
    %v354 = vmul.f32 %v333, %v337
    %v355 = vmul.f32 %v331, %v341
    %v356 = vmul.f32 %v329, %v345
    %v357 = vmul.f32 %v327, %v349
    %v358 = vpack.c.bf16 %v354, %v350
    %v359 = vpack.c.bf16 %v355, %v351
    %v360 = vpack.c.bf16 %v356, %v352
    %v361 = vpack.c.bf16 %v357, %v353
    %362 = vst [vmem:[#allocation3 + $0x40] sm:$0xff] %v358
    %363 = vst [vmem:[#allocation3 + $0x48] sm:$0xff] %v359
    %364 = vst [vmem:[#allocation3 + $0x50] sm:$0xff] %v360
    %365 = vst [vmem:[#allocation3 + $0x58] sm:$0xff] %v361
    %366 = vrot.lane.b32.xlu0 %v185, 1
    %v367 = vpop.permute.xlu0 %366
    %368 = vrot.lane.b32.xlu0 %v189, 1
    %v369 = vpop.permute.xlu0 %368
    %370 = vrot.lane.b32.xlu0 %v186, 1
    %v371 = vpop.permute.xlu0 %370
    %372 = vrot.lane.b32.xlu0 %v190, 1
    %v373 = vpop.permute.xlu0 %372
    %374 = vrot.lane.b32.xlu0 %v187, 1
    %v375 = vpop.permute.xlu0 %374
    %376 = vrot.lane.b32.xlu0 %v191, 1
    %v377 = vpop.permute.xlu0 %376
    %378 = vrot.lane.b32.xlu0 %v188, 1
    %v379 = vpop.permute.xlu0 %378
    %380 = vrot.lane.b32.xlu0 %v192, 1
    %v381 = vpop.permute.xlu0 %380
    %vm382 = vcmp.lt.s32.totalorder %v210, 1
    %v383 = vsel %vm382, %v375, %v379
    %v384 = vsel %vm382, %v377, %v381
    %v385 = vsel %vm382, %v371, %v375
    %v386 = vsel %vm382, %v373, %v377
    %v387 = vsel %vm382, %v367, %v371
    %v388 = vsel %vm382, %v369, %v373
    %v389 = vsel %vm382, %v379, %v367
    %v390 = vsel %vm382, %v381, %v369
    %v391 = vlaneseq
    %v392 = vshrl.u32 %v391, 7
    %v393 = vsub.s32 3, %v392
    %v394 = vrot.slane %v160, %v393
    %v395 = vlaneseq
    %v396 = vshrl.u32 %v395, 7
    %v397 = vsub.s32 3, %v396
    %v398 = vrot.slane %v161, %v397
    %v399 = vlaneseq
    %v400 = vshrl.u32 %v399, 7
    %v401 = vsub.s32 3, %v400
    %v402 = vrot.slane %v162, %v401
    %v403 = vlaneseq
    %v404 = vshrl.u32 %v403, 7
    %v405 = vsub.s32 3, %v404
    %v406 = vrot.slane %v163, %v405
    %v407 = vmul.f32 %v389, %v394
    %v408 = vmul.f32 %v387, %v398
    %v409 = vmul.f32 %v385, %v402
    %v410 = vmul.f32 %v383, %v406
    %v411 = vmul.f32 %v390, %v394
    %v412 = vmul.f32 %v388, %v398
    %v413 = vmul.f32 %v386, %v402
    %v414 = vmul.f32 %v384, %v406
    %v415 = vpack.c.bf16 %v411, %v407
    %v416 = vpack.c.bf16 %v412, %v408
    %v417 = vpack.c.bf16 %v413, %v409
    %v418 = vpack.c.bf16 %v414, %v410
    %419 = vst [vmem:[#allocation3 + $0x60] sm:$0xff] %v415
    %420 = vst [vmem:[#allocation3 + $0x68] sm:$0xff] %v416
    %421 = vst [vmem:[#allocation3 + $0x70] sm:$0xff] %v417
    %422 = vst [vmem:[#allocation3 + $0x78] sm:$0xff] %v418
    %v423 = vpack.c.bf16 %v189, %v185
    %v424 = vpack.c.bf16 %v190, %v186
    %v425 = vpack.c.bf16 %v191, %v187
    %v426 = vpack.c.bf16 %v192, %v188
    %427 = vst [vmem:[#allocation3 + $0x80] sm:$0xff] %v423
    %428 = vst [vmem:[#allocation3 + $0x88] sm:$0xff] %v424
    %429 = vst [vmem:[#allocation3 + $0x90] sm:$0xff] %v425
    %430 = vst [vmem:[#allocation3 + $0x98] sm:$0xff] %v426
    %431 = vrot.lane.b32.xlu0 %v185, 127
    %v432 = vpop.permute.xlu0 %431
    %433 = vrot.lane.b32.xlu0 %v189, 127
    %v434 = vpop.permute.xlu0 %433
    %435 = vrot.lane.b32.xlu0 %v186, 127
    %v436 = vpop.permute.xlu0 %435
    %437 = vrot.lane.b32.xlu0 %v190, 127
    %v438 = vpop.permute.xlu0 %437
    %439 = vrot.lane.b32.xlu0 %v187, 127
    %v440 = vpop.permute.xlu0 %439
    %441 = vrot.lane.b32.xlu0 %v191, 127
    %v442 = vpop.permute.xlu0 %441
    %443 = vrot.lane.b32.xlu0 %v188, 127
    %v444 = vpop.permute.xlu0 %443
    %445 = vrot.lane.b32.xlu0 %v192, 127
    %v446 = vpop.permute.xlu0 %445
    %vm447 = vcmp.lt.s32.totalorder %v210, 127
    %v448 = vsel %vm447, %v440, %v444
    %v449 = vsel %vm447, %v442, %v446
    %v450 = vsel %vm447, %v436, %v440
    %v451 = vsel %vm447, %v438, %v442
    %v452 = vsel %vm447, %v432, %v436
    %v453 = vsel %vm447, %v434, %v438
    %v454 = vsel %vm447, %v444, %v432
    %v455 = vsel %vm447, %v446, %v434
    %v456 = vlaneseq
    %v457 = vshrl.u32 %v456, 7
    %v458 = vsub.s32 5, %v457
    %v459 = vrot.slane %v160, %v458
    %v460 = vlaneseq
    %v461 = vshrl.u32 %v460, 7
    %v462 = vsub.s32 5, %v461
    %v463 = vrot.slane %v161, %v462
    %v464 = vlaneseq
    %v465 = vshrl.u32 %v464, 7
    %v466 = vsub.s32 5, %v465
    %v467 = vrot.slane %v162, %v466
    %v468 = vlaneseq
    %v469 = vshrl.u32 %v468, 7
    %v470 = vsub.s32 5, %v469
    %v471 = vrot.slane %v163, %v470
    %v472 = vmul.f32 %v452, %v459
    %v473 = vmul.f32 %v450, %v463
    %v474 = vmul.f32 %v448, %v467
    %v475 = vmul.f32 %v454, %v471
    %v476 = vmul.f32 %v453, %v459
    %v477 = vmul.f32 %v451, %v463
    %v478 = vmul.f32 %v449, %v467
    %v479 = vmul.f32 %v455, %v471
    %v480 = vpack.c.bf16 %v476, %v472
    %v481 = vpack.c.bf16 %v477, %v473
    %v482 = vpack.c.bf16 %v478, %v474
    %v483 = vpack.c.bf16 %v479, %v475
    %484 = vst [vmem:[#allocation3 + $0xa0] sm:$0xff] %v480
    %485 = vst [vmem:[#allocation3 + $0xa8] sm:$0xff] %v481
    %486 = vst [vmem:[#allocation3 + $0xb0] sm:$0xff] %v482
    %487 = vst [vmem:[#allocation3 + $0xb8] sm:$0xff] %v483
    %488 = vrot.lane.b32.xlu0 %v185, 113
    %v489 = vpop.permute.xlu0 %488
    %490 = vrot.lane.b32.xlu0 %v189, 113
    %v491 = vpop.permute.xlu0 %490
    %492 = vrot.lane.b32.xlu0 %v186, 113
    %v493 = vpop.permute.xlu0 %492
    %494 = vrot.lane.b32.xlu0 %v190, 113
    %v495 = vpop.permute.xlu0 %494
    %496 = vrot.lane.b32.xlu0 %v187, 113
    %v497 = vpop.permute.xlu0 %496
    %498 = vrot.lane.b32.xlu0 %v191, 113
    %v499 = vpop.permute.xlu0 %498
    %500 = vrot.lane.b32.xlu0 %v188, 113
    %v501 = vpop.permute.xlu0 %500
    %502 = vrot.lane.b32.xlu0 %v192, 113
    %v503 = vpop.permute.xlu0 %502
    %vm504 = vcmp.lt.s32.totalorder %v210, 113
    %v505 = vsel %vm504, %v497, %v501
    %v506 = vsel %vm504, %v499, %v503
    %v507 = vsel %vm504, %v493, %v497
    %v508 = vsel %vm504, %v495, %v499
    %v509 = vsel %vm504, %v489, %v493
    %v510 = vsel %vm504, %v491, %v495
    %v511 = vsel %vm504, %v501, %v489
    %v512 = vsel %vm504, %v503, %v491
    %v513 = vlaneseq
    %v514 = vshrl.u32 %v513, 7
    %v515 = vsub.s32 6, %v514
    %v516 = vrot.slane %v160, %v515
    %v517 = vlaneseq
    %v518 = vshrl.u32 %v517, 7
    %v519 = vsub.s32 6, %v518
    %v520 = vrot.slane %v161, %v519
    %v521 = vlaneseq
    %v522 = vshrl.u32 %v521, 7
    %v523 = vsub.s32 6, %v522
    %v524 = vrot.slane %v162, %v523
    %v525 = vlaneseq
    %v526 = vshrl.u32 %v525, 7
    %v527 = vsub.s32 6, %v526
    %v528 = vrot.slane %v163, %v527
    %v529 = vmul.f32 %v509, %v516
    %v530 = vmul.f32 %v507, %v520
    %v531 = vmul.f32 %v505, %v524
    %v532 = vmul.f32 %v511, %v528
    %v533 = vmul.f32 %v510, %v516
    %v534 = vmul.f32 %v508, %v520
    %v535 = vmul.f32 %v506, %v524
    %v536 = vmul.f32 %v512, %v528
    %v537 = vpack.c.bf16 %v533, %v529
    %v538 = vpack.c.bf16 %v534, %v530
    %v539 = vpack.c.bf16 %v535, %v531
    %v540 = vpack.c.bf16 %v536, %v532
    %541 = vst [vmem:[#allocation3 + $0xc0] sm:$0xff] %v537
    %542 = vst [vmem:[#allocation3 + $0xc8] sm:$0xff] %v538
    %543 = vst [vmem:[#allocation3 + $0xd0] sm:$0xff] %v539
    %544 = vst [vmem:[#allocation3 + $0xd8] sm:$0xff] %v540
    %545 = vrot.lane.b32.xlu0 %v185, 112
    %v546 = vpop.permute.xlu0 %545
    %547 = vrot.lane.b32.xlu0 %v189, 112
    %v548 = vpop.permute.xlu0 %547
    %549 = vrot.lane.b32.xlu0 %v186, 112
    %v550 = vpop.permute.xlu0 %549
    %551 = vrot.lane.b32.xlu0 %v190, 112
    %v552 = vpop.permute.xlu0 %551
    %553 = vrot.lane.b32.xlu0 %v187, 112
    %v554 = vpop.permute.xlu0 %553
    %555 = vrot.lane.b32.xlu0 %v191, 112
    %v556 = vpop.permute.xlu0 %555
    %557 = vrot.lane.b32.xlu0 %v188, 112
    %v558 = vpop.permute.xlu0 %557
    %559 = vrot.lane.b32.xlu0 %v192, 112
    %v560 = vpop.permute.xlu0 %559
    %vm561 = vcmp.lt.s32.totalorder %v210, 112
    %v562 = vsel %vm561, %v554, %v558
    %v563 = vsel %vm561, %v556, %v560
    %v564 = vsel %vm561, %v550, %v554
    %v565 = vsel %vm561, %v552, %v556
    %v566 = vsel %vm561, %v546, %v550
    %v567 = vsel %vm561, %v548, %v552
    %v568 = vsel %vm561, %v558, %v546
    %v569 = vsel %vm561, %v560, %v548
    %v570 = vlaneseq
    %v571 = vshrl.u32 %v570, 7
    %v572 = vsub.s32 7, %v571
    %v573 = vrot.slane %v160, %v572
    %v574 = vlaneseq
    %v575 = vshrl.u32 %v574, 7
    %v576 = vsub.s32 7, %v575
    %v577 = vrot.slane %v161, %v576
    %v578 = vlaneseq
    %v579 = vshrl.u32 %v578, 7
    %v580 = vsub.s32 7, %v579
    %v581 = vrot.slane %v162, %v580
    %v582 = vlaneseq
    %v583 = vshrl.u32 %v582, 7
    %v584 = vsub.s32 7, %v583
    %v585 = vrot.slane %v163, %v584
    %v586 = vmul.f32 %v566, %v573
    %v587 = vmul.f32 %v564, %v577
    %v588 = vmul.f32 %v562, %v581
    %v589 = vmul.f32 %v568, %v585
    %v590 = vmul.f32 %v567, %v573
    %v591 = vmul.f32 %v565, %v577
    %v592 = vmul.f32 %v563, %v581
    %v593 = vmul.f32 %v569, %v585
    %v594 = vpack.c.bf16 %v590, %v586
    %v595 = vpack.c.bf16 %v591, %v587
    %v596 = vpack.c.bf16 %v592, %v588
    %v597 = vpack.c.bf16 %v593, %v589
    %598 = vst [vmem:[#allocation3 + $0xe0] sm:$0xff] %v594
    %599 = vst [vmem:[#allocation3 + $0xe8] sm:$0xff] %v595
    %600 = vst [vmem:[#allocation3 + $0xf0] sm:$0xff] %v596
    %601 = vst [vmem:[#allocation3 + $0xf8] sm:$0xff] %v597
    %602 = vrot.lane.b32.xlu0 %v185, 111
    %v603 = vpop.permute.xlu0 %602
    %604 = vrot.lane.b32.xlu0 %v189, 111
    %v605 = vpop.permute.xlu0 %604
    %606 = vrot.lane.b32.xlu0 %v186, 111
    %v607 = vpop.permute.xlu0 %606
    %608 = vrot.lane.b32.xlu0 %v190, 111
    %v609 = vpop.permute.xlu0 %608
    %610 = vrot.lane.b32.xlu0 %v187, 111
    %v611 = vpop.permute.xlu0 %610
    %612 = vrot.lane.b32.xlu0 %v191, 111
    %v613 = vpop.permute.xlu0 %612
    %614 = vrot.lane.b32.xlu0 %v188, 111
    %v615 = vpop.permute.xlu0 %614
    %616 = vrot.lane.b32.xlu0 %v192, 111
    %v617 = vpop.permute.xlu0 %616
    %vm618 = vcmp.lt.s32.totalorder %v210, 111
    %v619 = vsel %vm618, %v611, %v615
    %v620 = vsel %vm618, %v613, %v617
    %v621 = vsel %vm618, %v607, %v611
    %v622 = vsel %vm618, %v609, %v613
    %v623 = vsel %vm618, %v603, %v607
    %v624 = vsel %vm618, %v605, %v609
    %v625 = vsel %vm618, %v615, %v603
    %v626 = vsel %vm618, %v617, %v605
    %v627 = vlaneseq
    %v628 = vshrl.u32 %v627, 7
    %v629 = vsub.s32 0, %v628
    %v630 = vrot.slane %v164, %v629
    %v631 = vlaneseq
    %v632 = vshrl.u32 %v631, 7
    %v633 = vsub.s32 0, %v632
    %v634 = vrot.slane %v165, %v633
    %v635 = vlaneseq
    %v636 = vshrl.u32 %v635, 7
    %v637 = vsub.s32 0, %v636
    %v638 = vrot.slane %v166, %v637
    %v639 = vlaneseq
    %v640 = vshrl.u32 %v639, 7
    %v641 = vsub.s32 0, %v640
    %v642 = vrot.slane %v167, %v641
    %v643 = vmul.f32 %v623, %v630
    %v644 = vmul.f32 %v621, %v634
    %v645 = vmul.f32 %v619, %v638
    %v646 = vmul.f32 %v625, %v642
    %v647 = vmul.f32 %v624, %v630
    %v648 = vmul.f32 %v622, %v634
    %v649 = vmul.f32 %v620, %v638
    %v650 = vmul.f32 %v626, %v642
    %v651 = vpack.c.bf16 %v647, %v643
    %v652 = vpack.c.bf16 %v648, %v644
    %v653 = vpack.c.bf16 %v649, %v645
    %v654 = vpack.c.bf16 %v650, %v646
    %655 = vst [vmem:[#allocation3 + $0x100] sm:$0xff] %v651
    %656 = vst [vmem:[#allocation3 + $0x108] sm:$0xff] %v652
    %657 = vst [vmem:[#allocation3 + $0x110] sm:$0xff] %v653
    %658 = vst [vmem:[#allocation3 + $0x118] sm:$0xff] %v654
    %v659 = vld [vmem:[%s1] sm:$0xff]
    %v660 = vld [vmem:[#allocation3] sm:$0xff]
    %v661 = vld [vmem:[#allocation3 + $0x8] sm:$0xff]
    %v662 = vld [vmem:[#allocation3 + $0x10] sm:$0xff]
    %v663 = vld [vmem:[#allocation3 + $0x18] sm:$0xff]
    %v664 = vld [vmem:[#allocation3 + $0x20] sm:$0xff]
    %v665 = vld [vmem:[#allocation3 + $0x28] sm:$0xff]
    %v666 = vld [vmem:[#allocation3 + $0x30] sm:$0xff]
    %v667 = vld [vmem:[#allocation3 + $0x38] sm:$0xff]
    %v668 = vld [vmem:[#allocation3 + $0x40] sm:$0xff]
    %v669 = vld [vmem:[#allocation3 + $0x48] sm:$0xff]
    %v670 = vld [vmem:[#allocation3 + $0x50] sm:$0xff]
    %v671 = vld [vmem:[#allocation3 + $0x58] sm:$0xff]
    %v672 = vld [vmem:[#allocation3 + $0x60] sm:$0xff]
    %v673 = vld [vmem:[#allocation3 + $0x68] sm:$0xff]
    %v674 = vld [vmem:[#allocation3 + $0x70] sm:$0xff]
    %v675 = vld [vmem:[#allocation3 + $0x78] sm:$0xff]
    %v676 = vld [vmem:[#allocation3 + $0x80] sm:$0xff]
    %v677 = vld [vmem:[#allocation3 + $0x88] sm:$0xff]
    %v678 = vld [vmem:[#allocation3 + $0x90] sm:$0xff]
    %v679 = vld [vmem:[#allocation3 + $0x98] sm:$0xff]
    %v680 = vld [vmem:[#allocation3 + $0xa0] sm:$0xff]
    %v681 = vld [vmem:[#allocation3 + $0xa8] sm:$0xff]
    %v682 = vld [vmem:[#allocation3 + $0xb0] sm:$0xff]
    %v683 = vld [vmem:[#allocation3 + $0xb8] sm:$0xff]
    %v684 = vld [vmem:[#allocation3 + $0xc0] sm:$0xff]
    %v685 = vld [vmem:[#allocation3 + $0xc8] sm:$0xff]
    %v686 = vld [vmem:[#allocation3 + $0xd0] sm:$0xff]
    %v687 = vld [vmem:[#allocation3 + $0xd8] sm:$0xff]
    %v688 = vld [vmem:[#allocation3 + $0xe0] sm:$0xff]
    %v689 = vld [vmem:[#allocation3 + $0xe8] sm:$0xff]
    %v690 = vld [vmem:[#allocation3 + $0xf0] sm:$0xff]
    %v691 = vld [vmem:[#allocation3 + $0xf8] sm:$0xff]
    %v692 = vld [vmem:[#allocation3 + $0x100] sm:$0xff]
    %v693 = vld [vmem:[#allocation3 + $0x108] sm:$0xff]
    %v694 = vld [vmem:[#allocation3 + $0x110] sm:$0xff]
    %v695 = vld [vmem:[#allocation3 + $0x118] sm:$0xff]
    %697 = vset.pattern.permute.xlu0 0
    %698 = vperm.xlu0 %697, %v90
    %v699 = vpop.permute.xlu0 %698
    %v702 = vunpack.c.l.b16 %v659
    %v703 = vunpack.c.h.b16 %v659
    %v704 = vpack.c.b16 %v702, %v702
    %v705 = vpack.c.b16 %v703, %v703
    %vm707 = vcmask 130048
    %v709 = vsel %vm707, %v705, 0
    %711 = vmatprep.subr.bf16.mxu0 %v661
    %712 = vmatpush1.bf16.msra.mxu0 %v660
    %713 = vmatprep.subr.bf16.mxu0 %v665
    %714 = vmatpush1.bf16.msra.mxu0 %v664
    %715 = vmatprep.subr.bf16.mxu0 %v669
    %716 = vmatpush1.bf16.msra.mxu0 %v668
    %717 = vmatprep.subr.bf16.mxu0 %v673
    %718 = vmatpush1.bf16.msra.mxu0 %v672
    %719 = vmatprep.subr.bf16.mxu0 %v677
    %720 = vmatpush1.bf16.msra.mxu0 %v676
    %721 = vmatprep.subr.bf16.mxu0 %v681
    %722 = vmatpush1.bf16.msra.mxu0 %v680
    %723 = vmatprep.subr.bf16.mxu0 %v685
    %724 = vmatpush1.bf16.msra.mxu0 %v684
    %725 = vmatprep.subr.bf16.mxu0 %v689
    %726 = vmatpush1.bf16.msra.mxu0 %v688
    %727 = vmatprep.subr.bf16.mxu0 %v693
    %728 = vmatpush1.bf16.msra.mxu0 %v692
    %729 = vmatprep.subr.bf16.mxu0 0
    %730 = vmatpush1.bf16.msra.mxu0 0
    %731 = vmatprep.subr.bf16.mxu0 0
    %732 = vmatpush1.bf16.msra.mxu0 0
    %733 = vmatprep.subr.bf16.mxu0 0
    %734 = vmatpush1.bf16.msra.mxu0 0
    %735 = vmatprep.subr.bf16.mxu0 0
    %736 = vmatpush1.bf16.msra.mxu0 0
    %737 = vmatprep.subr.bf16.mxu0 0
    %738 = vmatpush1.bf16.msra.mxu0 0
    %739 = vmatprep.subr.bf16.mxu0 0
    %740 = vmatpush1.bf16.msra.mxu0 0
    %741 = vmatprep.subr.bf16.mxu0 0
    %742 = vmatpush1.bf16.msra.mxu0 0
    %743 = vmatprep.mubr.bf16.mxu0 %v709
    %744 = vmatmul.mubr.bf16.gmra.mrb[0].mxu0 %v704
    %v745 = vpop.f32.mrb[0].mxu0
    %v746 = vadd.f32 %v699, %v745
    %v747 = vpop.f32.mrb[0].mxu0
    %v748 = vadd.f32 %v699, %v747
    %v749 = vpop.f32.mrb[0].mxu0
    %v750 = vpop.f32.mrb[0].mxu0
    %751 = vdwg.mxu0
    %752 = vmatprep.subr.bf16.mxu0 %v663
    %753 = vmatpush1.bf16.msra.mxu0 %v662
    %754 = vmatprep.subr.bf16.mxu0 %v667
    %755 = vmatpush1.bf16.msra.mxu0 %v666
    %756 = vmatprep.subr.bf16.mxu0 %v671
    %757 = vmatpush1.bf16.msra.mxu0 %v670
    %758 = vmatprep.subr.bf16.mxu0 %v675
    %759 = vmatpush1.bf16.msra.mxu0 %v674
    %760 = vmatprep.subr.bf16.mxu0 %v679
    %761 = vmatpush1.bf16.msra.mxu0 %v678
    %762 = vmatprep.subr.bf16.mxu0 %v683
    %763 = vmatpush1.bf16.msra.mxu0 %v682
    %764 = vmatprep.subr.bf16.mxu0 %v687
    %765 = vmatpush1.bf16.msra.mxu0 %v686
    %766 = vmatprep.subr.bf16.mxu0 %v691
    %767 = vmatpush1.bf16.msra.mxu0 %v690
    %768 = vmatprep.subr.bf16.mxu0 %v695
    %769 = vmatpush1.bf16.msra.mxu0 %v694
    %770 = vmatprep.subr.bf16.mxu0 0
    %771 = vmatpush1.bf16.msra.mxu0 0
    %772 = vmatprep.subr.bf16.mxu0 0
    %773 = vmatpush1.bf16.msra.mxu0 0
    %774 = vmatprep.subr.bf16.mxu0 0
    %775 = vmatpush1.bf16.msra.mxu0 0
    %776 = vmatprep.subr.bf16.mxu0 0
    %777 = vmatpush1.bf16.msra.mxu0 0
    %778 = vmatprep.subr.bf16.mxu0 0
    %779 = vmatpush1.bf16.msra.mxu0 0
    %780 = vmatprep.subr.bf16.mxu0 0
    %781 = vmatpush1.bf16.msra.mxu0 0
    %782 = vmatprep.subr.bf16.mxu0 0
    %783 = vmatpush1.bf16.msra.mxu0 0
    %784 = vmatprep.mubr.bf16.mxu0 %v709
    %785 = vmatmul.mubr.bf16.gmra.mrb[0].mxu0 %v704
    %v786 = vpop.f32.mrb[0].mxu0
    %v787 = vadd.f32 %v699, %v786
    %v788 = vpop.f32.mrb[0].mxu0
    %v789 = vadd.f32 %v699, %v788
    %v790 = vpop.f32.mrb[0].mxu0
    %v791 = vpop.f32.mrb[0].mxu0
    %792 = vdwg.mxu0
    %793 = vmatprep.subr.mxu0 0.0
    %794 = vmatpush1.msra.mxu0 %v92
    %795 = vmatprep.subr.mxu0 0.0
    %796 = vmatpush1.msra.mxu0 %v93
    %797 = vmatprep.subr.mxu0 0.0
    %798 = vmatpush1.msra.mxu0 %v94
    %799 = vmatprep.subr.mxu0 0.0
    %800 = vmatpush1.msra.mxu0 %v95
    %801 = vmatprep.subr.mxu0 0.0
    %802 = vmatpush1.msra.mxu0 %v96
    %803 = vmatprep.subr.mxu0 0.0
    %804 = vmatpush1.msra.mxu0 %v97
    %805 = vmatprep.subr.mxu0 0.0
    %806 = vmatpush1.msra.mxu0 %v98
    %807 = vmatprep.subr.mxu0 0.0
    %808 = vmatpush1.msra.mxu0 %v99
    %809 = vmatprep.subr.mxu0 0.0
    %810 = vmatpush1.msra.mxu0 %v100
    %811 = vmatprep.subr.mxu0 0.0
    %812 = vmatpush1.msra.mxu0 %v101
    %813 = vmatprep.subr.mxu0 0.0
    %814 = vmatpush1.msra.mxu0 %v102
    %815 = vmatprep.subr.mxu0 0.0
    %816 = vmatpush1.msra.mxu0 %v103
    %817 = vmatprep.subr.mxu0 0.0
    %818 = vmatpush1.msra.mxu0 %v104
    %819 = vmatprep.subr.mxu0 0.0
    %820 = vmatpush1.msra.mxu0 %v105
    %821 = vmatprep.subr.mxu0 0.0
    %822 = vmatpush1.msra.mxu0 %v106
    %823 = vmatprep.subr.mxu0 0.0
    %824 = vmatpush1.msra.mxu0 %v107
    %825 = vmatprep.subr.mxu0 0.0
    %826 = vmatpush1.msra.mxu0 %v108
    %827 = vmatprep.subr.mxu0 0.0
    %828 = vmatpush1.msra.mxu0 %v109
    %829 = vmatprep.subr.mxu0 0.0
    %830 = vmatpush1.msra.mxu0 %v110
    %831 = vmatprep.subr.mxu0 0.0
    %832 = vmatpush1.msra.mxu0 %v111
    %833 = vmatprep.subr.mxu0 0.0
    %834 = vmatpush1.msra.mxu0 %v112
    %835 = vmatprep.subr.mxu0 0.0
    %836 = vmatpush1.msra.mxu0 %v113
    %837 = vmatprep.subr.mxu0 0.0
    %838 = vmatpush1.msra.mxu0 %v114
    %839 = vmatprep.subr.mxu0 0.0
    %840 = vmatpush1.msra.mxu0 %v115
    %841 = vmatprep.subr.mxu0 0.0
    %842 = vmatpush1.msra.mxu0 %v116
    %843 = vmatprep.subr.mxu0 0.0
    %844 = vmatpush1.msra.mxu0 %v117
    %845 = vmatprep.subr.mxu0 0.0
    %846 = vmatpush1.msra.mxu0 %v118
    %847 = vmatprep.subr.mxu0 0.0
    %848 = vmatpush1.msra.mxu0 %v119
    %849 = vmatprep.subr.mxu0 0.0
    %850 = vmatpush1.msra.mxu0 %v120
    %851 = vmatprep.subr.mxu0 0.0
    %852 = vmatpush1.msra.mxu0 %v121
    %853 = vmatprep.subr.mxu0 0.0
    %854 = vmatpush1.msra.mxu0 %v122
    %855 = vmatprep.subr.mxu0 0.0
    %856 = vmatpush1.msra.mxu0 %v123
    %857 = vmatprep.mubr.f32.mxu0 %v748
    %858 = vmatmul.mubr.f32.gmra.mrb[0].mxu0 %v746
    %v859 = vpop.f32.mrb[0].mxu0
    %v860 = vadd.f32 0.0, %v859
    %v861 = vpop.f32.mrb[0].mxu0
    %862 = vdwg.mxu0
    %863 = vmatprep.subr.mxu0 0.0
    %864 = vmatpush1.msra.mxu0 %v124
    %865 = vmatprep.subr.mxu0 0.0
    %866 = vmatpush1.msra.mxu0 %v125
    %867 = vmatprep.subr.mxu0 0.0
    %868 = vmatpush1.msra.mxu0 %v126
    %869 = vmatprep.subr.mxu0 0.0
    %870 = vmatpush1.msra.mxu0 %v127
    %871 = vmatprep.subr.mxu0 0.0
    %872 = vmatpush1.msra.mxu0 %v128
    %873 = vmatprep.subr.mxu0 0.0
    %874 = vmatpush1.msra.mxu0 %v129
    %875 = vmatprep.subr.mxu0 0.0
    %876 = vmatpush1.msra.mxu0 %v130
    %877 = vmatprep.subr.mxu0 0.0
    %878 = vmatpush1.msra.mxu0 %v131
    %879 = vmatprep.subr.mxu0 0.0
    %880 = vmatpush1.msra.mxu0 %v132
    %881 = vmatprep.subr.mxu0 0.0
    %882 = vmatpush1.msra.mxu0 %v133
    %883 = vmatprep.subr.mxu0 0.0
    %884 = vmatpush1.msra.mxu0 %v134
    %885 = vmatprep.subr.mxu0 0.0
    %886 = vmatpush1.msra.mxu0 %v135
    %887 = vmatprep.subr.mxu0 0.0
    %888 = vmatpush1.msra.mxu0 %v136
    %889 = vmatprep.subr.mxu0 0.0
    %890 = vmatpush1.msra.mxu0 %v137
    %891 = vmatprep.subr.mxu0 0.0
    %892 = vmatpush1.msra.mxu0 %v138
    %893 = vmatprep.subr.mxu0 0.0
    %894 = vmatpush1.msra.mxu0 %v139
    %895 = vmatprep.subr.mxu0 0.0
    %896 = vmatpush1.msra.mxu0 %v140
    %897 = vmatprep.subr.mxu0 0.0
    %898 = vmatpush1.msra.mxu0 %v141
    %899 = vmatprep.subr.mxu0 0.0
    %900 = vmatpush1.msra.mxu0 %v142
    %901 = vmatprep.subr.mxu0 0.0
    %902 = vmatpush1.msra.mxu0 %v143
    %903 = vmatprep.subr.mxu0 0.0
    %904 = vmatpush1.msra.mxu0 %v144
    %905 = vmatprep.subr.mxu0 0.0
    %906 = vmatpush1.msra.mxu0 %v145
    %907 = vmatprep.subr.mxu0 0.0
    %908 = vmatpush1.msra.mxu0 %v146
    %909 = vmatprep.subr.mxu0 0.0
    %910 = vmatpush1.msra.mxu0 %v147
    %911 = vmatprep.subr.mxu0 0.0
    %912 = vmatpush1.msra.mxu0 %v148
    %913 = vmatprep.subr.mxu0 0.0
    %914 = vmatpush1.msra.mxu0 %v149
    %915 = vmatprep.subr.mxu0 0.0
    %916 = vmatpush1.msra.mxu0 %v150
    %917 = vmatprep.subr.mxu0 0.0
    %918 = vmatpush1.msra.mxu0 %v151
    %919 = vmatprep.subr.mxu0 0.0
    %920 = vmatpush1.msra.mxu0 %v152
    %921 = vmatprep.subr.mxu0 0.0
    %922 = vmatpush1.msra.mxu0 %v153
    %923 = vmatprep.subr.mxu0 0.0
    %924 = vmatpush1.msra.mxu0 %v154
    %925 = vmatprep.subr.mxu0 0.0
    %926 = vmatpush1.msra.mxu0 %v155
    %927 = vmatprep.mubr.f32.mxu0 %v789
    %928 = vmatmul.mubr.f32.gmra.mrb[0].mxu0 %v787
    %v929 = vpop.f32.mrb[0].mxu0
    %v930 = vadd.f32 %v860, %v929
    %v931 = vpop.f32.mrb[0].mxu0
    %932 = vdwg.mxu0
    %v933 = vmul.f32 %v746, %v746
    %v934 = vmul.f32 %v748, %v748
    %v935 = vmul.f32 %v787, %v787
    %v936 = vmul.f32 %v789, %v789
    %937 = vmatprep.subr.mxu0 0.0
    %938 = vmatpush1.msra.mxu0 %v92
    %939 = vmatprep.subr.mxu0 0.0
    %940 = vmatpush1.msra.mxu0 %v93
    %941 = vmatprep.subr.mxu0 0.0
    %942 = vmatpush1.msra.mxu0 %v94
    %943 = vmatprep.subr.mxu0 0.0
    %944 = vmatpush1.msra.mxu0 %v95
    %945 = vmatprep.subr.mxu0 0.0
    %946 = vmatpush1.msra.mxu0 %v96
    %947 = vmatprep.subr.mxu0 0.0
    %948 = vmatpush1.msra.mxu0 %v97
    %949 = vmatprep.subr.mxu0 0.0
    %950 = vmatpush1.msra.mxu0 %v98
    %951 = vmatprep.subr.mxu0 0.0
    %952 = vmatpush1.msra.mxu0 %v99
    %953 = vmatprep.subr.mxu0 0.0
    %954 = vmatpush1.msra.mxu0 %v100
    %955 = vmatprep.subr.mxu0 0.0
    %956 = vmatpush1.msra.mxu0 %v101
    %957 = vmatprep.subr.mxu0 0.0
    %958 = vmatpush1.msra.mxu0 %v102
    %959 = vmatprep.subr.mxu0 0.0
    %960 = vmatpush1.msra.mxu0 %v103
    %961 = vmatprep.subr.mxu0 0.0
    %962 = vmatpush1.msra.mxu0 %v104
    %963 = vmatprep.subr.mxu0 0.0
    %964 = vmatpush1.msra.mxu0 %v105
    %965 = vmatprep.subr.mxu0 0.0
    %966 = vmatpush1.msra.mxu0 %v106
    %967 = vmatprep.subr.mxu0 0.0
    %968 = vmatpush1.msra.mxu0 %v107
    %969 = vmatprep.subr.mxu0 0.0
    %970 = vmatpush1.msra.mxu0 %v108
    %971 = vmatprep.subr.mxu0 0.0
    %972 = vmatpush1.msra.mxu0 %v109
    %973 = vmatprep.subr.mxu0 0.0
    %974 = vmatpush1.msra.mxu0 %v110
    %975 = vmatprep.subr.mxu0 0.0
    %976 = vmatpush1.msra.mxu0 %v111
    %977 = vmatprep.subr.mxu0 0.0
    %978 = vmatpush1.msra.mxu0 %v112
    %979 = vmatprep.subr.mxu0 0.0
    %980 = vmatpush1.msra.mxu0 %v113
    %981 = vmatprep.subr.mxu0 0.0
    %982 = vmatpush1.msra.mxu0 %v114
    %983 = vmatprep.subr.mxu0 0.0
    %984 = vmatpush1.msra.mxu0 %v115
    %985 = vmatprep.subr.mxu0 0.0
    %986 = vmatpush1.msra.mxu0 %v116
    %987 = vmatprep.subr.mxu0 0.0
    %988 = vmatpush1.msra.mxu0 %v117
    %989 = vmatprep.subr.mxu0 0.0
    %990 = vmatpush1.msra.mxu0 %v118
    %991 = vmatprep.subr.mxu0 0.0
    %992 = vmatpush1.msra.mxu0 %v119
    %993 = vmatprep.subr.mxu0 0.0
    %994 = vmatpush1.msra.mxu0 %v120
    %995 = vmatprep.subr.mxu0 0.0
    %996 = vmatpush1.msra.mxu0 %v121
    %997 = vmatprep.subr.mxu0 0.0
    %998 = vmatpush1.msra.mxu0 %v122
    %999 = vmatprep.subr.mxu0 0.0
    %1000 = vmatpush1.msra.mxu0 %v123
    %1001 = vmatprep.mubr.f32.mxu0 %v934
    %1002 = vmatmul.mubr.f32.gmra.mrb[0].mxu0 %v933
    %v1003 = vpop.f32.mrb[0].mxu0
    %v1004 = vadd.f32 0.0, %v1003
    %v1005 = vpop.f32.mrb[0].mxu0
    %1006 = vdwg.mxu0
    %1007 = vmatprep.subr.mxu0 0.0
    %1008 = vmatpush1.msra.mxu0 %v124
    %1009 = vmatprep.subr.mxu0 0.0
    %1010 = vmatpush1.msra.mxu0 %v125
    %1011 = vmatprep.subr.mxu0 0.0
    %1012 = vmatpush1.msra.mxu0 %v126
    %1013 = vmatprep.subr.mxu0 0.0
    %1014 = vmatpush1.msra.mxu0 %v127
    %1015 = vmatprep.subr.mxu0 0.0
    %1016 = vmatpush1.msra.mxu0 %v128
    %1017 = vmatprep.subr.mxu0 0.0
    %1018 = vmatpush1.msra.mxu0 %v129
    %1019 = vmatprep.subr.mxu0 0.0
    %1020 = vmatpush1.msra.mxu0 %v130
    %1021 = vmatprep.subr.mxu0 0.0
    %1022 = vmatpush1.msra.mxu0 %v131
    %1023 = vmatprep.subr.mxu0 0.0
    %1024 = vmatpush1.msra.mxu0 %v132
    %1025 = vmatprep.subr.mxu0 0.0
    %1026 = vmatpush1.msra.mxu0 %v133
    %1027 = vmatprep.subr.mxu0 0.0
    %1028 = vmatpush1.msra.mxu0 %v134
    %1029 = vmatprep.subr.mxu0 0.0
    %1030 = vmatpush1.msra.mxu0 %v135
    %1031 = vmatprep.subr.mxu0 0.0
    %1032 = vmatpush1.msra.mxu0 %v136
    %1033 = vmatprep.subr.mxu0 0.0
    %1034 = vmatpush1.msra.mxu0 %v137
    %1035 = vmatprep.subr.mxu0 0.0
    %1036 = vmatpush1.msra.mxu0 %v138
    %1037 = vmatprep.subr.mxu0 0.0
    %1038 = vmatpush1.msra.mxu0 %v139
    %1039 = vmatprep.subr.mxu0 0.0
    %1040 = vmatpush1.msra.mxu0 %v140
    %1041 = vmatprep.subr.mxu0 0.0
    %1042 = vmatpush1.msra.mxu0 %v141
    %1043 = vmatprep.subr.mxu0 0.0
    %1044 = vmatpush1.msra.mxu0 %v142
    %1045 = vmatprep.subr.mxu0 0.0
    %1046 = vmatpush1.msra.mxu0 %v143
    %1047 = vmatprep.subr.mxu0 0.0
    %1048 = vmatpush1.msra.mxu0 %v144
    %1049 = vmatprep.subr.mxu0 0.0
    %1050 = vmatpush1.msra.mxu0 %v145
    %1051 = vmatprep.subr.mxu0 0.0
    %1052 = vmatpush1.msra.mxu0 %v146
    %1053 = vmatprep.subr.mxu0 0.0
    %1054 = vmatpush1.msra.mxu0 %v147
    %1055 = vmatprep.subr.mxu0 0.0
    %1056 = vmatpush1.msra.mxu0 %v148
    %1057 = vmatprep.subr.mxu0 0.0
    %1058 = vmatpush1.msra.mxu0 %v149
    %1059 = vmatprep.subr.mxu0 0.0
    %1060 = vmatpush1.msra.mxu0 %v150
    %1061 = vmatprep.subr.mxu0 0.0
    %1062 = vmatpush1.msra.mxu0 %v151
    %1063 = vmatprep.subr.mxu0 0.0
    %1064 = vmatpush1.msra.mxu0 %v152
    %1065 = vmatprep.subr.mxu0 0.0
    %1066 = vmatpush1.msra.mxu0 %v153
    %1067 = vmatprep.subr.mxu0 0.0
    %1068 = vmatpush1.msra.mxu0 %v154
    %1069 = vmatprep.subr.mxu0 0.0
    %1070 = vmatpush1.msra.mxu0 %v155
    %1071 = vmatprep.mubr.f32.mxu0 %v936
    %1072 = vmatmul.mubr.f32.gmra.mrb[0].mxu0 %v935
    %v1073 = vpop.f32.mrb[0].mxu0
    %v1074 = vadd.f32 %v1004, %v1073
    %v1075 = vpop.f32.mrb[0].mxu0
    %1076 = vdwg.mxu0
    %vm1077 = vcmask 64512
    %v1079 = vsel %vm1077, %v91, 0
    %1081 = vmatprep.subr.mxu0 0.0
    %1082 = vmatpush1.msra.mxu0 %v930
    %1083 = vmatprep.subr.mxu0 0.0
    %1084 = vmatpush1.msra.mxu0 0.0
    %1085 = vmatprep.subr.mxu0 0.0
    %1086 = vmatpush1.msra.mxu0 0.0
    %1087 = vmatprep.subr.mxu0 0.0
    %1088 = vmatpush1.msra.mxu0 0.0
    %1089 = vmatprep.subr.mxu0 0.0
    %1090 = vmatpush1.msra.mxu0 0.0
    %1091 = vmatprep.subr.mxu0 0.0
    %1092 = vmatpush1.msra.mxu0 0.0
    %1093 = vmatprep.subr.mxu0 0.0
    %1094 = vmatpush1.msra.mxu0 0.0
    %1095 = vmatprep.subr.mxu0 0.0
    %1096 = vmatpush1.msra.mxu0 0.0
    %1097 = vmatprep.subr.mxu0 0.0
    %1098 = vmatpush1.msra.mxu0 0.0
    %1099 = vmatprep.subr.mxu0 0.0
    %1100 = vmatpush1.msra.mxu0 0.0
    %1101 = vmatprep.subr.mxu0 0.0
    %1102 = vmatpush1.msra.mxu0 0.0
    %1103 = vmatprep.subr.mxu0 0.0
    %1104 = vmatpush1.msra.mxu0 0.0
    %1105 = vmatprep.subr.mxu0 0.0
    %1106 = vmatpush1.msra.mxu0 0.0
    %1107 = vmatprep.subr.mxu0 0.0
    %1108 = vmatpush1.msra.mxu0 0.0
    %1109 = vmatprep.subr.mxu0 0.0
    %1110 = vmatpush1.msra.mxu0 0.0
    %1111 = vmatprep.subr.mxu0 0.0
    %1112 = vmatpush1.msra.mxu0 0.0
    %1113 = vmatprep.subr.mxu0 0.0
    %1114 = vmatpush1.msra.mxu0 0.0
    %1115 = vmatprep.subr.mxu0 0.0
    %1116 = vmatpush1.msra.mxu0 0.0
    %1117 = vmatprep.subr.mxu0 0.0
    %1118 = vmatpush1.msra.mxu0 0.0
    %1119 = vmatprep.subr.mxu0 0.0
    %1120 = vmatpush1.msra.mxu0 0.0
    %1121 = vmatprep.subr.mxu0 0.0
    %1122 = vmatpush1.msra.mxu0 0.0
    %1123 = vmatprep.subr.mxu0 0.0
    %1124 = vmatpush1.msra.mxu0 0.0
    %1125 = vmatprep.subr.mxu0 0.0
    %1126 = vmatpush1.msra.mxu0 0.0
    %1127 = vmatprep.subr.mxu0 0.0
    %1128 = vmatpush1.msra.mxu0 0.0
    %1129 = vmatprep.subr.mxu0 0.0
    %1130 = vmatpush1.msra.mxu0 0.0
    %1131 = vmatprep.subr.mxu0 0.0
    %1132 = vmatpush1.msra.mxu0 0.0
    %1133 = vmatprep.subr.mxu0 0.0
    %1134 = vmatpush1.msra.mxu0 0.0
    %1135 = vmatprep.subr.mxu0 0.0
    %1136 = vmatpush1.msra.mxu0 0.0
    %1137 = vmatprep.subr.mxu0 0.0
    %1138 = vmatpush1.msra.mxu0 0.0
    %1139 = vmatprep.subr.mxu0 0.0
    %1140 = vmatpush1.msra.mxu0 0.0
    %1141 = vmatprep.subr.mxu0 0.0
    %1142 = vmatpush1.msra.mxu0 0.0
    %1143 = vmatprep.subr.mxu0 0.0
    %1144 = vmatpush1.msra.mxu0 0.0
    %1145 = vmatprep.mubr.f32.mxu0 0.0
    %1146 = vmatmul.mubr.f32.gmra.mrb[0].mxu0 %v1079
    %v1147 = vpop.f32.mrb[0].mxu0
    %v1148 = vadd.f32 0.0, %v1147
    %v1149 = vpop.f32.mrb[0].mxu0
    %1150 = vdwg.mxu0
    %1151 = vmatprep.subr.mxu0 0.0
    %1152 = vmatpush1.msra.mxu0 %v1074
    %1153 = vmatprep.subr.mxu0 0.0
    %1154 = vmatpush1.msra.mxu0 0.0
    %1155 = vmatprep.subr.mxu0 0.0
    %1156 = vmatpush1.msra.mxu0 0.0
    %1157 = vmatprep.subr.mxu0 0.0
    %1158 = vmatpush1.msra.mxu0 0.0
    %1159 = vmatprep.subr.mxu0 0.0
    %1160 = vmatpush1.msra.mxu0 0.0
    %1161 = vmatprep.subr.mxu0 0.0
    %1162 = vmatpush1.msra.mxu0 0.0
    %1163 = vmatprep.subr.mxu0 0.0
    %1164 = vmatpush1.msra.mxu0 0.0
    %1165 = vmatprep.subr.mxu0 0.0
    %1166 = vmatpush1.msra.mxu0 0.0
    %1167 = vmatprep.subr.mxu0 0.0
    %1168 = vmatpush1.msra.mxu0 0.0
    %1169 = vmatprep.subr.mxu0 0.0
    %1170 = vmatpush1.msra.mxu0 0.0
    %1171 = vmatprep.subr.mxu0 0.0
    %1172 = vmatpush1.msra.mxu0 0.0
    %1173 = vmatprep.subr.mxu0 0.0
    %1174 = vmatpush1.msra.mxu0 0.0
    %1175 = vmatprep.subr.mxu0 0.0
    %1176 = vmatpush1.msra.mxu0 0.0
    %1177 = vmatprep.subr.mxu0 0.0
    %1178 = vmatpush1.msra.mxu0 0.0
    %1179 = vmatprep.subr.mxu0 0.0
    %1180 = vmatpush1.msra.mxu0 0.0
    %1181 = vmatprep.subr.mxu0 0.0
    %1182 = vmatpush1.msra.mxu0 0.0
    %1183 = vmatprep.subr.mxu0 0.0
    %1184 = vmatpush1.msra.mxu0 0.0
    %1185 = vmatprep.subr.mxu0 0.0
    %1186 = vmatpush1.msra.mxu0 0.0
    %1187 = vmatprep.subr.mxu0 0.0
    %1188 = vmatpush1.msra.mxu0 0.0
    %1189 = vmatprep.subr.mxu0 0.0
    %1190 = vmatpush1.msra.mxu0 0.0
    %1191 = vmatprep.subr.mxu0 0.0
    %1192 = vmatpush1.msra.mxu0 0.0
    %1193 = vmatprep.subr.mxu0 0.0
    %1194 = vmatpush1.msra.mxu0 0.0
    %1195 = vmatprep.subr.mxu0 0.0
    %1196 = vmatpush1.msra.mxu0 0.0
    %1197 = vmatprep.subr.mxu0 0.0
    %1198 = vmatpush1.msra.mxu0 0.0
    %1199 = vmatprep.subr.mxu0 0.0
    %1200 = vmatpush1.msra.mxu0 0.0
    %1201 = vmatprep.subr.mxu0 0.0
    %1202 = vmatpush1.msra.mxu0 0.0
    %1203 = vmatprep.subr.mxu0 0.0
    %1204 = vmatpush1.msra.mxu0 0.0
    %1205 = vmatprep.subr.mxu0 0.0
    %1206 = vmatpush1.msra.mxu0 0.0
    %1207 = vmatprep.subr.mxu0 0.0
    %1208 = vmatpush1.msra.mxu0 0.0
    %1209 = vmatprep.subr.mxu0 0.0
    %1210 = vmatpush1.msra.mxu0 0.0
    %1211 = vmatprep.subr.mxu0 0.0
    %1212 = vmatpush1.msra.mxu0 0.0
    %1213 = vmatprep.subr.mxu0 0.0
    %1214 = vmatpush1.msra.mxu0 0.0
    %1215 = vmatprep.mubr.f32.mxu0 0.0
    %1216 = vmatmul.mubr.f32.gmra.mrb[0].mxu0 %v1079
    %v1217 = vpop.f32.mrb[0].mxu0
    %v1218 = vadd.f32 0.0, %v1217
    %v1219 = vpop.f32.mrb[0].mxu0
    %1220 = vdwg.mxu0
    %v1221 = vmul.f32 %v1148, %v1148
    %v1222 = vsub.f32 %v1218, %v1221
    %v1223 = vadd.f32 %v1222, 1e-05
    %v1224 = vrsqrt.pop %v1223
    %1225 = vset.pattern.permute.xlu0 1
    %1226 = vperm.xlu0 %1225, %v90
    %v1227 = vpop.permute.xlu0 %1226
    %v1229 = vmul.f32 %v1227, %v1224
    %v1230 = vmul.f32 %v1148, %v1229
    %1231 = vset.pattern.permute.xlu0 2
    %1232 = vperm.xlu0 %1231, %v90
    %v1233 = vpop.permute.xlu0 %1232
    %v1235 = vsub.f32 %v1233, %v1230
    %v1237 = vsel %vm1077, %v1229, 0
    %1239 = vmatprep.subr.mxu0 %v157
    %1240 = vmatpush1.msra.mxu0 %v156
    %1241 = vmatprep.subr.mxu0 0.0
    %1242 = vmatpush1.msra.mxu0 0.0
    %1243 = vmatprep.subr.mxu0 0.0
    %1244 = vmatpush1.msra.mxu0 0.0
    %1245 = vmatprep.subr.mxu0 0.0
    %1246 = vmatpush1.msra.mxu0 0.0
    %1247 = vmatprep.subr.mxu0 0.0
    %1248 = vmatpush1.msra.mxu0 0.0
    %1249 = vmatprep.subr.mxu0 0.0
    %1250 = vmatpush1.msra.mxu0 0.0
    %1251 = vmatprep.subr.mxu0 0.0
    %1252 = vmatpush1.msra.mxu0 0.0
    %1253 = vmatprep.subr.mxu0 0.0
    %1254 = vmatpush1.msra.mxu0 0.0
    %1255 = vmatprep.subr.mxu0 0.0
    %1256 = vmatpush1.msra.mxu0 0.0
    %1257 = vmatprep.subr.mxu0 0.0
    %1258 = vmatpush1.msra.mxu0 0.0
    %1259 = vmatprep.subr.mxu0 0.0
    %1260 = vmatpush1.msra.mxu0 0.0
    %1261 = vmatprep.subr.mxu0 0.0
    %1262 = vmatpush1.msra.mxu0 0.0
    %1263 = vmatprep.subr.mxu0 0.0
    %1264 = vmatpush1.msra.mxu0 0.0
    %1265 = vmatprep.subr.mxu0 0.0
    %1266 = vmatpush1.msra.mxu0 0.0
    %1267 = vmatprep.subr.mxu0 0.0
    %1268 = vmatpush1.msra.mxu0 0.0
    %1269 = vmatprep.subr.mxu0 0.0
    %1270 = vmatpush1.msra.mxu0 0.0
    %1271 = vmatprep.subr.mxu0 0.0
    %1272 = vmatpush1.msra.mxu0 0.0
    %1273 = vmatprep.subr.mxu0 0.0
    %1274 = vmatpush1.msra.mxu0 0.0
    %1275 = vmatprep.subr.mxu0 0.0
    %1276 = vmatpush1.msra.mxu0 0.0
    %1277 = vmatprep.subr.mxu0 0.0
    %1278 = vmatpush1.msra.mxu0 0.0
    %1279 = vmatprep.subr.mxu0 0.0
    %1280 = vmatpush1.msra.mxu0 0.0
    %1281 = vmatprep.subr.mxu0 0.0
    %1282 = vmatpush1.msra.mxu0 0.0
    %1283 = vmatprep.subr.mxu0 0.0
    %1284 = vmatpush1.msra.mxu0 0.0
    %1285 = vmatprep.subr.mxu0 0.0
    %1286 = vmatpush1.msra.mxu0 0.0
    %1287 = vmatprep.subr.mxu0 0.0
    %1288 = vmatpush1.msra.mxu0 0.0
    %1289 = vmatprep.subr.mxu0 0.0
    %1290 = vmatpush1.msra.mxu0 0.0
    %1291 = vmatprep.subr.mxu0 0.0
    %1292 = vmatpush1.msra.mxu0 0.0
    %1293 = vmatprep.subr.mxu0 0.0
    %1294 = vmatpush1.msra.mxu0 0.0
    %1295 = vmatprep.subr.mxu0 0.0
    %1296 = vmatpush1.msra.mxu0 0.0
    %1297 = vmatprep.subr.mxu0 0.0
    %1298 = vmatpush1.msra.mxu0 0.0
    %1299 = vmatprep.subr.mxu0 0.0
    %1300 = vmatpush1.msra.mxu0 0.0
    %1301 = vmatprep.subr.mxu0 0.0
    %1302 = vmatpush1.msra.mxu0 0.0
    %1303 = vmatprep.mubr.f32.mxu0 0.0
    %1304 = vmatmul.mubr.f32.gmra.mrb[0].mxu0 %v1237
    %v1305 = vpop.f32.mrb[0].mxu0
    %v1306 = vadd.f32 0.0, %v1305
    %v1307 = vpop.f32.mrb[0].mxu0
    %v1308 = vadd.f32 0.0, %v1307
    %1309 = vdwg.mxu0
    %1310 = vmatprep.subr.mxu0 %v159
    %1311 = vmatpush1.msra.mxu0 %v158
    %1312 = vmatprep.subr.mxu0 0.0
    %1313 = vmatpush1.msra.mxu0 0.0
    %1314 = vmatprep.subr.mxu0 0.0
    %1315 = vmatpush1.msra.mxu0 0.0
    %1316 = vmatprep.subr.mxu0 0.0
    %1317 = vmatpush1.msra.mxu0 0.0
    %1318 = vmatprep.subr.mxu0 0.0
    %1319 = vmatpush1.msra.mxu0 0.0
    %1320 = vmatprep.subr.mxu0 0.0
    %1321 = vmatpush1.msra.mxu0 0.0
    %1322 = vmatprep.subr.mxu0 0.0
    %1323 = vmatpush1.msra.mxu0 0.0
    %1324 = vmatprep.subr.mxu0 0.0
    %1325 = vmatpush1.msra.mxu0 0.0
    %1326 = vmatprep.subr.mxu0 0.0
    %1327 = vmatpush1.msra.mxu0 0.0
    %1328 = vmatprep.subr.mxu0 0.0
    %1329 = vmatpush1.msra.mxu0 0.0
    %1330 = vmatprep.subr.mxu0 0.0
    %1331 = vmatpush1.msra.mxu0 0.0
    %1332 = vmatprep.subr.mxu0 0.0
    %1333 = vmatpush1.msra.mxu0 0.0
    %1334 = vmatprep.subr.mxu0 0.0
    %1335 = vmatpush1.msra.mxu0 0.0
    %1336 = vmatprep.subr.mxu0 0.0
    %1337 = vmatpush1.msra.mxu0 0.0
    %1338 = vmatprep.subr.mxu0 0.0
    %1339 = vmatpush1.msra.mxu0 0.0
    %1340 = vmatprep.subr.mxu0 0.0
    %1341 = vmatpush1.msra.mxu0 0.0
    %1342 = vmatprep.subr.mxu0 0.0
    %1343 = vmatpush1.msra.mxu0 0.0
    %1344 = vmatprep.subr.mxu0 0.0
    %1345 = vmatpush1.msra.mxu0 0.0
    %1346 = vmatprep.subr.mxu0 0.0
    %1347 = vmatpush1.msra.mxu0 0.0
    %1348 = vmatprep.subr.mxu0 0.0
    %1349 = vmatpush1.msra.mxu0 0.0
    %1350 = vmatprep.subr.mxu0 0.0
    %1351 = vmatpush1.msra.mxu0 0.0
    %1352 = vmatprep.subr.mxu0 0.0
    %1353 = vmatpush1.msra.mxu0 0.0
    %1354 = vmatprep.subr.mxu0 0.0
    %1355 = vmatpush1.msra.mxu0 0.0
    %1356 = vmatprep.subr.mxu0 0.0
    %1357 = vmatpush1.msra.mxu0 0.0
    %1358 = vmatprep.subr.mxu0 0.0
    %1359 = vmatpush1.msra.mxu0 0.0
    %1360 = vmatprep.subr.mxu0 0.0
    %1361 = vmatpush1.msra.mxu0 0.0
    %1362 = vmatprep.subr.mxu0 0.0
    %1363 = vmatpush1.msra.mxu0 0.0
    %1364 = vmatprep.subr.mxu0 0.0
    %1365 = vmatpush1.msra.mxu0 0.0
    %1366 = vmatprep.subr.mxu0 0.0
    %1367 = vmatpush1.msra.mxu0 0.0
    %1368 = vmatprep.subr.mxu0 0.0
    %1369 = vmatpush1.msra.mxu0 0.0
    %1370 = vmatprep.subr.mxu0 0.0
    %1371 = vmatpush1.msra.mxu0 0.0
    %1372 = vmatprep.subr.mxu0 0.0
    %1373 = vmatpush1.msra.mxu0 0.0
    %1374 = vmatprep.mubr.f32.mxu0 0.0
    %1375 = vmatmul.mubr.f32.gmra.mrb[0].mxu0 %v1237
    %v1376 = vpop.f32.mrb[0].mxu0
    %v1377 = vadd.f32 0.0, %v1376
    %v1378 = vpop.f32.mrb[0].mxu0
    %v1379 = vadd.f32 0.0, %v1378
    %1380 = vdwg.mxu0
    %v1381 = vmul.f32 %v746, %v1306
    %v1382 = vmul.f32 %v748, %v1308
    %v1383 = vmul.f32 %v787, %v1377
    %v1384 = vmul.f32 %v789, %v1379
    %v1386 = vsel %vm1077, %v1235, 0
    %1388 = vmatprep.subr.mxu0 %v157
    %1389 = vmatpush1.msra.mxu0 %v156
    %1390 = vmatprep.subr.mxu0 0.0
    %1391 = vmatpush1.msra.mxu0 0.0
    %1392 = vmatprep.subr.mxu0 0.0
    %1393 = vmatpush1.msra.mxu0 0.0
    %1394 = vmatprep.subr.mxu0 0.0
    %1395 = vmatpush1.msra.mxu0 0.0
    %1396 = vmatprep.subr.mxu0 0.0
    %1397 = vmatpush1.msra.mxu0 0.0
    %1398 = vmatprep.subr.mxu0 0.0
    %1399 = vmatpush1.msra.mxu0 0.0
    %1400 = vmatprep.subr.mxu0 0.0
    %1401 = vmatpush1.msra.mxu0 0.0
    %1402 = vmatprep.subr.mxu0 0.0
    %1403 = vmatpush1.msra.mxu0 0.0
    %1404 = vmatprep.subr.mxu0 0.0
    %1405 = vmatpush1.msra.mxu0 0.0
    %1406 = vmatprep.subr.mxu0 0.0
    %1407 = vmatpush1.msra.mxu0 0.0
    %1408 = vmatprep.subr.mxu0 0.0
    %1409 = vmatpush1.msra.mxu0 0.0
    %1410 = vmatprep.subr.mxu0 0.0
    %1411 = vmatpush1.msra.mxu0 0.0
    %1412 = vmatprep.subr.mxu0 0.0
    %1413 = vmatpush1.msra.mxu0 0.0
    %1414 = vmatprep.subr.mxu0 0.0
    %1415 = vmatpush1.msra.mxu0 0.0
    %1416 = vmatprep.subr.mxu0 0.0
    %1417 = vmatpush1.msra.mxu0 0.0
    %1418 = vmatprep.subr.mxu0 0.0
    %1419 = vmatpush1.msra.mxu0 0.0
    %1420 = vmatprep.subr.mxu0 0.0
    %1421 = vmatpush1.msra.mxu0 0.0
    %1422 = vmatprep.subr.mxu0 0.0
    %1423 = vmatpush1.msra.mxu0 0.0
    %1424 = vmatprep.subr.mxu0 0.0
    %1425 = vmatpush1.msra.mxu0 0.0
    %1426 = vmatprep.subr.mxu0 0.0
    %1427 = vmatpush1.msra.mxu0 0.0
    %1428 = vmatprep.subr.mxu0 0.0
    %1429 = vmatpush1.msra.mxu0 0.0
    %1430 = vmatprep.subr.mxu0 0.0
    %1431 = vmatpush1.msra.mxu0 0.0
    %1432 = vmatprep.subr.mxu0 0.0
    %1433 = vmatpush1.msra.mxu0 0.0
    %1434 = vmatprep.subr.mxu0 0.0
    %1435 = vmatpush1.msra.mxu0 0.0
    %1436 = vmatprep.subr.mxu0 0.0
    %1437 = vmatpush1.msra.mxu0 0.0
    %1438 = vmatprep.subr.mxu0 0.0
    %1439 = vmatpush1.msra.mxu0 0.0
    %1440 = vmatprep.subr.mxu0 0.0
    %1441 = vmatpush1.msra.mxu0 0.0
    %1442 = vmatprep.subr.mxu0 0.0
    %1443 = vmatpush1.msra.mxu0 0.0
    %1444 = vmatprep.subr.mxu0 0.0
    %1445 = vmatpush1.msra.mxu0 0.0
    %1446 = vmatprep.subr.mxu0 0.0
    %1447 = vmatpush1.msra.mxu0 0.0
    %1448 = vmatprep.subr.mxu0 0.0
    %1449 = vmatpush1.msra.mxu0 0.0
    %1450 = vmatprep.subr.mxu0 0.0
    %1451 = vmatpush1.msra.mxu0 0.0
    %1452 = vmatprep.mubr.f32.mxu0 0.0
    %1453 = vmatmul.mubr.f32.gmra.mrb[0].mxu0 %v1386
    %v1454 = vpop.f32.mrb[0].mxu0
    %v1455 = vadd.f32 0.0, %v1454
    %v1456 = vpop.f32.mrb[0].mxu0
    %v1457 = vadd.f32 0.0, %v1456
    %1458 = vdwg.mxu0
    %1459 = vmatprep.subr.mxu0 %v159
    %1460 = vmatpush1.msra.mxu0 %v158
    %1461 = vmatprep.subr.mxu0 0.0
    %1462 = vmatpush1.msra.mxu0 0.0
    %1463 = vmatprep.subr.mxu0 0.0
    %1464 = vmatpush1.msra.mxu0 0.0
    %1465 = vmatprep.subr.mxu0 0.0
    %1466 = vmatpush1.msra.mxu0 0.0
    %1467 = vmatprep.subr.mxu0 0.0
    %1468 = vmatpush1.msra.mxu0 0.0
    %1469 = vmatprep.subr.mxu0 0.0
    %1470 = vmatpush1.msra.mxu0 0.0
    %1471 = vmatprep.subr.mxu0 0.0
    %1472 = vmatpush1.msra.mxu0 0.0
    %1473 = vmatprep.subr.mxu0 0.0
    %1474 = vmatpush1.msra.mxu0 0.0
    %1475 = vmatprep.subr.mxu0 0.0
    %1476 = vmatpush1.msra.mxu0 0.0
    %1477 = vmatprep.subr.mxu0 0.0
    %1478 = vmatpush1.msra.mxu0 0.0
    %1479 = vmatprep.subr.mxu0 0.0
    %1480 = vmatpush1.msra.mxu0 0.0
    %1481 = vmatprep.subr.mxu0 0.0
    %1482 = vmatpush1.msra.mxu0 0.0
    %1483 = vmatprep.subr.mxu0 0.0
    %1484 = vmatpush1.msra.mxu0 0.0
    %1485 = vmatprep.subr.mxu0 0.0
    %1486 = vmatpush1.msra.mxu0 0.0
    %1487 = vmatprep.subr.mxu0 0.0
    %1488 = vmatpush1.msra.mxu0 0.0
    %1489 = vmatprep.subr.mxu0 0.0
    %1490 = vmatpush1.msra.mxu0 0.0
    %1491 = vmatprep.subr.mxu0 0.0
    %1492 = vmatpush1.msra.mxu0 0.0
    %1493 = vmatprep.subr.mxu0 0.0
    %1494 = vmatpush1.msra.mxu0 0.0
    %1495 = vmatprep.subr.mxu0 0.0
    %1496 = vmatpush1.msra.mxu0 0.0
    %1497 = vmatprep.subr.mxu0 0.0
    %1498 = vmatpush1.msra.mxu0 0.0
    %1499 = vmatprep.subr.mxu0 0.0
    %1500 = vmatpush1.msra.mxu0 0.0
    %1501 = vmatprep.subr.mxu0 0.0
    %1502 = vmatpush1.msra.mxu0 0.0
    %1503 = vmatprep.subr.mxu0 0.0
    %1504 = vmatpush1.msra.mxu0 0.0
    %1505 = vmatprep.subr.mxu0 0.0
    %1506 = vmatpush1.msra.mxu0 0.0
    %1507 = vmatprep.subr.mxu0 0.0
    %1508 = vmatpush1.msra.mxu0 0.0
    %1509 = vmatprep.subr.mxu0 0.0
    %1510 = vmatpush1.msra.mxu0 0.0
    %1511 = vmatprep.subr.mxu0 0.0
    %1512 = vmatpush1.msra.mxu0 0.0
    %1513 = vmatprep.subr.mxu0 0.0
    %1514 = vmatpush1.msra.mxu0 0.0
    %1515 = vmatprep.subr.mxu0 0.0
    %1516 = vmatpush1.msra.mxu0 0.0
    %1517 = vmatprep.subr.mxu0 0.0
    %1518 = vmatpush1.msra.mxu0 0.0
    %1519 = vmatprep.subr.mxu0 0.0
    %1520 = vmatpush1.msra.mxu0 0.0
    %1521 = vmatprep.subr.mxu0 0.0
    %1522 = vmatpush1.msra.mxu0 0.0
    %1523 = vmatprep.mubr.f32.mxu0 0.0
    %1524 = vmatmul.mubr.f32.gmra.mrb[0].mxu0 %v1386
    %v1525 = vpop.f32.mrb[0].mxu0
    %v1526 = vadd.f32 0.0, %v1525
    %v1527 = vpop.f32.mrb[0].mxu0
    %v1528 = vadd.f32 0.0, %v1527
    %1529 = vdwg.mxu0
    %v1530 = vadd.f32 %v1381, %v1455
    %v1531 = vadd.f32 %v1382, %v1457
    %v1532 = vadd.f32 %v1383, %v1526
    %v1533 = vadd.f32 %v1384, %v1528
    %v1534 = vmul.f32 %v1530, 0.5
    %v1535 = vmul.f32 %v1531, 0.5
    %v1536 = vmul.f32 %v1532, 0.5
    %v1537 = vmul.f32 %v1533, 0.5
    %v1538 = vmul.f32 %v1530, 0.044715
    %v1539 = vmul.f32 %v1531, 0.044715
    %v1540 = vmul.f32 %v1532, 0.044715
    %v1541 = vmul.f32 %v1533, 0.044715
    %v1542 = vmul.f32 %v1538, %v1530
    %v1543 = vmul.f32 %v1539, %v1531
    %v1544 = vmul.f32 %v1540, %v1532
    %v1545 = vmul.f32 %v1541, %v1533
    %v1546 = vmul.f32 %v1542, %v1530
    %v1547 = vmul.f32 %v1543, %v1531
    %v1548 = vmul.f32 %v1544, %v1532
    %v1549 = vmul.f32 %v1545, %v1533
    %v1550 = vadd.f32 %v1530, %v1546
    %v1551 = vadd.f32 %v1531, %v1547
    %v1552 = vadd.f32 %v1532, %v1548
    %v1553 = vadd.f32 %v1533, %v1549
    %v1554 = vmul.f32 %v1550, 0.7978846
    %v1555 = vmul.f32 %v1551, 0.7978846
    %v1556 = vmul.f32 %v1552, 0.7978846
    %v1557 = vmul.f32 %v1553, 0.7978846
    %v1558 = vtanh.pop %v1554
    %v1559 = vtanh.pop %v1555
    %v1560 = vtanh.pop %v1556
    %v1561 = vtanh.pop %v1557
    %v1562 = vadd.f32 %v1558, 1.0
    %v1563 = vadd.f32 %v1559, 1.0
    %v1564 = vadd.f32 %v1560, 1.0
    %v1565 = vadd.f32 %v1561, 1.0
    %v1566 = vmul.f32 %v1534, %v1562
    %v1567 = vmul.f32 %v1535, %v1563
    %v1568 = vmul.f32 %v1536, %v1564
    %v1569 = vmul.f32 %v1537, %v1565
    %v1570 = vld [vmem:[%s11] sm:$0xff]
    %v1571 = vld [vmem:[%s11 + $0x8] sm:$0xff]
    %v1572 = vld [vmem:[%s11 + $0x10] sm:$0xff]
    %v1573 = vld [vmem:[%s11 + $0x18] sm:$0xff]
    %v1574 = vld [vmem:[%s11 + $0x20] sm:$0xff]
    %v1575 = vld [vmem:[%s11 + $0x28] sm:$0xff]
    %v1576 = vld [vmem:[%s11 + $0x30] sm:$0xff]
    %v1577 = vld [vmem:[%s11 + $0x38] sm:$0xff]
    %v1578 = vld [vmem:[%s11 + $0x40] sm:$0xff]
    %v1579 = vld [vmem:[%s11 + $0x48] sm:$0xff]
    %v1580 = vld [vmem:[%s11 + $0x50] sm:$0xff]
    %v1581 = vld [vmem:[%s11 + $0x58] sm:$0xff]
    %v1582 = vld [vmem:[%s11 + $0x60] sm:$0xff]
    %v1583 = vld [vmem:[%s11 + $0x68] sm:$0xff]
    %v1584 = vld [vmem:[%s11 + $0x70] sm:$0xff]
    %v1585 = vld [vmem:[%s11 + $0x78] sm:$0xff]
    %v1586 = vld [vmem:[%s11 + $0x80] sm:$0xff]
    %v1587 = vld [vmem:[%s11 + $0x88] sm:$0xff]
    %v1588 = vld [vmem:[%s11 + $0x90] sm:$0xff]
    %v1589 = vld [vmem:[%s11 + $0x98] sm:$0xff]
    %v1590 = vld [vmem:[%s11 + $0xa0] sm:$0xff]
    %v1591 = vld [vmem:[%s11 + $0xa8] sm:$0xff]
    %v1592 = vld [vmem:[%s11 + $0xb0] sm:$0xff]
    %v1593 = vld [vmem:[%s11 + $0xb8] sm:$0xff]
    %v1594 = vld [vmem:[%s11 + $0xc0] sm:$0xff]
    %v1595 = vld [vmem:[%s11 + $0xc8] sm:$0xff]
    %v1596 = vld [vmem:[%s11 + $0xd0] sm:$0xff]
    %v1597 = vld [vmem:[%s11 + $0xd8] sm:$0xff]
    %v1598 = vld [vmem:[%s11 + $0xe0] sm:$0xff]
    %v1599 = vld [vmem:[%s11 + $0xe8] sm:$0xff]
    %v1600 = vld [vmem:[%s11 + $0xf0] sm:$0xff]
    %v1601 = vld [vmem:[%s11 + $0xf8] sm:$0xff]
    %v1602 = vld [vmem:[%s11 + $0x100] sm:$0xff]
    %v1603 = vld [vmem:[%s11 + $0x108] sm:$0xff]
    %v1604 = vld [vmem:[%s11 + $0x110] sm:$0xff]
    %v1605 = vld [vmem:[%s11 + $0x118] sm:$0xff]
    %v1606 = vld [vmem:[%s11 + $0x120] sm:$0xff]
    %v1607 = vld [vmem:[%s11 + $0x128] sm:$0xff]
    %v1608 = vld [vmem:[%s11 + $0x130] sm:$0xff]
    %v1609 = vld [vmem:[%s11 + $0x138] sm:$0xff]
    %v1610 = vld [vmem:[%s11 + $0x140] sm:$0xff]
    %v1611 = vld [vmem:[%s11 + $0x148] sm:$0xff]
    %v1612 = vld [vmem:[%s11 + $0x150] sm:$0xff]
    %v1613 = vld [vmem:[%s11 + $0x158] sm:$0xff]
    %v1614 = vld [vmem:[%s11 + $0x160] sm:$0xff]
    %v1615 = vld [vmem:[%s11 + $0x168] sm:$0xff]
    %v1616 = vld [vmem:[%s11 + $0x170] sm:$0xff]
    %v1617 = vld [vmem:[%s11 + $0x178] sm:$0xff]
    %v1618 = vld [vmem:[%s11 + $0x180] sm:$0xff]
    %v1619 = vld [vmem:[%s11 + $0x188] sm:$0xff]
    %v1620 = vld [vmem:[%s11 + $0x190] sm:$0xff]
    %v1621 = vld [vmem:[%s11 + $0x198] sm:$0xff]
    %v1622 = vld [vmem:[%s11 + $0x1a0] sm:$0xff]
    %v1623 = vld [vmem:[%s11 + $0x1a8] sm:$0xff]
    %v1624 = vld [vmem:[%s11 + $0x1b0] sm:$0xff]
    %v1625 = vld [vmem:[%s11 + $0x1b8] sm:$0xff]
    %v1626 = vld [vmem:[%s11 + $0x1c0] sm:$0xff]
    %v1627 = vld [vmem:[%s11 + $0x1c8] sm:$0xff]
    %v1628 = vld [vmem:[%s11 + $0x1d0] sm:$0xff]
    %v1629 = vld [vmem:[%s11 + $0x1d8] sm:$0xff]
    %v1630 = vld [vmem:[%s11 + $0x1e0] sm:$0xff]
    %v1631 = vld [vmem:[%s11 + $0x1e8] sm:$0xff]
    %v1632 = vld [vmem:[%s11 + $0x1f0] sm:$0xff]
    %v1633 = vld [vmem:[%s11 + $0x1f8] sm:$0xff]
    %1634 = vmatprep.subr.mxu0 0.0
    %1635 = vmatpush1.msra.mxu0 %v1570
    %1636 = vmatprep.subr.mxu0 0.0
    %1637 = vmatpush1.msra.mxu0 %v1571
    %1638 = vmatprep.subr.mxu0 0.0
    %1639 = vmatpush1.msra.mxu0 %v1572
    %1640 = vmatprep.subr.mxu0 0.0
    %1641 = vmatpush1.msra.mxu0 %v1573
    %1642 = vmatprep.subr.mxu0 0.0
    %1643 = vmatpush1.msra.mxu0 %v1574
    %1644 = vmatprep.subr.mxu0 0.0
    %1645 = vmatpush1.msra.mxu0 %v1575
    %1646 = vmatprep.subr.mxu0 0.0
    %1647 = vmatpush1.msra.mxu0 %v1576
    %1648 = vmatprep.subr.mxu0 0.0
    %1649 = vmatpush1.msra.mxu0 %v1577
    %1650 = vmatprep.subr.mxu0 0.0
    %1651 = vmatpush1.msra.mxu0 %v1578
    %1652 = vmatprep.subr.mxu0 0.0
    %1653 = vmatpush1.msra.mxu0 %v1579
    %1654 = vmatprep.subr.mxu0 0.0
    %1655 = vmatpush1.msra.mxu0 %v1580
    %1656 = vmatprep.subr.mxu0 0.0
    %1657 = vmatpush1.msra.mxu0 %v1581
    %1658 = vmatprep.subr.mxu0 0.0
    %1659 = vmatpush1.msra.mxu0 %v1582
    %1660 = vmatprep.subr.mxu0 0.0
    %1661 = vmatpush1.msra.mxu0 %v1583
    %1662 = vmatprep.subr.mxu0 0.0
    %1663 = vmatpush1.msra.mxu0 %v1584
    %1664 = vmatprep.subr.mxu0 0.0
    %1665 = vmatpush1.msra.mxu0 %v1585
    %1666 = vmatprep.subr.mxu0 0.0
    %1667 = vmatpush1.msra.mxu0 %v1586
    %1668 = vmatprep.subr.mxu0 0.0
    %1669 = vmatpush1.msra.mxu0 %v1587
    %1670 = vmatprep.subr.mxu0 0.0
    %1671 = vmatpush1.msra.mxu0 %v1588
    %1672 = vmatprep.subr.mxu0 0.0
    %1673 = vmatpush1.msra.mxu0 %v1589
    %1674 = vmatprep.subr.mxu0 0.0
    %1675 = vmatpush1.msra.mxu0 %v1590
    %1676 = vmatprep.subr.mxu0 0.0
    %1677 = vmatpush1.msra.mxu0 %v1591
    %1678 = vmatprep.subr.mxu0 0.0
    %1679 = vmatpush1.msra.mxu0 %v1592
    %1680 = vmatprep.subr.mxu0 0.0
    %1681 = vmatpush1.msra.mxu0 %v1593
    %1682 = vmatprep.subr.mxu0 0.0
    %1683 = vmatpush1.msra.mxu0 %v1594
    %1684 = vmatprep.subr.mxu0 0.0
    %1685 = vmatpush1.msra.mxu0 %v1595
    %1686 = vmatprep.subr.mxu0 0.0
    %1687 = vmatpush1.msra.mxu0 %v1596
    %1688 = vmatprep.subr.mxu0 0.0
    %1689 = vmatpush1.msra.mxu0 %v1597
    %1690 = vmatprep.subr.mxu0 0.0
    %1691 = vmatpush1.msra.mxu0 %v1598
    %1692 = vmatprep.subr.mxu0 0.0
    %1693 = vmatpush1.msra.mxu0 %v1599
    %1694 = vmatprep.subr.mxu0 0.0
    %1695 = vmatpush1.msra.mxu0 %v1600
    %1696 = vmatprep.subr.mxu0 0.0
    %1697 = vmatpush1.msra.mxu0 %v1601
    %1698 = vmatprep.mubr.f32.mxu0 %v1567
    %1699 = vmatmul.mubr.f32.gmra.mrb[0].mxu0 %v1566
    %v1700 = vpop.f32.mrb[0].mxu0
    %v1701 = vadd.f32 0.0, %v1700
    %v1702 = vpop.f32.mrb[0].mxu0
    %1703 = vdwg.mxu0
    %1704 = vmatprep.subr.mxu0 0.0
    %1705 = vmatpush1.msra.mxu0 %v1602
    %1706 = vmatprep.subr.mxu0 0.0
    %1707 = vmatpush1.msra.mxu0 %v1603
    %1708 = vmatprep.subr.mxu0 0.0
    %1709 = vmatpush1.msra.mxu0 %v1604
    %1710 = vmatprep.subr.mxu0 0.0
    %1711 = vmatpush1.msra.mxu0 %v1605
    %1712 = vmatprep.subr.mxu0 0.0
    %1713 = vmatpush1.msra.mxu0 %v1606
    %1714 = vmatprep.subr.mxu0 0.0
    %1715 = vmatpush1.msra.mxu0 %v1607
    %1716 = vmatprep.subr.mxu0 0.0
    %1717 = vmatpush1.msra.mxu0 %v1608
    %1718 = vmatprep.subr.mxu0 0.0
    %1719 = vmatpush1.msra.mxu0 %v1609
    %1720 = vmatprep.subr.mxu0 0.0
    %1721 = vmatpush1.msra.mxu0 %v1610
    %1722 = vmatprep.subr.mxu0 0.0
    %1723 = vmatpush1.msra.mxu0 %v1611
    %1724 = vmatprep.subr.mxu0 0.0
    %1725 = vmatpush1.msra.mxu0 %v1612
    %1726 = vmatprep.subr.mxu0 0.0
    %1727 = vmatpush1.msra.mxu0 %v1613
    %1728 = vmatprep.subr.mxu0 0.0
    %1729 = vmatpush1.msra.mxu0 %v1614
    %1730 = vmatprep.subr.mxu0 0.0
    %1731 = vmatpush1.msra.mxu0 %v1615
    %1732 = vmatprep.subr.mxu0 0.0
    %1733 = vmatpush1.msra.mxu0 %v1616
    %1734 = vmatprep.subr.mxu0 0.0
    %1735 = vmatpush1.msra.mxu0 %v1617
    %1736 = vmatprep.subr.mxu0 0.0
    %1737 = vmatpush1.msra.mxu0 %v1618
    %1738 = vmatprep.subr.mxu0 0.0
    %1739 = vmatpush1.msra.mxu0 %v1619
    %1740 = vmatprep.subr.mxu0 0.0
    %1741 = vmatpush1.msra.mxu0 %v1620
    %1742 = vmatprep.subr.mxu0 0.0
    %1743 = vmatpush1.msra.mxu0 %v1621
    %1744 = vmatprep.subr.mxu0 0.0
    %1745 = vmatpush1.msra.mxu0 %v1622
    %1746 = vmatprep.subr.mxu0 0.0
    %1747 = vmatpush1.msra.mxu0 %v1623
    %1748 = vmatprep.subr.mxu0 0.0
    %1749 = vmatpush1.msra.mxu0 %v1624
    %1750 = vmatprep.subr.mxu0 0.0
    %1751 = vmatpush1.msra.mxu0 %v1625
    %1752 = vmatprep.subr.mxu0 0.0
    %1753 = vmatpush1.msra.mxu0 %v1626
    %1754 = vmatprep.subr.mxu0 0.0
    %1755 = vmatpush1.msra.mxu0 %v1627
    %1756 = vmatprep.subr.mxu0 0.0
    %1757 = vmatpush1.msra.mxu0 %v1628
    %1758 = vmatprep.subr.mxu0 0.0
    %1759 = vmatpush1.msra.mxu0 %v1629
    %1760 = vmatprep.subr.mxu0 0.0
    %1761 = vmatpush1.msra.mxu0 %v1630
    %1762 = vmatprep.subr.mxu0 0.0
    %1763 = vmatpush1.msra.mxu0 %v1631
    %1764 = vmatprep.subr.mxu0 0.0
    %1765 = vmatpush1.msra.mxu0 %v1632
    %1766 = vmatprep.subr.mxu0 0.0
    %1767 = vmatpush1.msra.mxu0 %v1633
    %1768 = vmatprep.mubr.f32.mxu0 %v1569
    %1769 = vmatmul.mubr.f32.gmra.mrb[0].mxu0 %v1568
    %v1770 = vpop.f32.mrb[0].mxu0
    %v1771 = vadd.f32 %v1701, %v1770
    %v1772 = vpop.f32.mrb[0].mxu0
    %1773 = vdwg.mxu0
    %v1774 = vld [vmem:[%s3] sm:$0xff]
    %v1775 = vld [vmem:[%s4] sm:$0xff]
    %1777 = vset.pattern.permute.xlu0 0
    %1778 = vperm.xlu0 %1777, %v1775
    %v1779 = vpop.permute.xlu0 %1778
    %v1782 = vsel %vm1077, %v1774, 0
    %1784 = vmatprep.subr.mxu0 0.0
    %1785 = vmatpush1.msra.mxu0 %v1771
    %1786 = vmatprep.subr.mxu0 0.0
    %1787 = vmatpush1.msra.mxu0 0.0
    %1788 = vmatprep.subr.mxu0 0.0
    %1789 = vmatpush1.msra.mxu0 0.0
    %1790 = vmatprep.subr.mxu0 0.0
    %1791 = vmatpush1.msra.mxu0 0.0
    %1792 = vmatprep.subr.mxu0 0.0
    %1793 = vmatpush1.msra.mxu0 0.0
    %1794 = vmatprep.subr.mxu0 0.0
    %1795 = vmatpush1.msra.mxu0 0.0
    %1796 = vmatprep.subr.mxu0 0.0
    %1797 = vmatpush1.msra.mxu0 0.0
    %1798 = vmatprep.subr.mxu0 0.0
    %1799 = vmatpush1.msra.mxu0 0.0
    %1800 = vmatprep.subr.mxu0 0.0
    %1801 = vmatpush1.msra.mxu0 0.0
    %1802 = vmatprep.subr.mxu0 0.0
    %1803 = vmatpush1.msra.mxu0 0.0
    %1804 = vmatprep.subr.mxu0 0.0
    %1805 = vmatpush1.msra.mxu0 0.0
    %1806 = vmatprep.subr.mxu0 0.0
    %1807 = vmatpush1.msra.mxu0 0.0
    %1808 = vmatprep.subr.mxu0 0.0
    %1809 = vmatpush1.msra.mxu0 0.0
    %1810 = vmatprep.subr.mxu0 0.0
    %1811 = vmatpush1.msra.mxu0 0.0
    %1812 = vmatprep.subr.mxu0 0.0
    %1813 = vmatpush1.msra.mxu0 0.0
    %1814 = vmatprep.subr.mxu0 0.0
    %1815 = vmatpush1.msra.mxu0 0.0
    %1816 = vmatprep.subr.mxu0 0.0
    %1817 = vmatpush1.msra.mxu0 0.0
    %1818 = vmatprep.subr.mxu0 0.0
    %1819 = vmatpush1.msra.mxu0 0.0
    %1820 = vmatprep.subr.mxu0 0.0
    %1821 = vmatpush1.msra.mxu0 0.0
    %1822 = vmatprep.subr.mxu0 0.0
    %1823 = vmatpush1.msra.mxu0 0.0
    %1824 = vmatprep.subr.mxu0 0.0
    %1825 = vmatpush1.msra.mxu0 0.0
    %1826 = vmatprep.subr.mxu0 0.0
    %1827 = vmatpush1.msra.mxu0 0.0
    %1828 = vmatprep.subr.mxu0 0.0
    %1829 = vmatpush1.msra.mxu0 0.0
    %1830 = vmatprep.subr.mxu0 0.0
    %1831 = vmatpush1.msra.mxu0 0.0
    %1832 = vmatprep.subr.mxu0 0.0
    %1833 = vmatpush1.msra.mxu0 0.0
    %1834 = vmatprep.subr.mxu0 0.0
    %1835 = vmatpush1.msra.mxu0 0.0
    %1836 = vmatprep.subr.mxu0 0.0
    %1837 = vmatpush1.msra.mxu0 0.0
    %1838 = vmatprep.subr.mxu0 0.0
    %1839 = vmatpush1.msra.mxu0 0.0
    %1840 = vmatprep.subr.mxu0 0.0
    %1841 = vmatpush1.msra.mxu0 0.0
    %1842 = vmatprep.subr.mxu0 0.0
    %1843 = vmatpush1.msra.mxu0 0.0
    %1844 = vmatprep.subr.mxu0 0.0
    %1845 = vmatpush1.msra.mxu0 0.0
    %1846 = vmatprep.subr.mxu0 0.0
    %1847 = vmatpush1.msra.mxu0 0.0
    %1848 = vmatprep.mubr.f32.mxu0 0.0
    %1849 = vmatmul.mubr.f32.gmra.mrb[0].mxu0 %v1782
    %v1850 = vpop.f32.mrb[0].mxu0
    %v1851 = vadd.f32 %v1779, %v1850
    %v1852 = vpop.f32.mrb[0].mxu0
    %1853 = vdwg.mxu0
    %v1854 = vadd.f32 %v1851, 3.0
    %v1855 = vmax.f32 %v1854, 0.0
    %v1856 = vmin.f32 %v1855, 6.0
    %v1857 = vmul.f32 %v1851, %v1856
    %v1858 = vmul.f32 %v1857, 0.16666667
    %v1859 = vld [vmem:[%s5] sm:$0xff]
    %v1860 = vld [vmem:[%s5 + $0x8] sm:$0xff]
    %v1862 = vsel %vm1077, %v1859, 0
    %v1865 = vsel %vm1077, %v1860, 0
    %1867 = vmatprep.subr.mxu0 0.0
    %1868 = vmatpush1.msra.mxu0 %v1858
    %1869 = vmatprep.subr.mxu0 0.0
    %1870 = vmatpush1.msra.mxu0 0.0
    %1871 = vmatprep.subr.mxu0 0.0
    %1872 = vmatpush1.msra.mxu0 0.0
    %1873 = vmatprep.subr.mxu0 0.0
    %1874 = vmatpush1.msra.mxu0 0.0
    %1875 = vmatprep.subr.mxu0 0.0
    %1876 = vmatpush1.msra.mxu0 0.0
    %1877 = vmatprep.subr.mxu0 0.0
    %1878 = vmatpush1.msra.mxu0 0.0
    %1879 = vmatprep.subr.mxu0 0.0
    %1880 = vmatpush1.msra.mxu0 0.0
    %1881 = vmatprep.subr.mxu0 0.0
    %1882 = vmatpush1.msra.mxu0 0.0
    %1883 = vmatprep.subr.mxu0 0.0
    %1884 = vmatpush1.msra.mxu0 0.0
    %1885 = vmatprep.subr.mxu0 0.0
    %1886 = vmatpush1.msra.mxu0 0.0
    %1887 = vmatprep.subr.mxu0 0.0
    %1888 = vmatpush1.msra.mxu0 0.0
    %1889 = vmatprep.subr.mxu0 0.0
    %1890 = vmatpush1.msra.mxu0 0.0
    %1891 = vmatprep.subr.mxu0 0.0
    %1892 = vmatpush1.msra.mxu0 0.0
    %1893 = vmatprep.subr.mxu0 0.0
    %1894 = vmatpush1.msra.mxu0 0.0
    %1895 = vmatprep.subr.mxu0 0.0
    %1896 = vmatpush1.msra.mxu0 0.0
    %1897 = vmatprep.subr.mxu0 0.0
    %1898 = vmatpush1.msra.mxu0 0.0
    %1899 = vmatprep.subr.mxu0 0.0
    %1900 = vmatpush1.msra.mxu0 0.0
    %1901 = vmatprep.subr.mxu0 0.0
    %1902 = vmatpush1.msra.mxu0 0.0
    %1903 = vmatprep.subr.mxu0 0.0
    %1904 = vmatpush1.msra.mxu0 0.0
    %1905 = vmatprep.subr.mxu0 0.0
    %1906 = vmatpush1.msra.mxu0 0.0
    %1907 = vmatprep.subr.mxu0 0.0
    %1908 = vmatpush1.msra.mxu0 0.0
    %1909 = vmatprep.subr.mxu0 0.0
    %1910 = vmatpush1.msra.mxu0 0.0
    %1911 = vmatprep.subr.mxu0 0.0
    %1912 = vmatpush1.msra.mxu0 0.0
    %1913 = vmatprep.subr.mxu0 0.0
    %1914 = vmatpush1.msra.mxu0 0.0
    %1915 = vmatprep.subr.mxu0 0.0
    %1916 = vmatpush1.msra.mxu0 0.0
    %1917 = vmatprep.subr.mxu0 0.0
    %1918 = vmatpush1.msra.mxu0 0.0
    %1919 = vmatprep.subr.mxu0 0.0
    %1920 = vmatpush1.msra.mxu0 0.0
    %1921 = vmatprep.subr.mxu0 0.0
    %1922 = vmatpush1.msra.mxu0 0.0
    %1923 = vmatprep.subr.mxu0 0.0
    %1924 = vmatpush1.msra.mxu0 0.0
    %1925 = vmatprep.subr.mxu0 0.0
    %1926 = vmatpush1.msra.mxu0 0.0
    %1927 = vmatprep.subr.mxu0 0.0
    %1928 = vmatpush1.msra.mxu0 0.0
    %1929 = vmatprep.subr.mxu0 0.0
    %1930 = vmatpush1.msra.mxu0 0.0
    %1931 = vmatprep.mubr.f32.mxu0 0.0
    %1932 = vmatmul.mubr.f32.gmra.mrb[0].mxu0 %v1862
    %v1933 = vpop.f32.mrb[0].mxu0
    %v1934 = vadd.f32 0.0, %v1933
    %v1935 = vpop.f32.mrb[0].mxu0
    %1936 = vmatprep.mubr.f32.mxu0 0.0
    %1937 = vmatmul.mubr.f32.gmra.mrb[0].mxu0 %v1865
    %v1938 = vpop.f32.mrb[0].mxu0
    %v1939 = vadd.f32 0.0, %v1938
    %v1940 = vpop.f32.mrb[0].mxu0
    %1941 = vdwg.mxu0
    %1942 = vset.pattern.permute.xlu0 5
    %1943 = vperm.xlu0 %1942, %v90
    %v1944 = vpop.permute.xlu0 %1943
    %v1946 = vadd.f32 %v1934, %v1944
    %v1947 = vxor.u32 %v1946, 2147483648
    %v1948 = vmul.f32 %v1947, 1.442695
    %v1949 = vpow.pop %v1948
    %v1950 = vadd.f32 %v1949, 1.0
    %v1951 = vrcp.pop %v1950
    %v1952 = vmul.f32 1.0, %v1951
    %1953 = vset.pattern.permute.xlu0 6
    %1954 = vperm.xlu0 %1953, %v90
    %v1955 = vpop.permute.xlu0 %1954
    %v1957 = vadd.f32 %v1939, %v1955
    %v1958 = vxor.u32 %v1957, 2147483648
    %v1959 = vmul.f32 %v1958, 1.442695
    %v1960 = vpow.pop %v1959
    %v1961 = vadd.f32 %v1960, 1.0
    %v1962 = vrcp.pop %v1961
    %v1963 = vmul.f32 1.0, %v1962
    %v1964 = vld [vmem:[#allocation6] sm:$0xff]
    %v1965 = vld [vmem:[#allocation6 + $0x8] sm:$0xff]
    %v1966 = vld [vmem:[#allocation6 + $0x10] sm:$0xff]
    %v1967 = vld [vmem:[#allocation6 + $0x18] sm:$0xff]
    %v1968 = vld [vmem:[#allocation6 + $0x20] sm:$0xff]
    %v1969 = vld [vmem:[#allocation6 + $0x28] sm:$0xff]
    %v1970 = vld [vmem:[#allocation6 + $0x30] sm:$0xff]
    %v1971 = vld [vmem:[#allocation6 + $0x38] sm:$0xff]
    %v1972 = vld [vmem:[#allocation6 + $0x40] sm:$0xff]
    %v1973 = vld [vmem:[#allocation6 + $0x48] sm:$0xff]
    %v1974 = vld [vmem:[#allocation6 + $0x50] sm:$0xff]
    %v1975 = vld [vmem:[#allocation6 + $0x58] sm:$0xff]
    %v1976 = vld [vmem:[#allocation6 + $0x60] sm:$0xff]
    %v1977 = vld [vmem:[#allocation6 + $0x68] sm:$0xff]
    %v1978 = vld [vmem:[#allocation6 + $0x70] sm:$0xff]
    %v1979 = vld [vmem:[#allocation6 + $0x78] sm:$0xff]
    %v1980 = vld [vmem:[#allocation6 + $0x80] sm:$0xff]
    %v1981 = vld [vmem:[#allocation6 + $0x88] sm:$0xff]
    %v1982 = vld [vmem:[#allocation6 + $0x90] sm:$0xff]
    %v1983 = vld [vmem:[#allocation6 + $0x98] sm:$0xff]
    %v1984 = vld [vmem:[#allocation6 + $0xa0] sm:$0xff]
    %v1985 = vld [vmem:[#allocation6 + $0xa8] sm:$0xff]
    %v1986 = vld [vmem:[#allocation6 + $0xb0] sm:$0xff]
    %v1987 = vld [vmem:[#allocation6 + $0xb8] sm:$0xff]
    %v1988 = vld [vmem:[#allocation6 + $0xc0] sm:$0xff]
    %v1989 = vld [vmem:[#allocation6 + $0xc8] sm:$0xff]
    %v1990 = vld [vmem:[#allocation6 + $0xd0] sm:$0xff]
    %v1991 = vld [vmem:[#allocation6 + $0xd8] sm:$0xff]
    %v1992 = vld [vmem:[#allocation6 + $0xe0] sm:$0xff]
    %v1993 = vld [vmem:[#allocation6 + $0xe8] sm:$0xff]
    %v1994 = vld [vmem:[#allocation6 + $0xf0] sm:$0xff]
    %v1995 = vld [vmem:[#allocation6 + $0xf8] sm:$0xff]
    %vm1996 = vcmask 523264
    %v1998 = vsel %vm1996, %v1952, 0
    %2000 = vmatprep.subr.mxu0 %v1965
    %2001 = vmatpush1.msra.mxu0 %v1964
    %2002 = vmatprep.subr.mxu0 %v1969
    %2003 = vmatpush1.msra.mxu0 %v1968
    %2004 = vmatprep.subr.mxu0 %v1973
    %2005 = vmatpush1.msra.mxu0 %v1972
    %2006 = vmatprep.subr.mxu0 %v1977
    %2007 = vmatpush1.msra.mxu0 %v1976
    %2008 = vmatprep.subr.mxu0 %v1981
    %2009 = vmatpush1.msra.mxu0 %v1980
    %2010 = vmatprep.subr.mxu0 %v1985
    %2011 = vmatpush1.msra.mxu0 %v1984
    %2012 = vmatprep.subr.mxu0 %v1989
    %2013 = vmatpush1.msra.mxu0 %v1988
    %2014 = vmatprep.subr.mxu0 %v1993
    %2015 = vmatpush1.msra.mxu0 %v1992
    %2016 = vmatprep.subr.mxu0 0.0
    %2017 = vmatpush1.msra.mxu0 0.0
    %2018 = vmatprep.subr.mxu0 0.0
    %2019 = vmatpush1.msra.mxu0 0.0
    %2020 = vmatprep.subr.mxu0 0.0
    %2021 = vmatpush1.msra.mxu0 0.0
    %2022 = vmatprep.subr.mxu0 0.0
    %2023 = vmatpush1.msra.mxu0 0.0
    %2024 = vmatprep.subr.mxu0 0.0
    %2025 = vmatpush1.msra.mxu0 0.0
    %2026 = vmatprep.subr.mxu0 0.0
    %2027 = vmatpush1.msra.mxu0 0.0
    %2028 = vmatprep.subr.mxu0 0.0
    %2029 = vmatpush1.msra.mxu0 0.0
    %2030 = vmatprep.subr.mxu0 0.0
    %2031 = vmatpush1.msra.mxu0 0.0
    %2032 = vmatprep.subr.mxu0 0.0
    %2033 = vmatpush1.msra.mxu0 0.0
    %2034 = vmatprep.subr.mxu0 0.0
    %2035 = vmatpush1.msra.mxu0 0.0
    %2036 = vmatprep.subr.mxu0 0.0
    %2037 = vmatpush1.msra.mxu0 0.0
    %2038 = vmatprep.subr.mxu0 0.0
    %2039 = vmatpush1.msra.mxu0 0.0
    %2040 = vmatprep.subr.mxu0 0.0
    %2041 = vmatpush1.msra.mxu0 0.0
    %2042 = vmatprep.subr.mxu0 0.0
    %2043 = vmatpush1.msra.mxu0 0.0
    %2044 = vmatprep.subr.mxu0 0.0
    %2045 = vmatpush1.msra.mxu0 0.0
    %2046 = vmatprep.subr.mxu0 0.0
    %2047 = vmatpush1.msra.mxu0 0.0
    %2048 = vmatprep.subr.mxu0 0.0
    %2049 = vmatpush1.msra.mxu0 0.0
    %2050 = vmatprep.subr.mxu0 0.0
    %2051 = vmatpush1.msra.mxu0 0.0
    %2052 = vmatprep.subr.mxu0 0.0
    %2053 = vmatpush1.msra.mxu0 0.0
    %2054 = vmatprep.subr.mxu0 0.0
    %2055 = vmatpush1.msra.mxu0 0.0
    %2056 = vmatprep.subr.mxu0 0.0
    %2057 = vmatpush1.msra.mxu0 0.0
    %2058 = vmatprep.subr.mxu0 0.0
    %2059 = vmatpush1.msra.mxu0 0.0
    %2060 = vmatprep.subr.mxu0 0.0
    %2061 = vmatpush1.msra.mxu0 0.0
    %2062 = vmatprep.subr.mxu0 0.0
    %2063 = vmatpush1.msra.mxu0 0.0
    %2064 = vmatprep.mubr.f32.mxu0 0.0
    %2065 = vmatmul.mubr.f32.gmra.mrb[0].mxu0 %v1998
    %v2066 = vpop.f32.mrb[0].mxu0
    %v2067 = vadd.f32 0.0, %v2066
    %v2068 = vpop.f32.mrb[0].mxu0
    %v2069 = vadd.f32 0.0, %v2068
    %2070 = vdwg.mxu0
    %2071 = vmatprep.subr.mxu0 %v1967
    %2072 = vmatpush1.msra.mxu0 %v1966
    %2073 = vmatprep.subr.mxu0 %v1971
    %2074 = vmatpush1.msra.mxu0 %v1970
    %2075 = vmatprep.subr.mxu0 %v1975
    %2076 = vmatpush1.msra.mxu0 %v1974
    %2077 = vmatprep.subr.mxu0 %v1979
    %2078 = vmatpush1.msra.mxu0 %v1978
    %2079 = vmatprep.subr.mxu0 %v1983
    %2080 = vmatpush1.msra.mxu0 %v1982
    %2081 = vmatprep.subr.mxu0 %v1987
    %2082 = vmatpush1.msra.mxu0 %v1986
    %2083 = vmatprep.subr.mxu0 %v1991
    %2084 = vmatpush1.msra.mxu0 %v1990
    %2085 = vmatprep.subr.mxu0 %v1995
    %2086 = vmatpush1.msra.mxu0 %v1994
    %2087 = vmatprep.subr.mxu0 0.0
    %2088 = vmatpush1.msra.mxu0 0.0
    %2089 = vmatprep.subr.mxu0 0.0
    %2090 = vmatpush1.msra.mxu0 0.0
    %2091 = vmatprep.subr.mxu0 0.0
    %2092 = vmatpush1.msra.mxu0 0.0
    %2093 = vmatprep.subr.mxu0 0.0
    %2094 = vmatpush1.msra.mxu0 0.0
    %2095 = vmatprep.subr.mxu0 0.0
    %2096 = vmatpush1.msra.mxu0 0.0
    %2097 = vmatprep.subr.mxu0 0.0
    %2098 = vmatpush1.msra.mxu0 0.0
    %2099 = vmatprep.subr.mxu0 0.0
    %2100 = vmatpush1.msra.mxu0 0.0
    %2101 = vmatprep.subr.mxu0 0.0
    %2102 = vmatpush1.msra.mxu0 0.0
    %2103 = vmatprep.subr.mxu0 0.0
    %2104 = vmatpush1.msra.mxu0 0.0
    %2105 = vmatprep.subr.mxu0 0.0
    %2106 = vmatpush1.msra.mxu0 0.0
    %2107 = vmatprep.subr.mxu0 0.0
    %2108 = vmatpush1.msra.mxu0 0.0
    %2109 = vmatprep.subr.mxu0 0.0
    %2110 = vmatpush1.msra.mxu0 0.0
    %2111 = vmatprep.subr.mxu0 0.0
    %2112 = vmatpush1.msra.mxu0 0.0
    %2113 = vmatprep.subr.mxu0 0.0
    %2114 = vmatpush1.msra.mxu0 0.0
    %2115 = vmatprep.subr.mxu0 0.0
    %2116 = vmatpush1.msra.mxu0 0.0
    %2117 = vmatprep.subr.mxu0 0.0
    %2118 = vmatpush1.msra.mxu0 0.0
    %2119 = vmatprep.subr.mxu0 0.0
    %2120 = vmatpush1.msra.mxu0 0.0
    %2121 = vmatprep.subr.mxu0 0.0
    %2122 = vmatpush1.msra.mxu0 0.0
    %2123 = vmatprep.subr.mxu0 0.0
    %2124 = vmatpush1.msra.mxu0 0.0
    %2125 = vmatprep.subr.mxu0 0.0
    %2126 = vmatpush1.msra.mxu0 0.0
    %2127 = vmatprep.subr.mxu0 0.0
    %2128 = vmatpush1.msra.mxu0 0.0
    %2129 = vmatprep.subr.mxu0 0.0
    %2130 = vmatpush1.msra.mxu0 0.0
    %2131 = vmatprep.subr.mxu0 0.0
    %2132 = vmatpush1.msra.mxu0 0.0
    %2133 = vmatprep.subr.mxu0 0.0
    %2134 = vmatpush1.msra.mxu0 0.0
    %2135 = vmatprep.mubr.f32.mxu0 0.0
    %2136 = vmatmul.mubr.f32.gmra.mrb[0].mxu0 %v1998
    %v2137 = vpop.f32.mrb[0].mxu0
    %v2138 = vadd.f32 0.0, %v2137
    %v2139 = vpop.f32.mrb[0].mxu0
    %v2140 = vadd.f32 0.0, %v2139
    %2141 = vdwg.mxu0
    %v2142 = vld [vmem:[#allocation8] sm:$0xff]
    %v2143 = vld [vmem:[#allocation8 + $0x8] sm:$0xff]
    %v2144 = vld [vmem:[#allocation8 + $0x10] sm:$0xff]
    %v2145 = vld [vmem:[#allocation8 + $0x18] sm:$0xff]
    %v2146 = vld [vmem:[#allocation8 + $0x20] sm:$0xff]
    %v2147 = vld [vmem:[#allocation8 + $0x28] sm:$0xff]
    %v2148 = vld [vmem:[#allocation8 + $0x30] sm:$0xff]
    %v2149 = vld [vmem:[#allocation8 + $0x38] sm:$0xff]
    %v2150 = vld [vmem:[#allocation8 + $0x40] sm:$0xff]
    %v2151 = vld [vmem:[#allocation8 + $0x48] sm:$0xff]
    %v2152 = vld [vmem:[#allocation8 + $0x50] sm:$0xff]
    %v2153 = vld [vmem:[#allocation8 + $0x58] sm:$0xff]
    %v2154 = vld [vmem:[#allocation8 + $0x60] sm:$0xff]
    %v2155 = vld [vmem:[#allocation8 + $0x68] sm:$0xff]
    %v2156 = vld [vmem:[#allocation8 + $0x70] sm:$0xff]
    %v2157 = vld [vmem:[#allocation8 + $0x78] sm:$0xff]
    %v2158 = vld [vmem:[#allocation8 + $0x80] sm:$0xff]
    %v2159 = vld [vmem:[#allocation8 + $0x88] sm:$0xff]
    %v2160 = vld [vmem:[#allocation8 + $0x90] sm:$0xff]
    %v2161 = vld [vmem:[#allocation8 + $0x98] sm:$0xff]
    %v2162 = vld [vmem:[#allocation8 + $0xa0] sm:$0xff]
    %v2163 = vld [vmem:[#allocation8 + $0xa8] sm:$0xff]
    %v2164 = vld [vmem:[#allocation8 + $0xb0] sm:$0xff]
    %v2165 = vld [vmem:[#allocation8 + $0xb8] sm:$0xff]
    %v2166 = vld [vmem:[#allocation8 + $0xc0] sm:$0xff]
    %v2167 = vld [vmem:[#allocation8 + $0xc8] sm:$0xff]
    %v2168 = vld [vmem:[#allocation8 + $0xd0] sm:$0xff]
    %v2169 = vld [vmem:[#allocation8 + $0xd8] sm:$0xff]
    %v2170 = vld [vmem:[#allocation8 + $0xe0] sm:$0xff]
    %v2171 = vld [vmem:[#allocation8 + $0xe8] sm:$0xff]
    %v2172 = vld [vmem:[#allocation8 + $0xf0] sm:$0xff]
    %v2173 = vld [vmem:[#allocation8 + $0xf8] sm:$0xff]
    %v2175 = vsel %vm1996, %v1963, 0
    %2177 = vmatprep.subr.mxu0 %v2143
    %2178 = vmatpush1.msra.mxu0 %v2142
    %2179 = vmatprep.subr.mxu0 %v2147
    %2180 = vmatpush1.msra.mxu0 %v2146
    %2181 = vmatprep.subr.mxu0 %v2151
    %2182 = vmatpush1.msra.mxu0 %v2150
    %2183 = vmatprep.subr.mxu0 %v2155
    %2184 = vmatpush1.msra.mxu0 %v2154
    %2185 = vmatprep.subr.mxu0 %v2159
    %2186 = vmatpush1.msra.mxu0 %v2158
    %2187 = vmatprep.subr.mxu0 %v2163
    %2188 = vmatpush1.msra.mxu0 %v2162
    %2189 = vmatprep.subr.mxu0 %v2167
    %2190 = vmatpush1.msra.mxu0 %v2166
    %2191 = vmatprep.subr.mxu0 %v2171
    %2192 = vmatpush1.msra.mxu0 %v2170
    %2193 = vmatprep.subr.mxu0 0.0
    %2194 = vmatpush1.msra.mxu0 0.0
    %2195 = vmatprep.subr.mxu0 0.0
    %2196 = vmatpush1.msra.mxu0 0.0
    %2197 = vmatprep.subr.mxu0 0.0
    %2198 = vmatpush1.msra.mxu0 0.0
    %2199 = vmatprep.subr.mxu0 0.0
    %2200 = vmatpush1.msra.mxu0 0.0
    %2201 = vmatprep.subr.mxu0 0.0
    %2202 = vmatpush1.msra.mxu0 0.0
    %2203 = vmatprep.subr.mxu0 0.0
    %2204 = vmatpush1.msra.mxu0 0.0
    %2205 = vmatprep.subr.mxu0 0.0
    %2206 = vmatpush1.msra.mxu0 0.0
    %2207 = vmatprep.subr.mxu0 0.0
    %2208 = vmatpush1.msra.mxu0 0.0
    %2209 = vmatprep.subr.mxu0 0.0
    %2210 = vmatpush1.msra.mxu0 0.0
    %2211 = vmatprep.subr.mxu0 0.0
    %2212 = vmatpush1.msra.mxu0 0.0
    %2213 = vmatprep.subr.mxu0 0.0
    %2214 = vmatpush1.msra.mxu0 0.0
    %2215 = vmatprep.subr.mxu0 0.0
    %2216 = vmatpush1.msra.mxu0 0.0
    %2217 = vmatprep.subr.mxu0 0.0
    %2218 = vmatpush1.msra.mxu0 0.0
    %2219 = vmatprep.subr.mxu0 0.0
    %2220 = vmatpush1.msra.mxu0 0.0
    %2221 = vmatprep.subr.mxu0 0.0
    %2222 = vmatpush1.msra.mxu0 0.0
    %2223 = vmatprep.subr.mxu0 0.0
    %2224 = vmatpush1.msra.mxu0 0.0
    %2225 = vmatprep.subr.mxu0 0.0
    %2226 = vmatpush1.msra.mxu0 0.0
    %2227 = vmatprep.subr.mxu0 0.0
    %2228 = vmatpush1.msra.mxu0 0.0
    %2229 = vmatprep.subr.mxu0 0.0
    %2230 = vmatpush1.msra.mxu0 0.0
    %2231 = vmatprep.subr.mxu0 0.0
    %2232 = vmatpush1.msra.mxu0 0.0
    %2233 = vmatprep.subr.mxu0 0.0
    %2234 = vmatpush1.msra.mxu0 0.0
    %2235 = vmatprep.subr.mxu0 0.0
    %2236 = vmatpush1.msra.mxu0 0.0
    %2237 = vmatprep.subr.mxu0 0.0
    %2238 = vmatpush1.msra.mxu0 0.0
    %2239 = vmatprep.subr.mxu0 0.0
    %2240 = vmatpush1.msra.mxu0 0.0
    %2241 = vmatprep.mubr.f32.mxu0 0.0
    %2242 = vmatmul.mubr.f32.gmra.mrb[0].mxu0 %v2175
    %v2243 = vpop.f32.mrb[0].mxu0
    %v2244 = vadd.f32 0.0, %v2243
    %v2245 = vpop.f32.mrb[0].mxu0
    %v2246 = vadd.f32 0.0, %v2245
    %2247 = vdwg.mxu0
    %2248 = vmatprep.subr.mxu0 %v2145
    %2249 = vmatpush1.msra.mxu0 %v2144
    %2250 = vmatprep.subr.mxu0 %v2149
    %2251 = vmatpush1.msra.mxu0 %v2148
    %2252 = vmatprep.subr.mxu0 %v2153
    %2253 = vmatpush1.msra.mxu0 %v2152
    %2254 = vmatprep.subr.mxu0 %v2157
    %2255 = vmatpush1.msra.mxu0 %v2156
    %2256 = vmatprep.subr.mxu0 %v2161
    %2257 = vmatpush1.msra.mxu0 %v2160
    %2258 = vmatprep.subr.mxu0 %v2165
    %2259 = vmatpush1.msra.mxu0 %v2164
    %2260 = vmatprep.subr.mxu0 %v2169
    %2261 = vmatpush1.msra.mxu0 %v2168
    %2262 = vmatprep.subr.mxu0 %v2173
    %2263 = vmatpush1.msra.mxu0 %v2172
    %2264 = vmatprep.subr.mxu0 0.0
    %2265 = vmatpush1.msra.mxu0 0.0
    %2266 = vmatprep.subr.mxu0 0.0
    %2267 = vmatpush1.msra.mxu0 0.0
    %2268 = vmatprep.subr.mxu0 0.0
    %2269 = vmatpush1.msra.mxu0 0.0
    %2270 = vmatprep.subr.mxu0 0.0
    %2271 = vmatpush1.msra.mxu0 0.0
    %2272 = vmatprep.subr.mxu0 0.0
    %2273 = vmatpush1.msra.mxu0 0.0
    %2274 = vmatprep.subr.mxu0 0.0
    %2275 = vmatpush1.msra.mxu0 0.0
    %2276 = vmatprep.subr.mxu0 0.0
    %2277 = vmatpush1.msra.mxu0 0.0
    %2278 = vmatprep.subr.mxu0 0.0
    %2279 = vmatpush1.msra.mxu0 0.0
    %2280 = vmatprep.subr.mxu0 0.0
    %2281 = vmatpush1.msra.mxu0 0.0
    %2282 = vmatprep.subr.mxu0 0.0
    %2283 = vmatpush1.msra.mxu0 0.0
    %2284 = vmatprep.subr.mxu0 0.0
    %2285 = vmatpush1.msra.mxu0 0.0
    %2286 = vmatprep.subr.mxu0 0.0
    %2287 = vmatpush1.msra.mxu0 0.0
    %2288 = vmatprep.subr.mxu0 0.0
    %2289 = vmatpush1.msra.mxu0 0.0
    %2290 = vmatprep.subr.mxu0 0.0
    %2291 = vmatpush1.msra.mxu0 0.0
    %2292 = vmatprep.subr.mxu0 0.0
    %2293 = vmatpush1.msra.mxu0 0.0
    %2294 = vmatprep.subr.mxu0 0.0
    %2295 = vmatpush1.msra.mxu0 0.0
    %2296 = vmatprep.subr.mxu0 0.0
    %2297 = vmatpush1.msra.mxu0 0.0
    %2298 = vmatprep.subr.mxu0 0.0
    %2299 = vmatpush1.msra.mxu0 0.0
    %2300 = vmatprep.subr.mxu0 0.0
    %2301 = vmatpush1.msra.mxu0 0.0
    %2302 = vmatprep.subr.mxu0 0.0
    %2303 = vmatpush1.msra.mxu0 0.0
    %2304 = vmatprep.subr.mxu0 0.0
    %2305 = vmatpush1.msra.mxu0 0.0
    %2306 = vmatprep.subr.mxu0 0.0
    %2307 = vmatpush1.msra.mxu0 0.0
    %2308 = vmatprep.subr.mxu0 0.0
    %2309 = vmatpush1.msra.mxu0 0.0
    %2310 = vmatprep.subr.mxu0 0.0
    %2311 = vmatpush1.msra.mxu0 0.0
    %2312 = vmatprep.mubr.f32.mxu0 0.0
    %2313 = vmatmul.mubr.f32.gmra.mrb[0].mxu0 %v2175
    %v2314 = vpop.f32.mrb[0].mxu0
    %v2315 = vadd.f32 0.0, %v2314
    %v2316 = vpop.f32.mrb[0].mxu0
    %v2317 = vadd.f32 0.0, %v2316
    %2318 = vdwg.mxu0
    %v2319 = vmul.f32 %v2067, %v2244
    %v2320 = vmul.f32 %v2069, %v2246
    %v2321 = vmul.f32 %v2138, %v2315
    %v2322 = vmul.f32 %v2140, %v2317
    %v2323 = vmul.f32 %v1566, %v2319
    %v2324 = vmul.f32 %v1567, %v2320
    %v2325 = vmul.f32 %v1568, %v2321
    %v2326 = vmul.f32 %v1569, %v2322
    %v2327 = vld [vmem:[%s6] sm:$0xff]
    %2328 = vset.pattern.permute.xlu0 7
    %2329 = vperm.xlu0 %2328, %v90
    %v2330 = vpop.permute.xlu0 %2329
    %v2333 = vsel %vm1077, %v2327, 0
    %2335 = vmatprep.subr.mxu0 %v2324
    %2336 = vmatpush1.msra.mxu0 %v2323
    %2337 = vmatprep.subr.mxu0 0.0
    %2338 = vmatpush1.msra.mxu0 0.0
    %2339 = vmatprep.subr.mxu0 0.0
    %2340 = vmatpush1.msra.mxu0 0.0
    %2341 = vmatprep.subr.mxu0 0.0
    %2342 = vmatpush1.msra.mxu0 0.0
    %2343 = vmatprep.subr.mxu0 0.0
    %2344 = vmatpush1.msra.mxu0 0.0
    %2345 = vmatprep.subr.mxu0 0.0
    %2346 = vmatpush1.msra.mxu0 0.0
    %2347 = vmatprep.subr.mxu0 0.0
    %2348 = vmatpush1.msra.mxu0 0.0
    %2349 = vmatprep.subr.mxu0 0.0
    %2350 = vmatpush1.msra.mxu0 0.0
    %2351 = vmatprep.subr.mxu0 0.0
    %2352 = vmatpush1.msra.mxu0 0.0
    %2353 = vmatprep.subr.mxu0 0.0
    %2354 = vmatpush1.msra.mxu0 0.0
    %2355 = vmatprep.subr.mxu0 0.0
    %2356 = vmatpush1.msra.mxu0 0.0
    %2357 = vmatprep.subr.mxu0 0.0
    %2358 = vmatpush1.msra.mxu0 0.0
    %2359 = vmatprep.subr.mxu0 0.0
    %2360 = vmatpush1.msra.mxu0 0.0
    %2361 = vmatprep.subr.mxu0 0.0
    %2362 = vmatpush1.msra.mxu0 0.0
    %2363 = vmatprep.subr.mxu0 0.0
    %2364 = vmatpush1.msra.mxu0 0.0
    %2365 = vmatprep.subr.mxu0 0.0
    %2366 = vmatpush1.msra.mxu0 0.0
    %2367 = vmatprep.subr.mxu0 0.0
    %2368 = vmatpush1.msra.mxu0 0.0
    %2369 = vmatprep.subr.mxu0 0.0
    %2370 = vmatpush1.msra.mxu0 0.0
    %2371 = vmatprep.subr.mxu0 0.0
    %2372 = vmatpush1.msra.mxu0 0.0
    %2373 = vmatprep.subr.mxu0 0.0
    %2374 = vmatpush1.msra.mxu0 0.0
    %2375 = vmatprep.subr.mxu0 0.0
    %2376 = vmatpush1.msra.mxu0 0.0
    %2377 = vmatprep.subr.mxu0 0.0
    %2378 = vmatpush1.msra.mxu0 0.0
    %2379 = vmatprep.subr.mxu0 0.0
    %2380 = vmatpush1.msra.mxu0 0.0
    %2381 = vmatprep.subr.mxu0 0.0
    %2382 = vmatpush1.msra.mxu0 0.0
    %2383 = vmatprep.subr.mxu0 0.0
    %2384 = vmatpush1.msra.mxu0 0.0
    %2385 = vmatprep.subr.mxu0 0.0
    %2386 = vmatpush1.msra.mxu0 0.0
    %2387 = vmatprep.subr.mxu0 0.0
    %2388 = vmatpush1.msra.mxu0 0.0
    %2389 = vmatprep.subr.mxu0 0.0
    %2390 = vmatpush1.msra.mxu0 0.0
    %2391 = vmatprep.subr.mxu0 0.0
    %2392 = vmatpush1.msra.mxu0 0.0
    %2393 = vmatprep.subr.mxu0 0.0
    %2394 = vmatpush1.msra.mxu0 0.0
    %2395 = vmatprep.subr.mxu0 0.0
    %2396 = vmatpush1.msra.mxu0 0.0
    %2397 = vmatprep.subr.mxu0 0.0
    %2398 = vmatpush1.msra.mxu0 0.0
    %2399 = vmatprep.mubr.f32.mxu0 0.0
    %2400 = vmatmul.mubr.f32.gmra.mrb[0].mxu0 %v2333
    %v2401 = vpop.f32.mrb[0].mxu0
    %v2402 = vadd.f32 %v2330, %v2401
    %v2403 = vpop.f32.mrb[0].mxu0
    %v2404 = vadd.f32 %v2330, %v2403
    %2405 = vdwg.mxu0
    %2406 = vmatprep.subr.mxu0 %v2326
    %2407 = vmatpush1.msra.mxu0 %v2325
    %2408 = vmatprep.subr.mxu0 0.0
    %2409 = vmatpush1.msra.mxu0 0.0
    %2410 = vmatprep.subr.mxu0 0.0
    %2411 = vmatpush1.msra.mxu0 0.0
    %2412 = vmatprep.subr.mxu0 0.0
    %2413 = vmatpush1.msra.mxu0 0.0
    %2414 = vmatprep.subr.mxu0 0.0
    %2415 = vmatpush1.msra.mxu0 0.0
    %2416 = vmatprep.subr.mxu0 0.0
    %2417 = vmatpush1.msra.mxu0 0.0
    %2418 = vmatprep.subr.mxu0 0.0
    %2419 = vmatpush1.msra.mxu0 0.0
    %2420 = vmatprep.subr.mxu0 0.0
    %2421 = vmatpush1.msra.mxu0 0.0
    %2422 = vmatprep.subr.mxu0 0.0
    %2423 = vmatpush1.msra.mxu0 0.0
    %2424 = vmatprep.subr.mxu0 0.0
    %2425 = vmatpush1.msra.mxu0 0.0
    %2426 = vmatprep.subr.mxu0 0.0
    %2427 = vmatpush1.msra.mxu0 0.0
    %2428 = vmatprep.subr.mxu0 0.0
    %2429 = vmatpush1.msra.mxu0 0.0
    %2430 = vmatprep.subr.mxu0 0.0
    %2431 = vmatpush1.msra.mxu0 0.0
    %2432 = vmatprep.subr.mxu0 0.0
    %2433 = vmatpush1.msra.mxu0 0.0
    %2434 = vmatprep.subr.mxu0 0.0
    %2435 = vmatpush1.msra.mxu0 0.0
    %2436 = vmatprep.subr.mxu0 0.0
    %2437 = vmatpush1.msra.mxu0 0.0
    %2438 = vmatprep.subr.mxu0 0.0
    %2439 = vmatpush1.msra.mxu0 0.0
    %2440 = vmatprep.subr.mxu0 0.0
    %2441 = vmatpush1.msra.mxu0 0.0
    %2442 = vmatprep.subr.mxu0 0.0
    %2443 = vmatpush1.msra.mxu0 0.0
    %2444 = vmatprep.subr.mxu0 0.0
    %2445 = vmatpush1.msra.mxu0 0.0
    %2446 = vmatprep.subr.mxu0 0.0
    %2447 = vmatpush1.msra.mxu0 0.0
    %2448 = vmatprep.subr.mxu0 0.0
    %2449 = vmatpush1.msra.mxu0 0.0
    %2450 = vmatprep.subr.mxu0 0.0
    %2451 = vmatpush1.msra.mxu0 0.0
    %2452 = vmatprep.subr.mxu0 0.0
    %2453 = vmatpush1.msra.mxu0 0.0
    %2454 = vmatprep.subr.mxu0 0.0
    %2455 = vmatpush1.msra.mxu0 0.0
    %2456 = vmatprep.subr.mxu0 0.0
    %2457 = vmatpush1.msra.mxu0 0.0
    %2458 = vmatprep.subr.mxu0 0.0
    %2459 = vmatpush1.msra.mxu0 0.0
    %2460 = vmatprep.subr.mxu0 0.0
    %2461 = vmatpush1.msra.mxu0 0.0
    %2462 = vmatprep.subr.mxu0 0.0
    %2463 = vmatpush1.msra.mxu0 0.0
    %2464 = vmatprep.subr.mxu0 0.0
    %2465 = vmatpush1.msra.mxu0 0.0
    %2466 = vmatprep.subr.mxu0 0.0
    %2467 = vmatpush1.msra.mxu0 0.0
    %2468 = vmatprep.subr.mxu0 0.0
    %2469 = vmatpush1.msra.mxu0 0.0
    %2470 = vmatprep.mubr.f32.mxu0 0.0
    %2471 = vmatmul.mubr.f32.gmra.mrb[0].mxu0 %v2333
    %v2472 = vpop.f32.mrb[0].mxu0
    %v2473 = vadd.f32 %v2330, %v2472
    %v2474 = vpop.f32.mrb[0].mxu0
    %v2475 = vadd.f32 %v2330, %v2474
    %2476 = vdwg.mxu0
    %2477 = vmatprep.subr.mxu0 0.0
    %2478 = vmatpush1.msra.mxu0 %v92
    %2479 = vmatprep.subr.mxu0 0.0
    %2480 = vmatpush1.msra.mxu0 %v93
    %2481 = vmatprep.subr.mxu0 0.0
    %2482 = vmatpush1.msra.mxu0 %v94
    %2483 = vmatprep.subr.mxu0 0.0
    %2484 = vmatpush1.msra.mxu0 %v95
    %2485 = vmatprep.subr.mxu0 0.0
    %2486 = vmatpush1.msra.mxu0 %v96
    %2487 = vmatprep.subr.mxu0 0.0
    %2488 = vmatpush1.msra.mxu0 %v97
    %2489 = vmatprep.subr.mxu0 0.0
    %2490 = vmatpush1.msra.mxu0 %v98
    %2491 = vmatprep.subr.mxu0 0.0
    %2492 = vmatpush1.msra.mxu0 %v99
    %2493 = vmatprep.subr.mxu0 0.0
    %2494 = vmatpush1.msra.mxu0 %v100
    %2495 = vmatprep.subr.mxu0 0.0
    %2496 = vmatpush1.msra.mxu0 %v101
    %2497 = vmatprep.subr.mxu0 0.0
    %2498 = vmatpush1.msra.mxu0 %v102
    %2499 = vmatprep.subr.mxu0 0.0
    %2500 = vmatpush1.msra.mxu0 %v103
    %2501 = vmatprep.subr.mxu0 0.0
    %2502 = vmatpush1.msra.mxu0 %v104
    %2503 = vmatprep.subr.mxu0 0.0
    %2504 = vmatpush1.msra.mxu0 %v105
    %2505 = vmatprep.subr.mxu0 0.0
    %2506 = vmatpush1.msra.mxu0 %v106
    %2507 = vmatprep.subr.mxu0 0.0
    %2508 = vmatpush1.msra.mxu0 %v107
    %2509 = vmatprep.subr.mxu0 0.0
    %2510 = vmatpush1.msra.mxu0 %v108
    %2511 = vmatprep.subr.mxu0 0.0
    %2512 = vmatpush1.msra.mxu0 %v109
    %2513 = vmatprep.subr.mxu0 0.0
    %2514 = vmatpush1.msra.mxu0 %v110
    %2515 = vmatprep.subr.mxu0 0.0
    %2516 = vmatpush1.msra.mxu0 %v111
    %2517 = vmatprep.subr.mxu0 0.0
    %2518 = vmatpush1.msra.mxu0 %v112
    %2519 = vmatprep.subr.mxu0 0.0
    %2520 = vmatpush1.msra.mxu0 %v113
    %2521 = vmatprep.subr.mxu0 0.0
    %2522 = vmatpush1.msra.mxu0 %v114
    %2523 = vmatprep.subr.mxu0 0.0
    %2524 = vmatpush1.msra.mxu0 %v115
    %2525 = vmatprep.subr.mxu0 0.0
    %2526 = vmatpush1.msra.mxu0 %v116
    %2527 = vmatprep.subr.mxu0 0.0
    %2528 = vmatpush1.msra.mxu0 %v117
    %2529 = vmatprep.subr.mxu0 0.0
    %2530 = vmatpush1.msra.mxu0 %v118
    %2531 = vmatprep.subr.mxu0 0.0
    %2532 = vmatpush1.msra.mxu0 %v119
    %2533 = vmatprep.subr.mxu0 0.0
    %2534 = vmatpush1.msra.mxu0 %v120
    %2535 = vmatprep.subr.mxu0 0.0
    %2536 = vmatpush1.msra.mxu0 %v121
    %2537 = vmatprep.subr.mxu0 0.0
    %2538 = vmatpush1.msra.mxu0 %v122
    %2539 = vmatprep.subr.mxu0 0.0
    %2540 = vmatpush1.msra.mxu0 %v123
    %2541 = vmatprep.mubr.f32.mxu0 %v2404
    %2542 = vmatmul.mubr.f32.gmra.mrb[0].mxu0 %v2402
    %v2543 = vpop.f32.mrb[0].mxu0
    %v2544 = vadd.f32 0.0, %v2543
    %v2545 = vpop.f32.mrb[0].mxu0
    %2546 = vdwg.mxu0
    %2547 = vmatprep.subr.mxu0 0.0
    %2548 = vmatpush1.msra.mxu0 %v124
    %2549 = vmatprep.subr.mxu0 0.0
    %2550 = vmatpush1.msra.mxu0 %v125
    %2551 = vmatprep.subr.mxu0 0.0
    %2552 = vmatpush1.msra.mxu0 %v126
    %2553 = vmatprep.subr.mxu0 0.0
    %2554 = vmatpush1.msra.mxu0 %v127
    %2555 = vmatprep.subr.mxu0 0.0
    %2556 = vmatpush1.msra.mxu0 %v128
    %2557 = vmatprep.subr.mxu0 0.0
    %2558 = vmatpush1.msra.mxu0 %v129
    %2559 = vmatprep.subr.mxu0 0.0
    %2560 = vmatpush1.msra.mxu0 %v130
    %2561 = vmatprep.subr.mxu0 0.0
    %2562 = vmatpush1.msra.mxu0 %v131
    %2563 = vmatprep.subr.mxu0 0.0
    %2564 = vmatpush1.msra.mxu0 %v132
    %2565 = vmatprep.subr.mxu0 0.0
    %2566 = vmatpush1.msra.mxu0 %v133
    %2567 = vmatprep.subr.mxu0 0.0
    %2568 = vmatpush1.msra.mxu0 %v134
    %2569 = vmatprep.subr.mxu0 0.0
    %2570 = vmatpush1.msra.mxu0 %v135
    %2571 = vmatprep.subr.mxu0 0.0
    %2572 = vmatpush1.msra.mxu0 %v136
    %2573 = vmatprep.subr.mxu0 0.0
    %2574 = vmatpush1.msra.mxu0 %v137
    %2575 = vmatprep.subr.mxu0 0.0
    %2576 = vmatpush1.msra.mxu0 %v138
    %2577 = vmatprep.subr.mxu0 0.0
    %2578 = vmatpush1.msra.mxu0 %v139
    %2579 = vmatprep.subr.mxu0 0.0
    %2580 = vmatpush1.msra.mxu0 %v140
    %2581 = vmatprep.subr.mxu0 0.0
    %2582 = vmatpush1.msra.mxu0 %v141
    %2583 = vmatprep.subr.mxu0 0.0
    %2584 = vmatpush1.msra.mxu0 %v142
    %2585 = vmatprep.subr.mxu0 0.0
    %2586 = vmatpush1.msra.mxu0 %v143
    %2587 = vmatprep.subr.mxu0 0.0
    %2588 = vmatpush1.msra.mxu0 %v144
    %2589 = vmatprep.subr.mxu0 0.0
    %2590 = vmatpush1.msra.mxu0 %v145
    %2591 = vmatprep.subr.mxu0 0.0
    %2592 = vmatpush1.msra.mxu0 %v146
    %2593 = vmatprep.subr.mxu0 0.0
    %2594 = vmatpush1.msra.mxu0 %v147
    %2595 = vmatprep.subr.mxu0 0.0
    %2596 = vmatpush1.msra.mxu0 %v148
    %2597 = vmatprep.subr.mxu0 0.0
    %2598 = vmatpush1.msra.mxu0 %v149
    %2599 = vmatprep.subr.mxu0 0.0
    %2600 = vmatpush1.msra.mxu0 %v150
    %2601 = vmatprep.subr.mxu0 0.0
    %2602 = vmatpush1.msra.mxu0 %v151
    %2603 = vmatprep.subr.mxu0 0.0
    %2604 = vmatpush1.msra.mxu0 %v152
    %2605 = vmatprep.subr.mxu0 0.0
    %2606 = vmatpush1.msra.mxu0 %v153
    %2607 = vmatprep.subr.mxu0 0.0
    %2608 = vmatpush1.msra.mxu0 %v154
    %2609 = vmatprep.subr.mxu0 0.0
    %2610 = vmatpush1.msra.mxu0 %v155
    %2611 = vmatprep.mubr.f32.mxu0 %v2475
    %2612 = vmatmul.mubr.f32.gmra.mrb[0].mxu0 %v2473
    %v2613 = vpop.f32.mrb[0].mxu0
    %v2614 = vadd.f32 %v2544, %v2613
    %v2615 = vpop.f32.mrb[0].mxu0
    %2616 = vdwg.mxu0
    %v2617 = vmul.f32 %v2402, %v2402
    %v2618 = vmul.f32 %v2404, %v2404
    %v2619 = vmul.f32 %v2473, %v2473
    %v2620 = vmul.f32 %v2475, %v2475
    %2621 = vmatprep.subr.mxu0 0.0
    %2622 = vmatpush1.msra.mxu0 %v92
    %2623 = vmatprep.subr.mxu0 0.0
    %2624 = vmatpush1.msra.mxu0 %v93
    %2625 = vmatprep.subr.mxu0 0.0
    %2626 = vmatpush1.msra.mxu0 %v94
    %2627 = vmatprep.subr.mxu0 0.0
    %2628 = vmatpush1.msra.mxu0 %v95
    %2629 = vmatprep.subr.mxu0 0.0
    %2630 = vmatpush1.msra.mxu0 %v96
    %2631 = vmatprep.subr.mxu0 0.0
    %2632 = vmatpush1.msra.mxu0 %v97
    %2633 = vmatprep.subr.mxu0 0.0
    %2634 = vmatpush1.msra.mxu0 %v98
    %2635 = vmatprep.subr.mxu0 0.0
    %2636 = vmatpush1.msra.mxu0 %v99
    %2637 = vmatprep.subr.mxu0 0.0
    %2638 = vmatpush1.msra.mxu0 %v100
    %2639 = vmatprep.subr.mxu0 0.0
    %2640 = vmatpush1.msra.mxu0 %v101
    %2641 = vmatprep.subr.mxu0 0.0
    %2642 = vmatpush1.msra.mxu0 %v102
    %2643 = vmatprep.subr.mxu0 0.0
    %2644 = vmatpush1.msra.mxu0 %v103
    %2645 = vmatprep.subr.mxu0 0.0
    %2646 = vmatpush1.msra.mxu0 %v104
    %2647 = vmatprep.subr.mxu0 0.0
    %2648 = vmatpush1.msra.mxu0 %v105
    %2649 = vmatprep.subr.mxu0 0.0
    %2650 = vmatpush1.msra.mxu0 %v106
    %2651 = vmatprep.subr.mxu0 0.0
    %2652 = vmatpush1.msra.mxu0 %v107
    %2653 = vmatprep.subr.mxu0 0.0
    %2654 = vmatpush1.msra.mxu0 %v108
    %2655 = vmatprep.subr.mxu0 0.0
    %2656 = vmatpush1.msra.mxu0 %v109
    %2657 = vmatprep.subr.mxu0 0.0
    %2658 = vmatpush1.msra.mxu0 %v110
    %2659 = vmatprep.subr.mxu0 0.0
    %2660 = vmatpush1.msra.mxu0 %v111
    %2661 = vmatprep.subr.mxu0 0.0
    %2662 = vmatpush1.msra.mxu0 %v112
    %2663 = vmatprep.subr.mxu0 0.0
    %2664 = vmatpush1.msra.mxu0 %v113
    %2665 = vmatprep.subr.mxu0 0.0
    %2666 = vmatpush1.msra.mxu0 %v114
    %2667 = vmatprep.subr.mxu0 0.0
    %2668 = vmatpush1.msra.mxu0 %v115
    %2669 = vmatprep.subr.mxu0 0.0
    %2670 = vmatpush1.msra.mxu0 %v116
    %2671 = vmatprep.subr.mxu0 0.0
    %2672 = vmatpush1.msra.mxu0 %v117
    %2673 = vmatprep.subr.mxu0 0.0
    %2674 = vmatpush1.msra.mxu0 %v118
    %2675 = vmatprep.subr.mxu0 0.0
    %2676 = vmatpush1.msra.mxu0 %v119
    %2677 = vmatprep.subr.mxu0 0.0
    %2678 = vmatpush1.msra.mxu0 %v120
    %2679 = vmatprep.subr.mxu0 0.0
    %2680 = vmatpush1.msra.mxu0 %v121
    %2681 = vmatprep.subr.mxu0 0.0
    %2682 = vmatpush1.msra.mxu0 %v122
    %2683 = vmatprep.subr.mxu0 0.0
    %2684 = vmatpush1.msra.mxu0 %v123
    %2685 = vmatprep.mubr.f32.mxu0 %v2618
    %2686 = vmatmul.mubr.f32.gmra.mrb[0].mxu0 %v2617
    %v2687 = vpop.f32.mrb[0].mxu0
    %v2688 = vadd.f32 0.0, %v2687
    %v2689 = vpop.f32.mrb[0].mxu0
    %2690 = vdwg.mxu0
    %2691 = vmatprep.subr.mxu0 0.0
    %2692 = vmatpush1.msra.mxu0 %v124
    %2693 = vmatprep.subr.mxu0 0.0
    %2694 = vmatpush1.msra.mxu0 %v125
    %2695 = vmatprep.subr.mxu0 0.0
    %2696 = vmatpush1.msra.mxu0 %v126
    %2697 = vmatprep.subr.mxu0 0.0
    %2698 = vmatpush1.msra.mxu0 %v127
    %2699 = vmatprep.subr.mxu0 0.0
    %2700 = vmatpush1.msra.mxu0 %v128
    %2701 = vmatprep.subr.mxu0 0.0
    %2702 = vmatpush1.msra.mxu0 %v129
    %2703 = vmatprep.subr.mxu0 0.0
    %2704 = vmatpush1.msra.mxu0 %v130
    %2705 = vmatprep.subr.mxu0 0.0
    %2706 = vmatpush1.msra.mxu0 %v131
    %2707 = vmatprep.subr.mxu0 0.0
    %2708 = vmatpush1.msra.mxu0 %v132
    %2709 = vmatprep.subr.mxu0 0.0
    %2710 = vmatpush1.msra.mxu0 %v133
    %2711 = vmatprep.subr.mxu0 0.0
    %2712 = vmatpush1.msra.mxu0 %v134
    %2713 = vmatprep.subr.mxu0 0.0
    %2714 = vmatpush1.msra.mxu0 %v135
    %2715 = vmatprep.subr.mxu0 0.0
    %2716 = vmatpush1.msra.mxu0 %v136
    %2717 = vmatprep.subr.mxu0 0.0
    %2718 = vmatpush1.msra.mxu0 %v137
    %2719 = vmatprep.subr.mxu0 0.0
    %2720 = vmatpush1.msra.mxu0 %v138
    %2721 = vmatprep.subr.mxu0 0.0
    %2722 = vmatpush1.msra.mxu0 %v139
    %2723 = vmatprep.subr.mxu0 0.0
    %2724 = vmatpush1.msra.mxu0 %v140
    %2725 = vmatprep.subr.mxu0 0.0
    %2726 = vmatpush1.msra.mxu0 %v141
    %2727 = vmatprep.subr.mxu0 0.0
    %2728 = vmatpush1.msra.mxu0 %v142
    %2729 = vmatprep.subr.mxu0 0.0
    %2730 = vmatpush1.msra.mxu0 %v143
    %2731 = vmatprep.subr.mxu0 0.0
    %2732 = vmatpush1.msra.mxu0 %v144
    %2733 = vmatprep.subr.mxu0 0.0
    %2734 = vmatpush1.msra.mxu0 %v145
    %2735 = vmatprep.subr.mxu0 0.0
    %2736 = vmatpush1.msra.mxu0 %v146
    %2737 = vmatprep.subr.mxu0 0.0
    %2738 = vmatpush1.msra.mxu0 %v147
    %2739 = vmatprep.subr.mxu0 0.0
    %2740 = vmatpush1.msra.mxu0 %v148
    %2741 = vmatprep.subr.mxu0 0.0
    %2742 = vmatpush1.msra.mxu0 %v149
    %2743 = vmatprep.subr.mxu0 0.0
    %2744 = vmatpush1.msra.mxu0 %v150
    %2745 = vmatprep.subr.mxu0 0.0
    %2746 = vmatpush1.msra.mxu0 %v151
    %2747 = vmatprep.subr.mxu0 0.0
    %2748 = vmatpush1.msra.mxu0 %v152
    %2749 = vmatprep.subr.mxu0 0.0
    %2750 = vmatpush1.msra.mxu0 %v153
    %2751 = vmatprep.subr.mxu0 0.0
    %2752 = vmatpush1.msra.mxu0 %v154
    %2753 = vmatprep.subr.mxu0 0.0
    %2754 = vmatpush1.msra.mxu0 %v155
    %2755 = vmatprep.mubr.f32.mxu0 %v2620
    %2756 = vmatmul.mubr.f32.gmra.mrb[0].mxu0 %v2619
    %v2757 = vpop.f32.mrb[0].mxu0
    %v2758 = vadd.f32 %v2688, %v2757
    %v2759 = vpop.f32.mrb[0].mxu0
    %2760 = vdwg.mxu0
    %2761 = vmatprep.subr.mxu0 0.0
    %2762 = vmatpush1.msra.mxu0 %v2614
    %2763 = vmatprep.subr.mxu0 0.0
    %2764 = vmatpush1.msra.mxu0 0.0
    %2765 = vmatprep.subr.mxu0 0.0
    %2766 = vmatpush1.msra.mxu0 0.0
    %2767 = vmatprep.subr.mxu0 0.0
    %2768 = vmatpush1.msra.mxu0 0.0
    %2769 = vmatprep.subr.mxu0 0.0
    %2770 = vmatpush1.msra.mxu0 0.0
    %2771 = vmatprep.subr.mxu0 0.0
    %2772 = vmatpush1.msra.mxu0 0.0
    %2773 = vmatprep.subr.mxu0 0.0
    %2774 = vmatpush1.msra.mxu0 0.0
    %2775 = vmatprep.subr.mxu0 0.0
    %2776 = vmatpush1.msra.mxu0 0.0
    %2777 = vmatprep.subr.mxu0 0.0
    %2778 = vmatpush1.msra.mxu0 0.0
    %2779 = vmatprep.subr.mxu0 0.0
    %2780 = vmatpush1.msra.mxu0 0.0
    %2781 = vmatprep.subr.mxu0 0.0
    %2782 = vmatpush1.msra.mxu0 0.0
    %2783 = vmatprep.subr.mxu0 0.0
    %2784 = vmatpush1.msra.mxu0 0.0
    %2785 = vmatprep.subr.mxu0 0.0
    %2786 = vmatpush1.msra.mxu0 0.0
    %2787 = vmatprep.subr.mxu0 0.0
    %2788 = vmatpush1.msra.mxu0 0.0
    %2789 = vmatprep.subr.mxu0 0.0
    %2790 = vmatpush1.msra.mxu0 0.0
    %2791 = vmatprep.subr.mxu0 0.0
    %2792 = vmatpush1.msra.mxu0 0.0
    %2793 = vmatprep.subr.mxu0 0.0
    %2794 = vmatpush1.msra.mxu0 0.0
    %2795 = vmatprep.subr.mxu0 0.0
    %2796 = vmatpush1.msra.mxu0 0.0
    %2797 = vmatprep.subr.mxu0 0.0
    %2798 = vmatpush1.msra.mxu0 0.0
    %2799 = vmatprep.subr.mxu0 0.0
    %2800 = vmatpush1.msra.mxu0 0.0
    %2801 = vmatprep.subr.mxu0 0.0
    %2802 = vmatpush1.msra.mxu0 0.0
    %2803 = vmatprep.subr.mxu0 0.0
    %2804 = vmatpush1.msra.mxu0 0.0
    %2805 = vmatprep.subr.mxu0 0.0
    %2806 = vmatpush1.msra.mxu0 0.0
    %2807 = vmatprep.subr.mxu0 0.0
    %2808 = vmatpush1.msra.mxu0 0.0
    %2809 = vmatprep.subr.mxu0 0.0
    %2810 = vmatpush1.msra.mxu0 0.0
    %2811 = vmatprep.subr.mxu0 0.0
    %2812 = vmatpush1.msra.mxu0 0.0
    %2813 = vmatprep.subr.mxu0 0.0
    %2814 = vmatpush1.msra.mxu0 0.0
    %2815 = vmatprep.subr.mxu0 0.0
    %2816 = vmatpush1.msra.mxu0 0.0
    %2817 = vmatprep.subr.mxu0 0.0
    %2818 = vmatpush1.msra.mxu0 0.0
    %2819 = vmatprep.subr.mxu0 0.0
    %2820 = vmatpush1.msra.mxu0 0.0
    %2821 = vmatprep.subr.mxu0 0.0
    %2822 = vmatpush1.msra.mxu0 0.0
    %2823 = vmatprep.subr.mxu0 0.0
    %2824 = vmatpush1.msra.mxu0 0.0
    %2825 = vmatprep.mubr.f32.mxu0 0.0
    %2826 = vmatmul.mubr.f32.gmra.mrb[0].mxu0 %v1079
    %v2827 = vpop.f32.mrb[0].mxu0
    %v2828 = vadd.f32 0.0, %v2827
    %v2829 = vpop.f32.mrb[0].mxu0
    %2830 = vdwg.mxu0
    %2831 = vmatprep.subr.mxu0 0.0
    %2832 = vmatpush1.msra.mxu0 %v2758
    %2833 = vmatprep.subr.mxu0 0.0
    %2834 = vmatpush1.msra.mxu0 0.0
    %2835 = vmatprep.subr.mxu0 0.0
    %2836 = vmatpush1.msra.mxu0 0.0
    %2837 = vmatprep.subr.mxu0 0.0
    %2838 = vmatpush1.msra.mxu0 0.0
    %2839 = vmatprep.subr.mxu0 0.0
    %2840 = vmatpush1.msra.mxu0 0.0
    %2841 = vmatprep.subr.mxu0 0.0
    %2842 = vmatpush1.msra.mxu0 0.0
    %2843 = vmatprep.subr.mxu0 0.0
    %2844 = vmatpush1.msra.mxu0 0.0
    %2845 = vmatprep.subr.mxu0 0.0
    %2846 = vmatpush1.msra.mxu0 0.0
    %2847 = vmatprep.subr.mxu0 0.0
    %2848 = vmatpush1.msra.mxu0 0.0
    %2849 = vmatprep.subr.mxu0 0.0
    %2850 = vmatpush1.msra.mxu0 0.0
    %2851 = vmatprep.subr.mxu0 0.0
    %2852 = vmatpush1.msra.mxu0 0.0
    %2853 = vmatprep.subr.mxu0 0.0
    %2854 = vmatpush1.msra.mxu0 0.0
    %2855 = vmatprep.subr.mxu0 0.0
    %2856 = vmatpush1.msra.mxu0 0.0
    %2857 = vmatprep.subr.mxu0 0.0
    %2858 = vmatpush1.msra.mxu0 0.0
    %2859 = vmatprep.subr.mxu0 0.0
    %2860 = vmatpush1.msra.mxu0 0.0
    %2861 = vmatprep.subr.mxu0 0.0
    %2862 = vmatpush1.msra.mxu0 0.0
    %2863 = vmatprep.subr.mxu0 0.0
    %2864 = vmatpush1.msra.mxu0 0.0
    %2865 = vmatprep.subr.mxu0 0.0
    %2866 = vmatpush1.msra.mxu0 0.0
    %2867 = vmatprep.subr.mxu0 0.0
    %2868 = vmatpush1.msra.mxu0 0.0
    %2869 = vmatprep.subr.mxu0 0.0
    %2870 = vmatpush1.msra.mxu0 0.0
    %2871 = vmatprep.subr.mxu0 0.0
    %2872 = vmatpush1.msra.mxu0 0.0
    %2873 = vmatprep.subr.mxu0 0.0
    %2874 = vmatpush1.msra.mxu0 0.0
    %2875 = vmatprep.subr.mxu0 0.0
    %2876 = vmatpush1.msra.mxu0 0.0
    %2877 = vmatprep.subr.mxu0 0.0
    %2878 = vmatpush1.msra.mxu0 0.0
    %2879 = vmatprep.subr.mxu0 0.0
    %2880 = vmatpush1.msra.mxu0 0.0
    %2881 = vmatprep.subr.mxu0 0.0
    %2882 = vmatpush1.msra.mxu0 0.0
    %2883 = vmatprep.subr.mxu0 0.0
    %2884 = vmatpush1.msra.mxu0 0.0
    %2885 = vmatprep.subr.mxu0 0.0
    %2886 = vmatpush1.msra.mxu0 0.0
    %2887 = vmatprep.subr.mxu0 0.0
    %2888 = vmatpush1.msra.mxu0 0.0
    %2889 = vmatprep.subr.mxu0 0.0
    %2890 = vmatpush1.msra.mxu0 0.0
    %2891 = vmatprep.subr.mxu0 0.0
    %2892 = vmatpush1.msra.mxu0 0.0
    %2893 = vmatprep.subr.mxu0 0.0
    %2894 = vmatpush1.msra.mxu0 0.0
    %2895 = vmatprep.mubr.f32.mxu0 0.0
    %2896 = vmatmul.mubr.f32.gmra.mrb[0].mxu0 %v1079
    %v2897 = vpop.f32.mrb[0].mxu0
    %v2898 = vadd.f32 0.0, %v2897
    %v2899 = vpop.f32.mrb[0].mxu0
    %2900 = vdwg.mxu0
    %v2901 = vmul.f32 %v2828, %v2828
    %v2902 = vsub.f32 %v2898, %v2901
    %v2903 = vadd.f32 %v2902, 1e-05
    %v2904 = vrsqrt.pop %v2903
    %2905 = vset.pattern.permute.xlu0 3
    %2906 = vperm.xlu0 %2905, %v90
    %v2907 = vpop.permute.xlu0 %2906
    %v2909 = vmul.f32 %v2907, %v2904
    %v2910 = vmul.f32 %v2828, %v2909
    %2911 = vset.pattern.permute.xlu0 4
    %2912 = vperm.xlu0 %2911, %v90
    %v2913 = vpop.permute.xlu0 %2912
    %v2915 = vsub.f32 %v2913, %v2910
    %v2917 = vsel %vm1077, %v2909, 0
    %2919 = vmatprep.subr.mxu0 %v157
    %2920 = vmatpush1.msra.mxu0 %v156
    %2921 = vmatprep.subr.mxu0 0.0
    %2922 = vmatpush1.msra.mxu0 0.0
    %2923 = vmatprep.subr.mxu0 0.0
    %2924 = vmatpush1.msra.mxu0 0.0
    %2925 = vmatprep.subr.mxu0 0.0
    %2926 = vmatpush1.msra.mxu0 0.0
    %2927 = vmatprep.subr.mxu0 0.0
    %2928 = vmatpush1.msra.mxu0 0.0
    %2929 = vmatprep.subr.mxu0 0.0
    %2930 = vmatpush1.msra.mxu0 0.0
    %2931 = vmatprep.subr.mxu0 0.0
    %2932 = vmatpush1.msra.mxu0 0.0
    %2933 = vmatprep.subr.mxu0 0.0
    %2934 = vmatpush1.msra.mxu0 0.0
    %2935 = vmatprep.subr.mxu0 0.0
    %2936 = vmatpush1.msra.mxu0 0.0
    %2937 = vmatprep.subr.mxu0 0.0
    %2938 = vmatpush1.msra.mxu0 0.0
    %2939 = vmatprep.subr.mxu0 0.0
    %2940 = vmatpush1.msra.mxu0 0.0
    %2941 = vmatprep.subr.mxu0 0.0
    %2942 = vmatpush1.msra.mxu0 0.0
    %2943 = vmatprep.subr.mxu0 0.0
    %2944 = vmatpush1.msra.mxu0 0.0
    %2945 = vmatprep.subr.mxu0 0.0
    %2946 = vmatpush1.msra.mxu0 0.0
    %2947 = vmatprep.subr.mxu0 0.0
    %2948 = vmatpush1.msra.mxu0 0.0
    %2949 = vmatprep.subr.mxu0 0.0
    %2950 = vmatpush1.msra.mxu0 0.0
    %2951 = vmatprep.subr.mxu0 0.0
    %2952 = vmatpush1.msra.mxu0 0.0
    %2953 = vmatprep.subr.mxu0 0.0
    %2954 = vmatpush1.msra.mxu0 0.0
    %2955 = vmatprep.subr.mxu0 0.0
    %2956 = vmatpush1.msra.mxu0 0.0
    %2957 = vmatprep.subr.mxu0 0.0
    %2958 = vmatpush1.msra.mxu0 0.0
    %2959 = vmatprep.subr.mxu0 0.0
    %2960 = vmatpush1.msra.mxu0 0.0
    %2961 = vmatprep.subr.mxu0 0.0
    %2962 = vmatpush1.msra.mxu0 0.0
    %2963 = vmatprep.subr.mxu0 0.0
    %2964 = vmatpush1.msra.mxu0 0.0
    %2965 = vmatprep.subr.mxu0 0.0
    %2966 = vmatpush1.msra.mxu0 0.0
    %2967 = vmatprep.subr.mxu0 0.0
    %2968 = vmatpush1.msra.mxu0 0.0
    %2969 = vmatprep.subr.mxu0 0.0
    %2970 = vmatpush1.msra.mxu0 0.0
    %2971 = vmatprep.subr.mxu0 0.0
    %2972 = vmatpush1.msra.mxu0 0.0
    %2973 = vmatprep.subr.mxu0 0.0
    %2974 = vmatpush1.msra.mxu0 0.0
    %2975 = vmatprep.subr.mxu0 0.0
    %2976 = vmatpush1.msra.mxu0 0.0
    %2977 = vmatprep.subr.mxu0 0.0
    %2978 = vmatpush1.msra.mxu0 0.0
    %2979 = vmatprep.subr.mxu0 0.0
    %2980 = vmatpush1.msra.mxu0 0.0
    %2981 = vmatprep.subr.mxu0 0.0
    %2982 = vmatpush1.msra.mxu0 0.0
    %2983 = vmatprep.mubr.f32.mxu0 0.0
    %2984 = vmatmul.mubr.f32.gmra.mrb[0].mxu0 %v2917
    %v2985 = vpop.f32.mrb[0].mxu0
    %v2986 = vadd.f32 0.0, %v2985
    %v2987 = vpop.f32.mrb[0].mxu0
    %v2988 = vadd.f32 0.0, %v2987
    %2989 = vdwg.mxu0
    %2990 = vmatprep.subr.mxu0 %v159
    %2991 = vmatpush1.msra.mxu0 %v158
    %2992 = vmatprep.subr.mxu0 0.0
    %2993 = vmatpush1.msra.mxu0 0.0
    %2994 = vmatprep.subr.mxu0 0.0
    %2995 = vmatpush1.msra.mxu0 0.0
    %2996 = vmatprep.subr.mxu0 0.0
    %2997 = vmatpush1.msra.mxu0 0.0
    %2998 = vmatprep.subr.mxu0 0.0
    %2999 = vmatpush1.msra.mxu0 0.0
    %3000 = vmatprep.subr.mxu0 0.0
    %3001 = vmatpush1.msra.mxu0 0.0
    %3002 = vmatprep.subr.mxu0 0.0
    %3003 = vmatpush1.msra.mxu0 0.0
    %3004 = vmatprep.subr.mxu0 0.0
    %3005 = vmatpush1.msra.mxu0 0.0
    %3006 = vmatprep.subr.mxu0 0.0
    %3007 = vmatpush1.msra.mxu0 0.0
    %3008 = vmatprep.subr.mxu0 0.0
    %3009 = vmatpush1.msra.mxu0 0.0
    %3010 = vmatprep.subr.mxu0 0.0
    %3011 = vmatpush1.msra.mxu0 0.0
    %3012 = vmatprep.subr.mxu0 0.0
    %3013 = vmatpush1.msra.mxu0 0.0
    %3014 = vmatprep.subr.mxu0 0.0
    %3015 = vmatpush1.msra.mxu0 0.0
    %3016 = vmatprep.subr.mxu0 0.0
    %3017 = vmatpush1.msra.mxu0 0.0
    %3018 = vmatprep.subr.mxu0 0.0
    %3019 = vmatpush1.msra.mxu0 0.0
    %3020 = vmatprep.subr.mxu0 0.0
    %3021 = vmatpush1.msra.mxu0 0.0
    %3022 = vmatprep.subr.mxu0 0.0
    %3023 = vmatpush1.msra.mxu0 0.0
    %3024 = vmatprep.subr.mxu0 0.0
    %3025 = vmatpush1.msra.mxu0 0.0
    %3026 = vmatprep.subr.mxu0 0.0
    %3027 = vmatpush1.msra.mxu0 0.0
    %3028 = vmatprep.subr.mxu0 0.0
    %3029 = vmatpush1.msra.mxu0 0.0
    %3030 = vmatprep.subr.mxu0 0.0
    %3031 = vmatpush1.msra.mxu0 0.0
    %3032 = vmatprep.subr.mxu0 0.0
    %3033 = vmatpush1.msra.mxu0 0.0
    %3034 = vmatprep.subr.mxu0 0.0
    %3035 = vmatpush1.msra.mxu0 0.0
    %3036 = vmatprep.subr.mxu0 0.0
    %3037 = vmatpush1.msra.mxu0 0.0
    %3038 = vmatprep.subr.mxu0 0.0
    %3039 = vmatpush1.msra.mxu0 0.0
    %3040 = vmatprep.subr.mxu0 0.0
    %3041 = vmatpush1.msra.mxu0 0.0
    %3042 = vmatprep.subr.mxu0 0.0
    %3043 = vmatpush1.msra.mxu0 0.0
    %3044 = vmatprep.subr.mxu0 0.0
    %3045 = vmatpush1.msra.mxu0 0.0
    %3046 = vmatprep.subr.mxu0 0.0
    %3047 = vmatpush1.msra.mxu0 0.0
    %3048 = vmatprep.subr.mxu0 0.0
    %3049 = vmatpush1.msra.mxu0 0.0
    %3050 = vmatprep.subr.mxu0 0.0
    %3051 = vmatpush1.msra.mxu0 0.0
    %3052 = vmatprep.subr.mxu0 0.0
    %3053 = vmatpush1.msra.mxu0 0.0
    %3054 = vmatprep.mubr.f32.mxu0 0.0
    %3055 = vmatmul.mubr.f32.gmra.mrb[0].mxu0 %v2917
    %v3056 = vpop.f32.mrb[0].mxu0
    %v3057 = vadd.f32 0.0, %v3056
    %v3058 = vpop.f32.mrb[0].mxu0
    %v3059 = vadd.f32 0.0, %v3058
    %3060 = vdwg.mxu0
    %v3061 = vmul.f32 %v2402, %v2986
    %v3062 = vmul.f32 %v2404, %v2988
    %v3063 = vmul.f32 %v2473, %v3057
    %v3064 = vmul.f32 %v2475, %v3059
    %v3066 = vsel %vm1077, %v2915, 0
    %3068 = vmatprep.subr.mxu0 %v157
    %3069 = vmatpush1.msra.mxu0 %v156
    %3070 = vmatprep.subr.mxu0 0.0
    %3071 = vmatpush1.msra.mxu0 0.0
    %3072 = vmatprep.subr.mxu0 0.0
    %3073 = vmatpush1.msra.mxu0 0.0
    %3074 = vmatprep.subr.mxu0 0.0
    %3075 = vmatpush1.msra.mxu0 0.0
    %3076 = vmatprep.subr.mxu0 0.0
    %3077 = vmatpush1.msra.mxu0 0.0
    %3078 = vmatprep.subr.mxu0 0.0
    %3079 = vmatpush1.msra.mxu0 0.0
    %3080 = vmatprep.subr.mxu0 0.0
    %3081 = vmatpush1.msra.mxu0 0.0
    %3082 = vmatprep.subr.mxu0 0.0
    %3083 = vmatpush1.msra.mxu0 0.0
    %3084 = vmatprep.subr.mxu0 0.0
    %3085 = vmatpush1.msra.mxu0 0.0
    %3086 = vmatprep.subr.mxu0 0.0
    %3087 = vmatpush1.msra.mxu0 0.0
    %3088 = vmatprep.subr.mxu0 0.0
    %3089 = vmatpush1.msra.mxu0 0.0
    %3090 = vmatprep.subr.mxu0 0.0
    %3091 = vmatpush1.msra.mxu0 0.0
    %3092 = vmatprep.subr.mxu0 0.0
    %3093 = vmatpush1.msra.mxu0 0.0
    %3094 = vmatprep.subr.mxu0 0.0
    %3095 = vmatpush1.msra.mxu0 0.0
    %3096 = vmatprep.subr.mxu0 0.0
    %3097 = vmatpush1.msra.mxu0 0.0
    %3098 = vmatprep.subr.mxu0 0.0
    %3099 = vmatpush1.msra.mxu0 0.0
    %3100 = vmatprep.subr.mxu0 0.0
    %3101 = vmatpush1.msra.mxu0 0.0
    %3102 = vmatprep.subr.mxu0 0.0
    %3103 = vmatpush1.msra.mxu0 0.0
    %3104 = vmatprep.subr.mxu0 0.0
    %3105 = vmatpush1.msra.mxu0 0.0
    %3106 = vmatprep.subr.mxu0 0.0
    %3107 = vmatpush1.msra.mxu0 0.0
    %3108 = vmatprep.subr.mxu0 0.0
    %3109 = vmatpush1.msra.mxu0 0.0
    %3110 = vmatprep.subr.mxu0 0.0
    %3111 = vmatpush1.msra.mxu0 0.0
    %3112 = vmatprep.subr.mxu0 0.0
    %3113 = vmatpush1.msra.mxu0 0.0
    %3114 = vmatprep.subr.mxu0 0.0
    %3115 = vmatpush1.msra.mxu0 0.0
    %3116 = vmatprep.subr.mxu0 0.0
    %3117 = vmatpush1.msra.mxu0 0.0
    %3118 = vmatprep.subr.mxu0 0.0
    %3119 = vmatpush1.msra.mxu0 0.0
    %3120 = vmatprep.subr.mxu0 0.0
    %3121 = vmatpush1.msra.mxu0 0.0
    %3122 = vmatprep.subr.mxu0 0.0
    %3123 = vmatpush1.msra.mxu0 0.0
    %3124 = vmatprep.subr.mxu0 0.0
    %3125 = vmatpush1.msra.mxu0 0.0
    %3126 = vmatprep.subr.mxu0 0.0
    %3127 = vmatpush1.msra.mxu0 0.0
    %3128 = vmatprep.subr.mxu0 0.0
    %3129 = vmatpush1.msra.mxu0 0.0
    %3130 = vmatprep.subr.mxu0 0.0
    %3131 = vmatpush1.msra.mxu0 0.0
    %3132 = vmatprep.mubr.f32.mxu0 0.0
    %3133 = vmatmul.mubr.f32.gmra.mrb[0].mxu0 %v3066
    %v3134 = vpop.f32.mrb[0].mxu0
    %v3135 = vadd.f32 0.0, %v3134
    %v3136 = vpop.f32.mrb[0].mxu0
    %v3137 = vadd.f32 0.0, %v3136
    %3138 = vdwg.mxu0
    %3139 = vmatprep.subr.mxu0 %v159
    %3140 = vmatpush1.msra.mxu0 %v158
    %3141 = vmatprep.subr.mxu0 0.0
    %3142 = vmatpush1.msra.mxu0 0.0
    %3143 = vmatprep.subr.mxu0 0.0
    %3144 = vmatpush1.msra.mxu0 0.0
    %3145 = vmatprep.subr.mxu0 0.0
    %3146 = vmatpush1.msra.mxu0 0.0
    %3147 = vmatprep.subr.mxu0 0.0
    %3148 = vmatpush1.msra.mxu0 0.0
    %3149 = vmatprep.subr.mxu0 0.0
    %3150 = vmatpush1.msra.mxu0 0.0
    %3151 = vmatprep.subr.mxu0 0.0
    %3152 = vmatpush1.msra.mxu0 0.0
    %3153 = vmatprep.subr.mxu0 0.0
    %3154 = vmatpush1.msra.mxu0 0.0
    %3155 = vmatprep.subr.mxu0 0.0
    %3156 = vmatpush1.msra.mxu0 0.0
    %3157 = vmatprep.subr.mxu0 0.0
    %3158 = vmatpush1.msra.mxu0 0.0
    %3159 = vmatprep.subr.mxu0 0.0
    %3160 = vmatpush1.msra.mxu0 0.0
    %3161 = vmatprep.subr.mxu0 0.0
    %3162 = vmatpush1.msra.mxu0 0.0
    %3163 = vmatprep.subr.mxu0 0.0
    %3164 = vmatpush1.msra.mxu0 0.0
    %3165 = vmatprep.subr.mxu0 0.0
    %3166 = vmatpush1.msra.mxu0 0.0
    %3167 = vmatprep.subr.mxu0 0.0
    %3168 = vmatpush1.msra.mxu0 0.0
    %3169 = vmatprep.subr.mxu0 0.0
    %3170 = vmatpush1.msra.mxu0 0.0
    %3171 = vmatprep.subr.mxu0 0.0
    %3172 = vmatpush1.msra.mxu0 0.0
    %3173 = vmatprep.subr.mxu0 0.0
    %3174 = vmatpush1.msra.mxu0 0.0
    %3175 = vmatprep.subr.mxu0 0.0
    %3176 = vmatpush1.msra.mxu0 0.0
    %3177 = vmatprep.subr.mxu0 0.0
    %3178 = vmatpush1.msra.mxu0 0.0
    %3179 = vmatprep.subr.mxu0 0.0
    %3180 = vmatpush1.msra.mxu0 0.0
    %3181 = vmatprep.subr.mxu0 0.0
    %3182 = vmatpush1.msra.mxu0 0.0
    %3183 = vmatprep.subr.mxu0 0.0
    %3184 = vmatpush1.msra.mxu0 0.0
    %3185 = vmatprep.subr.mxu0 0.0
    %3186 = vmatpush1.msra.mxu0 0.0
    %3187 = vmatprep.subr.mxu0 0.0
    %3188 = vmatpush1.msra.mxu0 0.0
    %3189 = vmatprep.subr.mxu0 0.0
    %3190 = vmatpush1.msra.mxu0 0.0
    %3191 = vmatprep.subr.mxu0 0.0
    %3192 = vmatpush1.msra.mxu0 0.0
    %3193 = vmatprep.subr.mxu0 0.0
    %3194 = vmatpush1.msra.mxu0 0.0
    %3195 = vmatprep.subr.mxu0 0.0
    %3196 = vmatpush1.msra.mxu0 0.0
    %3197 = vmatprep.subr.mxu0 0.0
    %3198 = vmatpush1.msra.mxu0 0.0
    %3199 = vmatprep.subr.mxu0 0.0
    %3200 = vmatpush1.msra.mxu0 0.0
    %3201 = vmatprep.subr.mxu0 0.0
    %3202 = vmatpush1.msra.mxu0 0.0
    %3203 = vmatprep.mubr.f32.mxu0 0.0
    %3204 = vmatmul.mubr.f32.gmra.mrb[0].mxu0 %v3066
    %v3205 = vpop.f32.mrb[0].mxu0
    %v3206 = vadd.f32 0.0, %v3205
    %v3207 = vpop.f32.mrb[0].mxu0
    %v3208 = vadd.f32 0.0, %v3207
    %3209 = vdwg.mxu0
    %v3210 = vadd.f32 %v3061, %v3135
    %v3211 = vadd.f32 %v3062, %v3137
    %v3212 = vadd.f32 %v3063, %v3206
    %v3213 = vadd.f32 %v3064, %v3208
    %v3214 = vld [vmem:[%s14] sm:$0xf]
    %v3215 = vld [vmem:[#allocation3 + $0x80] sm:$0xff]
    %v3216 = vld [vmem:[#allocation3 + $0x88] sm:$0xff]
    %v3217 = vld [vmem:[#allocation3 + $0x90] sm:$0xff]
    %v3218 = vld [vmem:[#allocation3 + $0x98] sm:$0xff]
    %3219 = vset.pattern.permute.xlu0 8
    %3220 = vperm.xlu0 %3219, %v90
    %v3221 = vpop.permute.xlu0 %3220
    %v3224 = vsel %vm707, %v3214, 0
    %3226 = vmatprep.subr.bf16.mxu0 %v3216
    %3227 = vmatpush1.bf16.msra.mxu0 %v3215
    %3228 = vmatprep.subr.bf16.mxu0 0
    %3229 = vmatpush1.bf16.msra.mxu0 0
    %3230 = vmatprep.subr.bf16.mxu0 0
    %3231 = vmatpush1.bf16.msra.mxu0 0
    %3232 = vmatprep.subr.bf16.mxu0 0
    %3233 = vmatpush1.bf16.msra.mxu0 0
    %3234 = vmatprep.subr.bf16.mxu0 0
    %3235 = vmatpush1.bf16.msra.mxu0 0
    %3236 = vmatprep.subr.bf16.mxu0 0
    %3237 = vmatpush1.bf16.msra.mxu0 0
    %3238 = vmatprep.subr.bf16.mxu0 0
    %3239 = vmatpush1.bf16.msra.mxu0 0
    %3240 = vmatprep.subr.bf16.mxu0 0
    %3241 = vmatpush1.bf16.msra.mxu0 0
    %3242 = vmatprep.subr.bf16.mxu0 0
    %3243 = vmatpush1.bf16.msra.mxu0 0
    %3244 = vmatprep.subr.bf16.mxu0 0
    %3245 = vmatpush1.bf16.msra.mxu0 0
    %3246 = vmatprep.subr.bf16.mxu0 0
    %3247 = vmatpush1.bf16.msra.mxu0 0
    %3248 = vmatprep.subr.bf16.mxu0 0
    %3249 = vmatpush1.bf16.msra.mxu0 0
    %3250 = vmatprep.subr.bf16.mxu0 0
    %3251 = vmatpush1.bf16.msra.mxu0 0
    %3252 = vmatprep.subr.bf16.mxu0 0
    %3253 = vmatpush1.bf16.msra.mxu0 0
    %3254 = vmatprep.subr.bf16.mxu0 0
    %3255 = vmatpush1.bf16.msra.mxu0 0
    %3256 = vmatprep.subr.bf16.mxu0 0
    %3257 = vmatpush1.bf16.msra.mxu0 0
    %3258 = vmatprep.mubr.bf16.mxu0 0
    %3259 = vmatmul.mubr.bf16.gmra.mrb[0].mxu0 %v3224
    %v3260 = vpop.f32.mrb[0].mxu0
    %v3261 = vadd.f32 %v3221, %v3260
    %v3262 = vpop.f32.mrb[0].mxu0
    %v3263 = vadd.f32 %v3221, %v3262
    %v3264 = vpop.f32.mrb[0].mxu0
    %v3265 = vpop.f32.mrb[0].mxu0
    %3266 = vdwg.mxu0
    %3267 = vmatprep.subr.bf16.mxu0 %v3218
    %3268 = vmatpush1.bf16.msra.mxu0 %v3217
    %3269 = vmatprep.subr.bf16.mxu0 0
    %3270 = vmatpush1.bf16.msra.mxu0 0
    %3271 = vmatprep.subr.bf16.mxu0 0
    %3272 = vmatpush1.bf16.msra.mxu0 0
    %3273 = vmatprep.subr.bf16.mxu0 0
    %3274 = vmatpush1.bf16.msra.mxu0 0
    %3275 = vmatprep.subr.bf16.mxu0 0
    %3276 = vmatpush1.bf16.msra.mxu0 0
    %3277 = vmatprep.subr.bf16.mxu0 0
    %3278 = vmatpush1.bf16.msra.mxu0 0
    %3279 = vmatprep.subr.bf16.mxu0 0
    %3280 = vmatpush1.bf16.msra.mxu0 0
    %3281 = vmatprep.subr.bf16.mxu0 0
    %3282 = vmatpush1.bf16.msra.mxu0 0
    %3283 = vmatprep.subr.bf16.mxu0 0
    %3284 = vmatpush1.bf16.msra.mxu0 0
    %3285 = vmatprep.subr.bf16.mxu0 0
    %3286 = vmatpush1.bf16.msra.mxu0 0
    %3287 = vmatprep.subr.bf16.mxu0 0
    %3288 = vmatpush1.bf16.msra.mxu0 0
    %3289 = vmatprep.subr.bf16.mxu0 0
    %3290 = vmatpush1.bf16.msra.mxu0 0
    %3291 = vmatprep.subr.bf16.mxu0 0
    %3292 = vmatpush1.bf16.msra.mxu0 0
    %3293 = vmatprep.subr.bf16.mxu0 0
    %3294 = vmatpush1.bf16.msra.mxu0 0
    %3295 = vmatprep.subr.bf16.mxu0 0
    %3296 = vmatpush1.bf16.msra.mxu0 0
    %3297 = vmatprep.subr.bf16.mxu0 0
    %3298 = vmatpush1.bf16.msra.mxu0 0
    %3299 = vmatprep.mubr.bf16.mxu0 0
    %3300 = vmatmul.mubr.bf16.gmra.mrb[0].mxu0 %v3224
    %v3301 = vpop.f32.mrb[0].mxu0
    %v3302 = vadd.f32 %v3221, %v3301
    %v3303 = vpop.f32.mrb[0].mxu0
    %v3304 = vadd.f32 %v3221, %v3303
    %v3305 = vpop.f32.mrb[0].mxu0
    %v3306 = vpop.f32.mrb[0].mxu0
    %3307 = vdwg.mxu0
    %v3308 = vadd.f32 %v3210, %v3261
    %v3309 = vadd.f32 %v3211, %v3263
    %v3310 = vadd.f32 %v3212, %v3302
    %v3311 = vadd.f32 %v3213, %v3304
    %v3312 = vmul.f32 %v3308, 0.5
    %v3313 = vmul.f32 %v3309, 0.5
    %v3314 = vmul.f32 %v3310, 0.5
    %v3315 = vmul.f32 %v3311, 0.5
    %v3316 = vmul.f32 %v3308, 0.044715
    %v3317 = vmul.f32 %v3309, 0.044715
    %v3318 = vmul.f32 %v3310, 0.044715
    %v3319 = vmul.f32 %v3311, 0.044715
    %v3320 = vmul.f32 %v3316, %v3308
    %v3321 = vmul.f32 %v3317, %v3309
    %v3322 = vmul.f32 %v3318, %v3310
    %v3323 = vmul.f32 %v3319, %v3311
    %v3324 = vmul.f32 %v3320, %v3308
    %v3325 = vmul.f32 %v3321, %v3309
    %v3326 = vmul.f32 %v3322, %v3310
    %v3327 = vmul.f32 %v3323, %v3311
    %v3328 = vadd.f32 %v3308, %v3324
    %v3329 = vadd.f32 %v3309, %v3325
    %v3330 = vadd.f32 %v3310, %v3326
    %v3331 = vadd.f32 %v3311, %v3327
    %v3332 = vmul.f32 %v3328, 0.7978846
    %v3333 = vmul.f32 %v3329, 0.7978846
    %v3334 = vmul.f32 %v3330, 0.7978846
    %v3335 = vmul.f32 %v3331, 0.7978846
    %v3336 = vtanh.pop %v3332
    %v3337 = vtanh.pop %v3333
    %v3338 = vtanh.pop %v3334
    %v3339 = vtanh.pop %v3335
    %v3340 = vadd.f32 %v3336, 1.0
    %v3341 = vadd.f32 %v3337, 1.0
    %v3342 = vadd.f32 %v3338, 1.0
    %v3343 = vadd.f32 %v3339, 1.0
    %v3344 = vmul.f32 %v3312, %v3340
    %v3345 = vmul.f32 %v3313, %v3341
    %v3346 = vmul.f32 %v3314, %v3342
    %v3347 = vmul.f32 %v3315, %v3343
    %3348 = vst [vmem:[%s15] sm:$0xff] %v3344
    %3349 = vst [vmem:[%s15 + $0x8] sm:$0xff] %v3345
    %s3350 = scalar_lea.vmem %s15, 16
    %3351 = vst [vmem:[%s3350] sm:$0xff] %v3346
    %3352 = vst [vmem:[%s3350 + $0x8] sm:$0xff] %v3347
    // Predicated region
    $region74: #{decoder_block.1} parent=1 // pred_check
      _
    $region75: #{decoder_block.1} parent=1 // pred_check_branch
      %3354 = sbr.rel (0) target = $region77
    $region76: #{decoder_block.1} parent=1 // pred_region
      _
    $region77: #{decoder_block.1} parent=1 // pred_fallthru
      _
    // Predicated region
    $region78: #{decoder_block.1} parent=1 // pred_check
      _
    $region79: #{decoder_block.1} parent=1 // pred_check_branch
      %3356 = sbr.rel (0) target = $region81
    $region80: #{decoder_block.1} parent=1 // pred_region
      _
    $region81: #{decoder_block.1} parent=1 // pred_fallthru
      _
    %3357 = vsyncpa [#allocation5], 1
    %3358 = vsyncpa [#allocation7], 1

</llo_original>
